<compile_context>
chip_gen: v7x
topology: tpu7x:2x2x1
jax: 0.10.0
libtpu: 0.0.40
codegen_flags: <defaults>
</compile_context>

<pallas_src>
import functools

import jax
import jax.numpy as jnp
from jax.experimental import pallas as pl
from jax.experimental.pallas import tpu as pltpu


def _round_up(x, m):
    return ((x + m - 1) // m) * m


# --------------------------------------------------------------------------
# Kernel 1: fused Conv3d(k=3, stride=1, pad=1) + bias + ReLU + global-avg-pool
#   grid = (N, T)   -- N parallel (megacore), T arbitrary (sequential pooled accumulation)
#   x{0,1,2}_ref : (1, 1, H+2, W+2, Cin) bf16 padded frames at padded-time t, t+1, t+2
#   w_ref        : (K_p, Cout_p)         bf16 packed weights (K = 27*Cin zero-padded)
#   b_ref        : (1, Cout_p)           f32 bias (padded channels zero)
#   out          : (1, 1, Cout_p)        f32 pooled mean for sample n (resident across t)
#   lhs_ref      : (H*W, K_p)            bf16 in-kernel im2col scratch (packed-K LHS)
# --------------------------------------------------------------------------
def _conv_relu_pool_kernel(x0_ref, x1_ref, x2_ref, w_ref, b_ref, out_ref, lhs_ref,
                           *, H, W, Cin, inv_thw):
    t = pl.program_id(1)
    n_t = pl.num_programs(1)

    @pl.when(t == 0)
    def _():
        out_ref[...] = jnp.zeros_like(out_ref)
        # Zero once per sample so the zero-padded K tail (cols 27*Cin..K_p) never holds
        # garbage; the first 27*Cin columns are rewritten every step below.
        lhs_ref[...] = jnp.zeros_like(lhs_ref)

    # In-kernel im2col: gather the 27 taps into the lane-dense packed-K LHS scratch.
    frames = (x0_ref[0, 0], x1_ref[0, 0], x2_ref[0, 0])     # (H+2, W+2, Cin) bf16 each
    for kt in range(3):
        fr = frames[kt]
        for kh in range(3):
            for kw in range(3):
                tap = (kt * 3 + kh) * 3 + kw
                win = fr[kh:kh + H, kw:kw + W, :].reshape(H * W, Cin)
                lhs_ref[:, tap * Cin:(tap + 1) * Cin] = win

    # ONE K~128 MXU pass per output frame (bf16 operands, f32 accumulation).
    acc = jnp.dot(lhs_ref[...], w_ref[...],
                  preferred_element_type=jnp.float32)        # (H*W, Cout_p) f32
    feat = jnp.maximum(acc + b_ref[...], 0.0)                # bias + ReLU
    frame_sum = jnp.sum(feat, axis=0, keepdims=True)         # (1, Cout_p)
    out_ref[...] += frame_sum.reshape(out_ref.shape)

    @pl.when(t == n_t - 1)
    def _():
        out_ref[...] = out_ref[...] * inv_thw                # mean over T*H*W


def conv3d_relu_pool_pallas(x_pad_bf16, w_packed_bf16, b_row_f32, *, T, H, W, Cin):
    N = x_pad_bf16.shape[0]
    K_p, Cout_p = w_packed_bf16.shape

    kernel = functools.partial(_conv_relu_pool_kernel, H=H, W=W, Cin=Cin,
                               inv_thw=1.0 / float(T * H * W))

    out = pl.pallas_call(
        kernel,
        out_shape=jax.ShapeDtypeStruct((N, 1, Cout_p), jnp.float32),
        grid=(N, T),
        in_specs=[
            # Three shifted views of the same padded array give the (t, t+1, t+2)
            # temporal window per step (accepted ~3x overlap fetch; kt axis collapsed).
            pl.BlockSpec((1, 1, H + 2, W + 2, Cin), lambda n, t: (n, t, 0, 0, 0)),
            pl.BlockSpec((1, 1, H + 2, W + 2, Cin), lambda n, t: (n, t + 1, 0, 0, 0)),
            pl.BlockSpec((1, 1, H + 2, W + 2, Cin), lambda n, t: (n, t + 2, 0, 0, 0)),
            # Packed weights: constant index_map -> fetched once, stays resident.
            pl.BlockSpec((K_p, Cout_p), lambda n, t: (0, 0)),
            pl.BlockSpec((1, Cout_p), lambda n, t: (0, 0)),
        ],
        out_specs=pl.BlockSpec((1, 1, Cout_p), lambda n, t: (n, 0, 0)),
        scratch_shapes=[
            pltpu.VMEM((H * W, K_p), jnp.bfloat16),          # packed-K im2col LHS
        ],
        compiler_params=pltpu.CompilerParams(
            dimension_semantics=("parallel", "arbitrary"),
            vmem_limit_bytes=32 * 1024 * 1024,
        ),
    )(x_pad_bf16, x_pad_bf16, x_pad_bf16, w_packed_bf16, b_row_f32)
    return out[:, 0, :]                                      # (N, Cout_p) pooled means


# --------------------------------------------------------------------------
# Kernel 2: Linear head + softmax on the pooled (N, Cout_p) features (tiny).
# --------------------------------------------------------------------------
def _head_kernel(pooled_ref, wfc_ref, bfc_ref, out_ref, *, num_classes):
    logits = jnp.dot(pooled_ref[...], wfc_ref[...],
                     preferred_element_type=jnp.float32) + bfc_ref[...]
    col = jax.lax.broadcasted_iota(jnp.int32, logits.shape, 1)
    logits = jnp.where(col < num_classes, logits, -1e30)     # mask padded classes
    m = jnp.max(logits, axis=-1, keepdims=True)
    e = jnp.exp(logits - m)
    out_ref[...] = e / jnp.sum(e, axis=-1, keepdims=True)


def head_pallas(pooled, fc_w_pad, fc_b_pad, *, num_classes):
    N, Cp = pooled.shape
    NCp = fc_w_pad.shape[1]
    kernel = functools.partial(_head_kernel, num_classes=num_classes)
    return pl.pallas_call(
        kernel,
        out_shape=jax.ShapeDtypeStruct((N, NCp), jnp.float32),
        grid=(1,),
        in_specs=[
            pl.BlockSpec((N, Cp), lambda i: (0, 0)),
            pl.BlockSpec((Cp, NCp), lambda i: (0, 0)),
            pl.BlockSpec((1, NCp), lambda i: (0, 0)),
        ],
        out_specs=pl.BlockSpec((N, NCp), lambda i: (0, 0)),
    )(pooled, fc_w_pad, fc_b_pad)


# --------------------------------------------------------------------------
# Forward wrapper (layout transpose / padding / dtype cast only; no host im2col).
# --------------------------------------------------------------------------
def i3d_recognizer_forward(imgs, conv_w, conv_b, fc_w, fc_b):
    """imgs: (N, C, T, H, W) float32 (PyTorch NCTHW). Returns {'probs': (N, num_classes)}."""
    assert imgs.ndim == 5
    N, C, T, H, W = imgs.shape
    Cout = conv_w.shape[0]
    num_classes = fc_w.shape[1]
    Cout_p = _round_up(Cout, 128)          # TODO(synk): tile at 256 for wide v6e/v7x layers
    K_taps = 27 * C
    K_p = _round_up(K_taps, 128)
    NCp = _round_up(num_classes, 128)

    # NCTHW -> NTHWC, "same" padding, bf16 for the MXU operand stream.
    x = jnp.transpose(imgs, (0, 2, 3, 4, 1))
    x_pad = jnp.pad(x, ((0, 0), (1, 1), (1, 1), (1, 1), (0, 0))).astype(jnp.bfloat16)

    # Conv3d weight (Cout, Cin, kT, kH, kW) -> packed (27*Cin -> K_p, Cout_p), bf16.
    # Row index = ((kt*3 + kh)*3 + kw)*Cin + c  -- matches the in-kernel im2col order.
    w_packed = jnp.transpose(conv_w, (2, 3, 4, 1, 0)).reshape(K_taps, Cout)
    w_packed = jnp.pad(w_packed, ((0, K_p - K_taps), (0, Cout_p - Cout))).astype(jnp.bfloat16)
    b_row = jnp.pad(conv_b, (0, Cout_p - Cout)).reshape(1, Cout_p).astype(jnp.float32)

    pooled = conv3d_relu_pool_pallas(x_pad, w_packed, b_row,
                                     T=T, H=H, W=W, Cin=C)    # (N, Cout_p)

    fc_w_p = jnp.pad(fc_w.astype(jnp.float32),
                     ((0, Cout_p - fc_w.shape[0]), (0, NCp - num_classes)))
    fc_b_p = jnp.pad(fc_b.astype(jnp.float32),
                     (0, NCp - num_classes)).reshape(1, NCp)

    probs_p = head_pallas(pooled, fc_w_p, fc_b_p, num_classes=num_classes)
    return {'probs': probs_p[:, :num_classes]}


# --------------------------------------------------------------------------
if __name__ == "__main__":
    key = jax.random.PRNGKey(0)
    kx, kw, kb, kwf, kbf = jax.random.split(key, 5)

    N, C, T, H, W = 2, 4, 8, 16, 16
    Cfeat, num_classes = 32, 10

    imgs = jax.random.normal(kx, (N, C, T, H, W), jnp.float32)
    conv_w = 0.1 * jax.random.normal(kw, (Cfeat, C, 3, 3, 3), jnp.float32)
    conv_b = 0.1 * jax.random.normal(kb, (Cfeat,), jnp.float32)
    fc_w = 0.1 * jax.random.normal(kwf, (Cfeat, num_classes), jnp.float32)
    fc_b = 0.1 * jax.random.normal(kbf, (num_classes,), jnp.float32)

    out = i3d_recognizer_forward(imgs, conv_w, conv_b, fc_w, fc_b)
    probs = jax.block_until_ready(out['probs'])

    # Pure-JAX reference (conv matmul operands bf16-rounded, like the kernel).
    x = jnp.transpose(imgs, (0, 2, 3, 4, 1))
    xb = x.astype(jnp.bfloat16).astype(jnp.float32)
    xp = jnp.pad(xb, ((0, 0), (1, 1), (1, 1), (1, 1), (0, 0)))
    cols = []
    for kt in range(3):
        for kh in range(3):
            for kw_ in range(3):
                cols.append(xp[:, kt:kt + T, kh:kh + H, kw_:kw_ + W, :])
    patches = jnp.concatenate(cols, axis=-1).reshape(N * T * H * W, 27 * C)
    w2d = jnp.transpose(conv_w, (2, 3, 4, 1, 0)).astype(jnp.bfloat16).astype(
        jnp.float32).reshape(27 * C, Cfeat)
    ref_feat = jnp.maximum(patches @ w2d + conv_b[None, :], 0.0)
    ref_pooled = ref_feat.reshape(N, T * H * W, Cfeat).mean(axis=1)
    ref_probs = jax.nn.softmax(ref_pooled @ fc_w + fc_b[None, :], axis=-1)

    assert probs.shape == (N, num_classes)
    assert jnp.allclose(probs, ref_probs, atol=2e-3, rtol=2e-3)
    print("KERNEL_OK")
</pallas_src>

<mosaic_0001>
module attributes {stable_mosaic.version = 11 : i64} {
  func.func @_conv_relu_pool_kernel(%arg0: i32, %arg1: i32, %arg2: memref<1x1x18x18x4xbf16, #tpu.memory_space<vmem>>, %arg3: memref<1x1x18x18x4xbf16, #tpu.memory_space<vmem>>, %arg4: memref<1x1x18x18x4xbf16, #tpu.memory_space<vmem>>, %arg5: memref<128x128xbf16, #tpu.memory_space<vmem>>, %arg6: memref<1x128xf32, #tpu.memory_space<vmem>>, %arg7: memref<1x1x128xf32, #tpu.memory_space<vmem>>, %arg8: memref<256x128xbf16, #tpu.memory_space<vmem>>) attributes {dimension_semantics = [#tpu.dimension_semantics<parallel>, #tpu.dimension_semantics<arbitrary>], iteration_bounds = array<i64: 2, 8>, scalar_prefetch = 0 : i64, scratch_operands = 1 : i64, tpu.core_type = #tpu.core_type<tc>, window_params = [{transform_indices = @transform_0, window_bounds = array<i64: 1, 1, 18, 18, 4>}, {transform_indices = @transform_1, window_bounds = array<i64: 1, 1, 18, 18, 4>}, {transform_indices = @transform_2, window_bounds = array<i64: 1, 1, 18, 18, 4>}, {pipeline_mode = #tpu.pipeline_mode<synchronous>, transform_indices = @transform_3, window_bounds = array<i64: 128, 128>}, {pipeline_mode = #tpu.pipeline_mode<synchronous>, transform_indices = @transform_4, window_bounds = array<i64: 1, 128>}, {transform_indices = @transform_5, window_bounds = array<i64: 1, 1, 128>}]} {
    %c0_i32 = arith.constant 0 : i32
    %0 = arith.cmpi eq, %arg1, %c0_i32 : i32
    %1 = arith.extui %0 : i1 to i32
    %c0_i32_0 = arith.constant 0 : i32
    %2 = arith.cmpi ne, %1, %c0_i32_0 : i32
    scf.if %2 {
      %cst_58 = arith.constant 0.000000e+00 : f32
      %107 = vector.broadcast %cst_58 : f32 to vector<1x1x128xf32>
      %c0_59 = arith.constant 0 : index
      %c0_60 = arith.constant 0 : index
      %c0_61 = arith.constant 0 : index
      %108 = vector.load %arg7[%c0_59, %c0_60, %c0_61] : memref<1x1x128xf32, #tpu.memory_space<vmem>>, vector<1x1x128xf32>
      tpu.vector_store %arg7[%c0_59, %c0_60, %c0_61], %107 {strides = array<i32>} : memref<1x1x128xf32, #tpu.memory_space<vmem>>, vector<1x1x128xf32>,
      %cst_62 = arith.constant 0.000000e+00 : bf16
      %109 = vector.broadcast %cst_62 : bf16 to vector<256x128xbf16>
      %c0_63 = arith.constant 0 : index
      %c0_64 = arith.constant 0 : index
      %110 = vector.load %arg8[%c0_63, %c0_64] : memref<256x128xbf16, #tpu.memory_space<vmem>>, vector<256x128xbf16>
      tpu.vector_store %arg8[%c0_63, %c0_64], %109 {strides = array<i32>} : memref<256x128xbf16, #tpu.memory_space<vmem>>, vector<256x128xbf16>,
    } else {
    }
    %c0 = arith.constant 0 : index
    %c0_1 = arith.constant 0 : index
    %c0_2 = arith.constant 0 : index
    %c0_3 = arith.constant 0 : index
    %c0_4 = arith.constant 0 : index
    %3 = vector.load %arg2[%c0, %c0_1, %c0_2, %c0_3, %c0_4] : memref<1x1x18x18x4xbf16, #tpu.memory_space<vmem>>, vector<1x1x18x18x4xbf16>
    %4 = vector.shape_cast %3 : vector<1x1x18x18x4xbf16> to vector<18x18x4xbf16>
    %c0_5 = arith.constant 0 : index
    %c0_6 = arith.constant 0 : index
    %c0_7 = arith.constant 0 : index
    %c0_8 = arith.constant 0 : index
    %c0_9 = arith.constant 0 : index
    %5 = vector.load %arg3[%c0_5, %c0_6, %c0_7, %c0_8, %c0_9] : memref<1x1x18x18x4xbf16, #tpu.memory_space<vmem>>, vector<1x1x18x18x4xbf16>
    %6 = vector.shape_cast %5 : vector<1x1x18x18x4xbf16> to vector<18x18x4xbf16>
    %c0_10 = arith.constant 0 : index
    %c0_11 = arith.constant 0 : index
    %c0_12 = arith.constant 0 : index
    %c0_13 = arith.constant 0 : index
    %c0_14 = arith.constant 0 : index
    %7 = vector.load %arg4[%c0_10, %c0_11, %c0_12, %c0_13, %c0_14] : memref<1x1x18x18x4xbf16, #tpu.memory_space<vmem>>, vector<1x1x18x18x4xbf16>
    %8 = vector.shape_cast %7 : vector<1x1x18x18x4xbf16> to vector<18x18x4xbf16>
    %9 = vector.extract_strided_slice %4 {offsets = [0, 0, 0], sizes = [16, 16, 4], strides = [1, 1, 1]} : vector<18x18x4xbf16> to vector<16x16x4xbf16>
    %10 = vector.shape_cast %9 : vector<16x16x4xbf16> to vector<256x4xbf16>
    %c0_15 = arith.constant 0 : index
    %c0_16 = arith.constant 0 : index
    %11 = vector.load %arg8[%c0_15, %c0_16] : memref<256x128xbf16, #tpu.memory_space<vmem>>, vector<256x4xbf16>
    tpu.vector_store %arg8[%c0_15, %c0_16], %10 {strides = array<i32>} : memref<256x128xbf16, #tpu.memory_space<vmem>>, vector<256x4xbf16>,
    %12 = vector.extract_strided_slice %4 {offsets = [0, 1, 0], sizes = [16, 16, 4], strides = [1, 1, 1]} : vector<18x18x4xbf16> to vector<16x16x4xbf16>
    %13 = vector.shape_cast %12 : vector<16x16x4xbf16> to vector<256x4xbf16>
    %c0_17 = arith.constant 0 : index
    %c4 = arith.constant 4 : index
    %14 = vector.load %arg8[%c0_17, %c4] : memref<256x128xbf16, #tpu.memory_space<vmem>>, vector<256x4xbf16>
    tpu.vector_store %arg8[%c0_17, %c4], %13 {strides = array<i32>} : memref<256x128xbf16, #tpu.memory_space<vmem>>, vector<256x4xbf16>,
    %15 = vector.extract_strided_slice %4 {offsets = [0, 2, 0], sizes = [16, 16, 4], strides = [1, 1, 1]} : vector<18x18x4xbf16> to vector<16x16x4xbf16>
    %16 = vector.shape_cast %15 : vector<16x16x4xbf16> to vector<256x4xbf16>
    %c0_18 = arith.constant 0 : index
    %c8 = arith.constant 8 : index
    %17 = vector.load %arg8[%c0_18, %c8] : memref<256x128xbf16, #tpu.memory_space<vmem>>, vector<256x4xbf16>
    tpu.vector_store %arg8[%c0_18, %c8], %16 {strides = array<i32>} : memref<256x128xbf16, #tpu.memory_space<vmem>>, vector<256x4xbf16>,
    %18 = vector.extract_strided_slice %4 {offsets = [1, 0, 0], sizes = [16, 16, 4], strides = [1, 1, 1]} : vector<18x18x4xbf16> to vector<16x16x4xbf16>
    %19 = vector.shape_cast %18 : vector<16x16x4xbf16> to vector<256x4xbf16>
    %c0_19 = arith.constant 0 : index
    %c12 = arith.constant 12 : index
    %20 = vector.load %arg8[%c0_19, %c12] : memref<256x128xbf16, #tpu.memory_space<vmem>>, vector<256x4xbf16>
    tpu.vector_store %arg8[%c0_19, %c12], %19 {strides = array<i32>} : memref<256x128xbf16, #tpu.memory_space<vmem>>, vector<256x4xbf16>,
    %21 = vector.extract_strided_slice %4 {offsets = [1, 1, 0], sizes = [16, 16, 4], strides = [1, 1, 1]} : vector<18x18x4xbf16> to vector<16x16x4xbf16>
    %22 = vector.shape_cast %21 : vector<16x16x4xbf16> to vector<256x4xbf16>
    %c0_20 = arith.constant 0 : index
    %c16 = arith.constant 16 : index
    %23 = vector.load %arg8[%c0_20, %c16] : memref<256x128xbf16, #tpu.memory_space<vmem>>, vector<256x4xbf16>
    tpu.vector_store %arg8[%c0_20, %c16], %22 {strides = array<i32>} : memref<256x128xbf16, #tpu.memory_space<vmem>>, vector<256x4xbf16>,
    %24 = vector.extract_strided_slice %4 {offsets = [1, 2, 0], sizes = [16, 16, 4], strides = [1, 1, 1]} : vector<18x18x4xbf16> to vector<16x16x4xbf16>
    %25 = vector.shape_cast %24 : vector<16x16x4xbf16> to vector<256x4xbf16>
    %c0_21 = arith.constant 0 : index
    %c20 = arith.constant 20 : index
    %26 = vector.load %arg8[%c0_21, %c20] : memref<256x128xbf16, #tpu.memory_space<vmem>>, vector<256x4xbf16>
    tpu.vector_store %arg8[%c0_21, %c20], %25 {strides = array<i32>} : memref<256x128xbf16, #tpu.memory_space<vmem>>, vector<256x4xbf16>,
    %27 = vector.extract_strided_slice %4 {offsets = [2, 0, 0], sizes = [16, 16, 4], strides = [1, 1, 1]} : vector<18x18x4xbf16> to vector<16x16x4xbf16>
    %28 = vector.shape_cast %27 : vector<16x16x4xbf16> to vector<256x4xbf16>
    %c0_22 = arith.constant 0 : index
    %c24 = arith.constant 24 : index
    %29 = vector.load %arg8[%c0_22, %c24] : memref<256x128xbf16, #tpu.memory_space<vmem>>, vector<256x4xbf16>
    tpu.vector_store %arg8[%c0_22, %c24], %28 {strides = array<i32>} : memref<256x128xbf16, #tpu.memory_space<vmem>>, vector<256x4xbf16>,
    %30 = vector.extract_strided_slice %4 {offsets = [2, 1, 0], sizes = [16, 16, 4], strides = [1, 1, 1]} : vector<18x18x4xbf16> to vector<16x16x4xbf16>
    %31 = vector.shape_cast %30 : vector<16x16x4xbf16> to vector<256x4xbf16>
    %c0_23 = arith.constant 0 : index
    %c28 = arith.constant 28 : index
    %32 = vector.load %arg8[%c0_23, %c28] : memref<256x128xbf16, #tpu.memory_space<vmem>>, vector<256x4xbf16>
    tpu.vector_store %arg8[%c0_23, %c28], %31 {strides = array<i32>} : memref<256x128xbf16, #tpu.memory_space<vmem>>, vector<256x4xbf16>,
    %33 = vector.extract_strided_slice %4 {offsets = [2, 2, 0], sizes = [16, 16, 4], strides = [1, 1, 1]} : vector<18x18x4xbf16> to vector<16x16x4xbf16>
    %34 = vector.shape_cast %33 : vector<16x16x4xbf16> to vector<256x4xbf16>
    %c0_24 = arith.constant 0 : index
    %c32 = arith.constant 32 : index
    %35 = vector.load %arg8[%c0_24, %c32] : memref<256x128xbf16, #tpu.memory_space<vmem>>, vector<256x4xbf16>
    tpu.vector_store %arg8[%c0_24, %c32], %34 {strides = array<i32>} : memref<256x128xbf16, #tpu.memory_space<vmem>>, vector<256x4xbf16>,
    %36 = vector.extract_strided_slice %6 {offsets = [0, 0, 0], sizes = [16, 16, 4], strides = [1, 1, 1]} : vector<18x18x4xbf16> to vector<16x16x4xbf16>
    %37 = vector.shape_cast %36 : vector<16x16x4xbf16> to vector<256x4xbf16>
    %c0_25 = arith.constant 0 : index
    %c36 = arith.constant 36 : index
    %38 = vector.load %arg8[%c0_25, %c36] : memref<256x128xbf16, #tpu.memory_space<vmem>>, vector<256x4xbf16>
    tpu.vector_store %arg8[%c0_25, %c36], %37 {strides = array<i32>} : memref<256x128xbf16, #tpu.memory_space<vmem>>, vector<256x4xbf16>,
    %39 = vector.extract_strided_slice %6 {offsets = [0, 1, 0], sizes = [16, 16, 4], strides = [1, 1, 1]} : vector<18x18x4xbf16> to vector<16x16x4xbf16>
    %40 = vector.shape_cast %39 : vector<16x16x4xbf16> to vector<256x4xbf16>
    %c0_26 = arith.constant 0 : index
    %c40 = arith.constant 40 : index
    %41 = vector.load %arg8[%c0_26, %c40] : memref<256x128xbf16, #tpu.memory_space<vmem>>, vector<256x4xbf16>
    tpu.vector_store %arg8[%c0_26, %c40], %40 {strides = array<i32>} : memref<256x128xbf16, #tpu.memory_space<vmem>>, vector<256x4xbf16>,
    %42 = vector.extract_strided_slice %6 {offsets = [0, 2, 0], sizes = [16, 16, 4], strides = [1, 1, 1]} : vector<18x18x4xbf16> to vector<16x16x4xbf16>
    %43 = vector.shape_cast %42 : vector<16x16x4xbf16> to vector<256x4xbf16>
    %c0_27 = arith.constant 0 : index
    %c44 = arith.constant 44 : index
    %44 = vector.load %arg8[%c0_27, %c44] : memref<256x128xbf16, #tpu.memory_space<vmem>>, vector<256x4xbf16>
    tpu.vector_store %arg8[%c0_27, %c44], %43 {strides = array<i32>} : memref<256x128xbf16, #tpu.memory_space<vmem>>, vector<256x4xbf16>,
    %45 = vector.extract_strided_slice %6 {offsets = [1, 0, 0], sizes = [16, 16, 4], strides = [1, 1, 1]} : vector<18x18x4xbf16> to vector<16x16x4xbf16>
    %46 = vector.shape_cast %45 : vector<16x16x4xbf16> to vector<256x4xbf16>
    %c0_28 = arith.constant 0 : index
    %c48 = arith.constant 48 : index
    %47 = vector.load %arg8[%c0_28, %c48] : memref<256x128xbf16, #tpu.memory_space<vmem>>, vector<256x4xbf16>
    tpu.vector_store %arg8[%c0_28, %c48], %46 {strides = array<i32>} : memref<256x128xbf16, #tpu.memory_space<vmem>>, vector<256x4xbf16>,
    %48 = vector.extract_strided_slice %6 {offsets = [1, 1, 0], sizes = [16, 16, 4], strides = [1, 1, 1]} : vector<18x18x4xbf16> to vector<16x16x4xbf16>
    %49 = vector.shape_cast %48 : vector<16x16x4xbf16> to vector<256x4xbf16>
    %c0_29 = arith.constant 0 : index
    %c52 = arith.constant 52 : index
    %50 = vector.load %arg8[%c0_29, %c52] : memref<256x128xbf16, #tpu.memory_space<vmem>>, vector<256x4xbf16>
    tpu.vector_store %arg8[%c0_29, %c52], %49 {strides = array<i32>} : memref<256x128xbf16, #tpu.memory_space<vmem>>, vector<256x4xbf16>,
    %51 = vector.extract_strided_slice %6 {offsets = [1, 2, 0], sizes = [16, 16, 4], strides = [1, 1, 1]} : vector<18x18x4xbf16> to vector<16x16x4xbf16>
    %52 = vector.shape_cast %51 : vector<16x16x4xbf16> to vector<256x4xbf16>
    %c0_30 = arith.constant 0 : index
    %c56 = arith.constant 56 : index
    %53 = vector.load %arg8[%c0_30, %c56] : memref<256x128xbf16, #tpu.memory_space<vmem>>, vector<256x4xbf16>
    tpu.vector_store %arg8[%c0_30, %c56], %52 {strides = array<i32>} : memref<256x128xbf16, #tpu.memory_space<vmem>>, vector<256x4xbf16>,
    %54 = vector.extract_strided_slice %6 {offsets = [2, 0, 0], sizes = [16, 16, 4], strides = [1, 1, 1]} : vector<18x18x4xbf16> to vector<16x16x4xbf16>
    %55 = vector.shape_cast %54 : vector<16x16x4xbf16> to vector<256x4xbf16>
    %c0_31 = arith.constant 0 : index
    %c60 = arith.constant 60 : index
    %56 = vector.load %arg8[%c0_31, %c60] : memref<256x128xbf16, #tpu.memory_space<vmem>>, vector<256x4xbf16>
    tpu.vector_store %arg8[%c0_31, %c60], %55 {strides = array<i32>} : memref<256x128xbf16, #tpu.memory_space<vmem>>, vector<256x4xbf16>,
    %57 = vector.extract_strided_slice %6 {offsets = [2, 1, 0], sizes = [16, 16, 4], strides = [1, 1, 1]} : vector<18x18x4xbf16> to vector<16x16x4xbf16>
    %58 = vector.shape_cast %57 : vector<16x16x4xbf16> to vector<256x4xbf16>
    %c0_32 = arith.constant 0 : index
    %c64 = arith.constant 64 : index
    %59 = vector.load %arg8[%c0_32, %c64] : memref<256x128xbf16, #tpu.memory_space<vmem>>, vector<256x4xbf16>
    tpu.vector_store %arg8[%c0_32, %c64], %58 {strides = array<i32>} : memref<256x128xbf16, #tpu.memory_space<vmem>>, vector<256x4xbf16>,
    %60 = vector.extract_strided_slice %6 {offsets = [2, 2, 0], sizes = [16, 16, 4], strides = [1, 1, 1]} : vector<18x18x4xbf16> to vector<16x16x4xbf16>
    %61 = vector.shape_cast %60 : vector<16x16x4xbf16> to vector<256x4xbf16>
    %c0_33 = arith.constant 0 : index
    %c68 = arith.constant 68 : index
    %62 = vector.load %arg8[%c0_33, %c68] : memref<256x128xbf16, #tpu.memory_space<vmem>>, vector<256x4xbf16>
    tpu.vector_store %arg8[%c0_33, %c68], %61 {strides = array<i32>} : memref<256x128xbf16, #tpu.memory_space<vmem>>, vector<256x4xbf16>,
    %63 = vector.extract_strided_slice %8 {offsets = [0, 0, 0], sizes = [16, 16, 4], strides = [1, 1, 1]} : vector<18x18x4xbf16> to vector<16x16x4xbf16>
    %64 = vector.shape_cast %63 : vector<16x16x4xbf16> to vector<256x4xbf16>
    %c0_34 = arith.constant 0 : index
    %c72 = arith.constant 72 : index
    %65 = vector.load %arg8[%c0_34, %c72] : memref<256x128xbf16, #tpu.memory_space<vmem>>, vector<256x4xbf16>
    tpu.vector_store %arg8[%c0_34, %c72], %64 {strides = array<i32>} : memref<256x128xbf16, #tpu.memory_space<vmem>>, vector<256x4xbf16>,
    %66 = vector.extract_strided_slice %8 {offsets = [0, 1, 0], sizes = [16, 16, 4], strides = [1, 1, 1]} : vector<18x18x4xbf16> to vector<16x16x4xbf16>
    %67 = vector.shape_cast %66 : vector<16x16x4xbf16> to vector<256x4xbf16>
    %c0_35 = arith.constant 0 : index
    %c76 = arith.constant 76 : index
    %68 = vector.load %arg8[%c0_35, %c76] : memref<256x128xbf16, #tpu.memory_space<vmem>>, vector<256x4xbf16>
    tpu.vector_store %arg8[%c0_35, %c76], %67 {strides = array<i32>} : memref<256x128xbf16, #tpu.memory_space<vmem>>, vector<256x4xbf16>,
    %69 = vector.extract_strided_slice %8 {offsets = [0, 2, 0], sizes = [16, 16, 4], strides = [1, 1, 1]} : vector<18x18x4xbf16> to vector<16x16x4xbf16>
    %70 = vector.shape_cast %69 : vector<16x16x4xbf16> to vector<256x4xbf16>
    %c0_36 = arith.constant 0 : index
    %c80 = arith.constant 80 : index
    %71 = vector.load %arg8[%c0_36, %c80] : memref<256x128xbf16, #tpu.memory_space<vmem>>, vector<256x4xbf16>
    tpu.vector_store %arg8[%c0_36, %c80], %70 {strides = array<i32>} : memref<256x128xbf16, #tpu.memory_space<vmem>>, vector<256x4xbf16>,
    %72 = vector.extract_strided_slice %8 {offsets = [1, 0, 0], sizes = [16, 16, 4], strides = [1, 1, 1]} : vector<18x18x4xbf16> to vector<16x16x4xbf16>
    %73 = vector.shape_cast %72 : vector<16x16x4xbf16> to vector<256x4xbf16>
    %c0_37 = arith.constant 0 : index
    %c84 = arith.constant 84 : index
    %74 = vector.load %arg8[%c0_37, %c84] : memref<256x128xbf16, #tpu.memory_space<vmem>>, vector<256x4xbf16>
    tpu.vector_store %arg8[%c0_37, %c84], %73 {strides = array<i32>} : memref<256x128xbf16, #tpu.memory_space<vmem>>, vector<256x4xbf16>,
    %75 = vector.extract_strided_slice %8 {offsets = [1, 1, 0], sizes = [16, 16, 4], strides = [1, 1, 1]} : vector<18x18x4xbf16> to vector<16x16x4xbf16>
    %76 = vector.shape_cast %75 : vector<16x16x4xbf16> to vector<256x4xbf16>
    %c0_38 = arith.constant 0 : index
    %c88 = arith.constant 88 : index
    %77 = vector.load %arg8[%c0_38, %c88] : memref<256x128xbf16, #tpu.memory_space<vmem>>, vector<256x4xbf16>
    tpu.vector_store %arg8[%c0_38, %c88], %76 {strides = array<i32>} : memref<256x128xbf16, #tpu.memory_space<vmem>>, vector<256x4xbf16>,
    %78 = vector.extract_strided_slice %8 {offsets = [1, 2, 0], sizes = [16, 16, 4], strides = [1, 1, 1]} : vector<18x18x4xbf16> to vector<16x16x4xbf16>
    %79 = vector.shape_cast %78 : vector<16x16x4xbf16> to vector<256x4xbf16>
    %c0_39 = arith.constant 0 : index
    %c92 = arith.constant 92 : index
    %80 = vector.load %arg8[%c0_39, %c92] : memref<256x128xbf16, #tpu.memory_space<vmem>>, vector<256x4xbf16>
    tpu.vector_store %arg8[%c0_39, %c92], %79 {strides = array<i32>} : memref<256x128xbf16, #tpu.memory_space<vmem>>, vector<256x4xbf16>,
    %81 = vector.extract_strided_slice %8 {offsets = [2, 0, 0], sizes = [16, 16, 4], strides = [1, 1, 1]} : vector<18x18x4xbf16> to vector<16x16x4xbf16>
    %82 = vector.shape_cast %81 : vector<16x16x4xbf16> to vector<256x4xbf16>
    %c0_40 = arith.constant 0 : index
    %c96 = arith.constant 96 : index
    %83 = vector.load %arg8[%c0_40, %c96] : memref<256x128xbf16, #tpu.memory_space<vmem>>, vector<256x4xbf16>
    tpu.vector_store %arg8[%c0_40, %c96], %82 {strides = array<i32>} : memref<256x128xbf16, #tpu.memory_space<vmem>>, vector<256x4xbf16>,
    %84 = vector.extract_strided_slice %8 {offsets = [2, 1, 0], sizes = [16, 16, 4], strides = [1, 1, 1]} : vector<18x18x4xbf16> to vector<16x16x4xbf16>
    %85 = vector.shape_cast %84 : vector<16x16x4xbf16> to vector<256x4xbf16>
    %c0_41 = arith.constant 0 : index
    %c100 = arith.constant 100 : index
    %86 = vector.load %arg8[%c0_41, %c100] : memref<256x128xbf16, #tpu.memory_space<vmem>>, vector<256x4xbf16>
    tpu.vector_store %arg8[%c0_41, %c100], %85 {strides = array<i32>} : memref<256x128xbf16, #tpu.memory_space<vmem>>, vector<256x4xbf16>,
    %87 = vector.extract_strided_slice %8 {offsets = [2, 2, 0], sizes = [16, 16, 4], strides = [1, 1, 1]} : vector<18x18x4xbf16> to vector<16x16x4xbf16>
    %88 = vector.shape_cast %87 : vector<16x16x4xbf16> to vector<256x4xbf16>
    %c0_42 = arith.constant 0 : index
    %c104 = arith.constant 104 : index
    %89 = vector.load %arg8[%c0_42, %c104] : memref<256x128xbf16, #tpu.memory_space<vmem>>, vector<256x4xbf16>
    tpu.vector_store %arg8[%c0_42, %c104], %88 {strides = array<i32>} : memref<256x128xbf16, #tpu.memory_space<vmem>>, vector<256x4xbf16>,
    %c0_43 = arith.constant 0 : index
    %c0_44 = arith.constant 0 : index
    %90 = vector.load %arg8[%c0_43, %c0_44] : memref<256x128xbf16, #tpu.memory_space<vmem>>, vector<256x128xbf16>
    %c0_45 = arith.constant 0 : index
    %c0_46 = arith.constant 0 : index
    %91 = vector.load %arg5[%c0_45, %c0_46] : memref<128x128xbf16, #tpu.memory_space<vmem>>, vector<128x128xbf16>
    %cst = arith.constant dense<0.000000e+00> : vector<256x128xf32>
    %92 = tpu.matmul %90, %91, %cst {dimension_numbers = #tpu.dot_dimension_numbers<[1], [0], [0], [1], [0, 0, 1, 1], [], []>} : vector<256x128xbf16>, vector<128x128xbf16>, vector<256x128xf32> -> vector<256x128xf32>
    %c0_47 = arith.constant 0 : index
    %c0_48 = arith.constant 0 : index
    %93 = vector.load %arg6[%c0_47, %c0_48] : memref<1x128xf32, #tpu.memory_space<vmem>>, vector<1x128xf32>
    %94 = vector.broadcast %93 : vector<1x128xf32> to vector<256x128xf32>
    %95 = arith.addf %92, %94 : vector<256x128xf32>
    %cst_49 = arith.constant 0.000000e+00 : f32
    %96 = vector.broadcast %cst_49 : f32 to vector<256x128xf32>
    %97 = arith.maximumf %95, %96 : vector<256x128xf32>
    %cst_50 = arith.constant dense<0.000000e+00> : vector<128xf32>
    %98 = vector.multi_reduction <add>, %97, %cst_50 [0] : vector<256x128xf32> to vector<128xf32>
    %99 = vector.shape_cast %98 : vector<128xf32> to vector<1x128xf32>
    %c0_51 = arith.constant 0 : index
    %c0_52 = arith.constant 0 : index
    %c0_53 = arith.constant 0 : index
    %100 = vector.load %arg7[%c0_51, %c0_52, %c0_53] : memref<1x1x128xf32, #tpu.memory_space<vmem>>, vector<1x1x128xf32>
    %101 = vector.shape_cast %99 : vector<1x128xf32> to vector<1x1x128xf32>
    %102 = arith.addf %100, %101 : vector<1x1x128xf32>
    %c0_54 = arith.constant 0 : index
    %c0_55 = arith.constant 0 : index
    %c0_56 = arith.constant 0 : index
    %103 = vector.load %arg7[%c0_54, %c0_55, %c0_56] : memref<1x1x128xf32, #tpu.memory_space<vmem>>, vector<1x1x128xf32>
    tpu.vector_store %arg7[%c0_54, %c0_55, %c0_56], %102 {strides = array<i32>} : memref<1x1x128xf32, #tpu.memory_space<vmem>>, vector<1x1x128xf32>,
    %c7_i32 = arith.constant 7 : i32
    %104 = arith.cmpi eq, %arg1, %c7_i32 : i32
    %105 = arith.extui %104 : i1 to i32
    %c0_i32_57 = arith.constant 0 : i32
    %106 = arith.cmpi ne, %105, %c0_i32_57 : i32
    scf.if %106 {
      %c0_58 = arith.constant 0 : index
      %c0_59 = arith.constant 0 : index
      %c0_60 = arith.constant 0 : index
      %107 = vector.load %arg7[%c0_58, %c0_59, %c0_60] : memref<1x1x128xf32, #tpu.memory_space<vmem>>, vector<1x1x128xf32>
      %cst_61 = arith.constant 4.8828125E-4 : f32
      %108 = vector.broadcast %cst_61 : f32 to vector<1x1x128xf32>
      %109 = arith.mulf %107, %108 : vector<1x1x128xf32>
      %c0_62 = arith.constant 0 : index
      %c0_63 = arith.constant 0 : index
      %c0_64 = arith.constant 0 : index
      %110 = vector.load %arg7[%c0_62, %c0_63, %c0_64] : memref<1x1x128xf32, #tpu.memory_space<vmem>>, vector<1x1x128xf32>
      tpu.vector_store %arg7[%c0_62, %c0_63, %c0_64], %109 {strides = array<i32>} : memref<1x1x128xf32, #tpu.memory_space<vmem>>, vector<1x1x128xf32>,
    } else {
    }
    return
  }
  func.func @transform_0(%arg0: i32, %arg1: i32) -> (i32, i32, i32, i32, i32) {
    %c0_i32 = arith.constant 0 : i32
    %c0_i32_0 = arith.constant 0 : i32
    %c0_i32_1 = arith.constant 0 : i32
    %c0_i32_2 = arith.constant 0 : i32
    return %arg0, %arg1, %c0_i32, %c0_i32_0, %c0_i32_1 : i32, i32, i32, i32, i32
  }
  func.func @transform_1(%arg0: i32, %arg1: i32) -> (i32, i32, i32, i32, i32) {
    %c1_i32 = arith.constant 1 : i32
    %0 = arith.addi %arg1, %c1_i32 : i32
    %c0_i32 = arith.constant 0 : i32
    %c0_i32_0 = arith.constant 0 : i32
    %c0_i32_1 = arith.constant 0 : i32
    %c0_i32_2 = arith.constant 0 : i32
    return %arg0, %0, %c0_i32, %c0_i32_0, %c0_i32_1 : i32, i32, i32, i32, i32
  }
  func.func @transform_2(%arg0: i32, %arg1: i32) -> (i32, i32, i32, i32, i32) {
    %c2_i32 = arith.constant 2 : i32
    %0 = arith.addi %arg1, %c2_i32 : i32
    %c0_i32 = arith.constant 0 : i32
    %c0_i32_0 = arith.constant 0 : i32
    %c0_i32_1 = arith.constant 0 : i32
    %c0_i32_2 = arith.constant 0 : i32
    return %arg0, %0, %c0_i32, %c0_i32_0, %c0_i32_1 : i32, i32, i32, i32, i32
  }
  func.func @transform_3(%arg0: i32, %arg1: i32) -> (i32, i32) {
    %c0_i32 = arith.constant 0 : i32
    %c0_i32_0 = arith.constant 0 : i32
    %c0_i32_1 = arith.constant 0 : i32
    return %c0_i32, %c0_i32_0 : i32, i32
  }
  func.func @transform_4(%arg0: i32, %arg1: i32) -> (i32, i32) {
    %c0_i32 = arith.constant 0 : i32
    %c0_i32_0 = arith.constant 0 : i32
    %c0_i32_1 = arith.constant 0 : i32
    return %c0_i32, %c0_i32_0 : i32, i32
  }
  func.func @transform_5(%arg0: i32, %arg1: i32) -> (i32, i32, i32) {
    %c0_i32 = arith.constant 0 : i32
    %c0_i32_0 = arith.constant 0 : i32
    %c0_i32_1 = arith.constant 0 : i32
    return %arg0, %c0_i32, %c0_i32_0 : i32, i32, i32
  }
}

</mosaic_0001>

<llo_original>
// kernel: tpu_custom_call.1
$region0: #{tpu_custom_call.1}
  #allocation0 [shape = 'u32[]', space=smem, size = 0x4, offset = 0x4, fixed_abs, tag = 'smem constant byte address 0x4 - core index']
  #allocation1 [shape = 'u32[144,128]{1,0:T(1,128)}', space=vmem, size = 0x12000, scoped, tag = 'internal scratch']
  #allocation2 [shape = 'bf16[256,128]{1,0:T(16,128)(2,1)}', space=vmem, size = 0x10000, scoped, tag = 'scratch operand']
  %s0 = inlined_call_operand.vmem [shape: bf16[2,10,18,18,4], index: 0, kind: input, shape index: {}]
  %s1 = inlined_call_operand.vmem [shape: bf16[2,10,18,18,4], index: 1, kind: input, shape index: {}]
  %s2 = inlined_call_operand.vmem [shape: bf16[2,10,18,18,4], index: 2, kind: input, shape index: {}]
  %s3 = inlined_call_operand.vmem [shape: bf16[128,128], index: 3, kind: input, shape index: {}]
  %s4 = inlined_call_operand.vmem [shape: f32[1,128], index: 4, kind: input, shape index: {}]
  %s5 = inlined_call_operand.hbm [shape: f32[2,1,128], index: 5, kind: output, shape index: {}]
  %s6 = sld [smem:[#allocation0]]
  $region61: #{tpu_custom_call.1} parent=0
    _
  %s8 = ssub.s32 1, %s6
  %s9 = scalar_select 0, %s8, %s6
  $region1: #{tpu_custom_call.1} parent=0
    #allocation3 [shape = 'u8[1024]{0}', space=vmem, size = 0x400, scoped, tag = 'output window, operand 0']
    #allocation4 [shape = 's32[2]{0}', space=sflag, size = 0x8, scoped, tag = 'scoped memory for tpu_custom_call.1']
    %10 = vsyncpa [#allocation4], 0
    %s11 = scalar_lea.sflag [#allocation4], 1
    %12 = vsyncpa %s11, 0
    loop: start=0, step=1, limit=18
    $region2: #{tpu_custom_call.1} parent=1 // loop_pre_header
      _
    $region3: #{tpu_custom_call.1} parent=1 // loop_header
      %s14 = sphi 0, %s18
      %p15 = scmp.ge.s32.totalorder %s14, 18
      %s21 = sphi 0, %s33
      %s22 = sphi 0, %s29
      %s23 = sphi 0, %s21
      %s24 = sphi 0, %s22
      %s25 = sphi 0, %s23
      %s26 = sphi 0, %s24
      %s38 = sphi 0, %s40
      %s41 = sphi 0, %s38
      %s42 = sphi 0, %s41
      %s58 = sphi 0, %s42
      %s68 = sphi 0, %s70
      %s71 = sphi 0, %s68
      %s72 = sphi 0, %s71
      %s88 = sphi 0, %s72
      %s98 = sphi 0, %s100
      %s101 = sphi 0, %s98
      %s102 = sphi 0, %s101
      %s118 = sphi 0, %s102
      %s122 = sphi 0, %s122
      %s124 = sphi 0, %s122
      %s125 = sphi 0, %s124
      %s139 = sphi 0, %s125
      %s143 = sphi 0, %s143
      %s145 = sphi 0, %s143
      %s146 = sphi 0, %s145
      %s160 = sphi 0, %s146
      %s166 = sphi 0, %s168
      %s169 = sphi 0, %s166
      %s170 = sphi 0, %s169
      %s186 = sphi 0, %s170
    $region4: #{tpu_custom_call.1} parent=1 // loop_header_branch
      %17 = sbr.rel (%p15) target = $region8
    $region5: #{tpu_custom_call.1} parent=1 // loop_body
      %s19 = ssub.s32 %s14, 1
      %s20 = ssub.s32 %s14, 2
      %s27 = sadd.s32 1, %s22
      %p28 = scmp.ge.s32.totalorder %s27, 8
      %s29 = scalar_select %p28, 0, %s27
      %s30 = sadd.s32 1, %s21
      %s31 = scalar_select %p28, %s30, %s21
      %p32 = scmp.ge.s32.totalorder %s31, 2
      %s33 = scalar_select %p32, 0, %s31
      %s34 = ssub.s32 %s21, %s33
      %s35 = ssub.s32 %s22, %s29
      %s36 = sor.u32 %s34, %s35
      %p37 = scmp.eq.s32.totalorder %s36, 0
      %s39 = sadd.s32 %s38, 1
      %s40 = scalar_select %p37, %s38, %s39
      %p43 = pneg %p37
      %p44 = scmp.eq.s32.totalorder %s14, 15
      %p45 = por %p43, %p44
      %p46 = scmp.ne.s32.totalorder %s38, %s41
      %p47 = scmp.eq.s32.totalorder %s14, 0
      %p48 = por %p46, %p47
      %p49 = scmp.ne.s32.totalorder %s38, %s41
      %p50 = scmp.eq.s32.totalorder %s19, 15
      %p51 = por %p49, %p50
      %p52 = scmp.ne.s32.totalorder %s41, %s42
      %p53 = scmp.eq.s32.totalorder %s19, 0
      %p54 = por %p52, %p53
      %p55 = scmp.ne.s32.totalorder %s41, %s42
      %p56 = scmp.eq.s32.totalorder %s20, 15
      %p57 = por %p55, %p56
      %p59 = scmp.ne.s32.totalorder %s42, %s58
      %p60 = scmp.eq.s32.totalorder %s20, 0
      %p61 = por %p59, %p60
      %s62 = sadd.s32 %s22, 1
      %s63 = sadd.s32 %s29, 1
      %s64 = ssub.s32 %s21, %s33
      %s65 = ssub.s32 %s62, %s63
      %s66 = sor.u32 %s64, %s65
      %p67 = scmp.eq.s32.totalorder %s66, 0
      %s69 = sadd.s32 %s68, 1
      %s70 = scalar_select %p67, %s68, %s69
      %p73 = pneg %p67
      %p74 = scmp.eq.s32.totalorder %s14, 15
      %p75 = por %p73, %p74
      %p76 = scmp.ne.s32.totalorder %s68, %s71
      %p77 = scmp.eq.s32.totalorder %s14, 0
      %p78 = por %p76, %p77
      %p79 = scmp.ne.s32.totalorder %s68, %s71
      %p80 = scmp.eq.s32.totalorder %s19, 15
      %p81 = por %p79, %p80
      %p82 = scmp.ne.s32.totalorder %s71, %s72
      %p83 = scmp.eq.s32.totalorder %s19, 0
      %p84 = por %p82, %p83
      %p85 = scmp.ne.s32.totalorder %s71, %s72
      %p86 = scmp.eq.s32.totalorder %s20, 15
      %p87 = por %p85, %p86
      %p89 = scmp.ne.s32.totalorder %s72, %s88
      %p90 = scmp.eq.s32.totalorder %s20, 0
      %p91 = por %p89, %p90
      %s92 = sadd.s32 %s22, 2
      %s93 = sadd.s32 %s29, 2
      %s94 = ssub.s32 %s21, %s33
      %s95 = ssub.s32 %s92, %s93
      %s96 = sor.u32 %s94, %s95
      %p97 = scmp.eq.s32.totalorder %s96, 0
      %s99 = sadd.s32 %s98, 1
      %s100 = scalar_select %p97, %s98, %s99
      %p103 = pneg %p97
      %p104 = scmp.eq.s32.totalorder %s14, 15
      %p105 = por %p103, %p104
      %p106 = scmp.ne.s32.totalorder %s98, %s101
      %p107 = scmp.eq.s32.totalorder %s14, 0
      %p108 = por %p106, %p107
      %p109 = scmp.ne.s32.totalorder %s98, %s101
      %p110 = scmp.eq.s32.totalorder %s19, 15
      %p111 = por %p109, %p110
      %p112 = scmp.ne.s32.totalorder %s101, %s102
      %p113 = scmp.eq.s32.totalorder %s19, 0
      %p114 = por %p112, %p113
      %p115 = scmp.ne.s32.totalorder %s101, %s102
      %p116 = scmp.eq.s32.totalorder %s20, 15
      %p117 = por %p115, %p116
      %p119 = scmp.ne.s32.totalorder %s102, %s118
      %p120 = scmp.eq.s32.totalorder %s20, 0
      %p121 = por %p119, %p120
      %s123 = sadd.s32 %s122, 1
      %p126 = scmp.eq.s32.totalorder %s14, 15
      %p127 = scmp.ne.s32.totalorder %s122, %s124
      %p128 = scmp.eq.s32.totalorder %s14, 0
      %p129 = por %p127, %p128
      %p130 = scmp.ne.s32.totalorder %s122, %s124
      %p131 = scmp.eq.s32.totalorder %s19, 15
      %p132 = por %p130, %p131
      %p133 = scmp.ne.s32.totalorder %s124, %s125
      %p134 = scmp.eq.s32.totalorder %s19, 0
      %p135 = por %p133, %p134
      %p136 = scmp.ne.s32.totalorder %s124, %s125
      %p137 = scmp.eq.s32.totalorder %s20, 15
      %p138 = por %p136, %p137
      %p140 = scmp.ne.s32.totalorder %s125, %s139
      %p141 = scmp.eq.s32.totalorder %s20, 0
      %p142 = por %p140, %p141
      %s144 = sadd.s32 %s143, 1
      %p147 = scmp.eq.s32.totalorder %s14, 15
      %p148 = scmp.ne.s32.totalorder %s143, %s145
      %p149 = scmp.eq.s32.totalorder %s14, 0
      %p150 = por %p148, %p149
      %p151 = scmp.ne.s32.totalorder %s143, %s145
      %p152 = scmp.eq.s32.totalorder %s19, 15
      %p153 = por %p151, %p152
      %p154 = scmp.ne.s32.totalorder %s145, %s146
      %p155 = scmp.eq.s32.totalorder %s19, 0
      %p156 = por %p154, %p155
      %p157 = scmp.ne.s32.totalorder %s145, %s146
      %p158 = scmp.eq.s32.totalorder %s20, 15
      %p159 = por %p157, %p158
      %p161 = scmp.ne.s32.totalorder %s146, %s160
      %p162 = scmp.eq.s32.totalorder %s20, 0
      %p163 = por %p161, %p162
      %s164 = ssub.s32 %s21, %s33
      %p165 = scmp.eq.s32.totalorder %s164, 0
      %s167 = sadd.s32 %s166, 1
      %s168 = scalar_select %p165, %s166, %s167
      %p171 = pneg %p165
      %p172 = scmp.eq.s32.totalorder %s14, 15
      %p173 = por %p171, %p172
      %p174 = scmp.ne.s32.totalorder %s166, %s169
      %p175 = scmp.eq.s32.totalorder %s14, 0
      %p176 = por %p174, %p175
      %p177 = scmp.ne.s32.totalorder %s166, %s169
      %p178 = scmp.eq.s32.totalorder %s19, 15
      %p179 = por %p177, %p178
      %p180 = scmp.ne.s32.totalorder %s169, %s170
      %p181 = scmp.eq.s32.totalorder %s19, 0
      %p182 = por %p180, %p181
      %p183 = scmp.ne.s32.totalorder %s169, %s170
      %p184 = scmp.eq.s32.totalorder %s20, 15
      %p185 = por %p183, %p184
      %p187 = scmp.ne.s32.totalorder %s170, %s186
      %p188 = scmp.eq.s32.totalorder %s20, 0
      %p189 = por %p187, %p188
      %p190 = scmp.le.s32.totalorder 1, %s14
      %p191 = scmp.lt.s32.totalorder %s14, 17
      %p192 = pnand %p190, %p191
      %p193 = pneg %p192
      // Predicated region
      $region9: #{tpu_custom_call.1} parent=5 // pred_check
        _
      $region10: #{tpu_custom_call.1} parent=5 // pred_check_branch
        %195 = sbr.rel (%p192) target = $region12
      $region11: #{tpu_custom_call.1} parent=5 // pred_region
        %s196 = ssub.s32 %s14, 1
        // Predicated region
        $region13: #{tpu_custom_call.1} parent=11 // pred_check
          %p197 = pneg %p135
        $region14: #{tpu_custom_call.1} parent=11 // pred_check_branch
          %199 = sbr.rel (%p197) target = $region16
        $region15: #{tpu_custom_call.1} parent=11 // pred_region
          _
        $region16: #{tpu_custom_call.1} parent=11 // pred_fallthru
          _
        // Predicated region
        $region17: #{tpu_custom_call.1} parent=11 // pred_check
          %p200 = pneg %p156
        $region18: #{tpu_custom_call.1} parent=11 // pred_check_branch
          %202 = sbr.rel (%p200) target = $region20
        $region19: #{tpu_custom_call.1} parent=11 // pred_region
          _
        $region20: #{tpu_custom_call.1} parent=11 // pred_fallthru
          _
      $region12: #{tpu_custom_call.1} parent=5 // pred_fallthru
        _
      %p203 = scmp.lt.s32.totalorder %s14, 16
      // Predicated region
      $region21: #{tpu_custom_call.1} parent=5 // pred_check
        %p204 = pneg %p203
      $region22: #{tpu_custom_call.1} parent=5 // pred_check_branch
        %206 = sbr.rel (%p204) target = $region24
      $region23: #{tpu_custom_call.1} parent=5 // pred_region
        // Predicated region
        $region25: #{tpu_custom_call.1} parent=23 // pred_check
          %p207 = pneg %p48
        $region26: #{tpu_custom_call.1} parent=23 // pred_check_branch
          %209 = sbr.rel (%p207) target = $region28
        $region27: #{tpu_custom_call.1} parent=23 // pred_region
          %p210 = scmp.lt.s32.totalorder %s21, 1
          %s211 = scalar_select %p210, %s21, 1
          %p212 = scmp.lt.s32.totalorder %s22, 9
          %s213 = scalar_select %p212, %s22, 9
          %s214 = smul.addr %s213, 54
          %s215 = smul.addr %s211, 540
          %s216 = sadd.s32 %s214, %s215
          %s217 = smul.addr %s216, 4
          %s218 = scalar_lea.vmem %s0, %s217
        $region28: #{tpu_custom_call.1} parent=23 // pred_fallthru
          _
        // Predicated region
        $region29: #{tpu_custom_call.1} parent=23 // pred_check
          %p219 = pneg %p78
        $region30: #{tpu_custom_call.1} parent=23 // pred_check_branch
          %221 = sbr.rel (%p219) target = $region32
        $region31: #{tpu_custom_call.1} parent=23 // pred_region
          %s222 = sadd.s32 %s22, 1
          %p223 = scmp.lt.s32.totalorder %s21, 1
          %s224 = scalar_select %p223, %s21, 1
          %p225 = scmp.lt.s32.totalorder %s222, 9
          %s226 = scalar_select %p225, %s222, 9
          %s227 = smul.addr %s226, 54
          %s228 = smul.addr %s224, 540
          %s229 = sadd.s32 %s227, %s228
          %s230 = smul.addr %s229, 4
          %s231 = scalar_lea.vmem %s1, %s230
          %s232 = sadd.s32 %s22, 1
        $region32: #{tpu_custom_call.1} parent=23 // pred_fallthru
          _
        // Predicated region
        $region33: #{tpu_custom_call.1} parent=23 // pred_check
          %p233 = pneg %p108
        $region34: #{tpu_custom_call.1} parent=23 // pred_check_branch
          %235 = sbr.rel (%p233) target = $region36
        $region35: #{tpu_custom_call.1} parent=23 // pred_region
          %s236 = sadd.s32 %s22, 2
          %p237 = scmp.lt.s32.totalorder %s21, 1
          %s238 = scalar_select %p237, %s21, 1
          %p239 = scmp.lt.s32.totalorder %s236, 9
          %s240 = scalar_select %p239, %s236, 9
          %s241 = smul.addr %s240, 54
          %s242 = smul.addr %s238, 540
          %s243 = sadd.s32 %s241, %s242
          %s244 = smul.addr %s243, 4
          %s245 = scalar_lea.vmem %s2, %s244
          %s246 = sadd.s32 %s22, 2
        $region36: #{tpu_custom_call.1} parent=23 // pred_fallthru
          _
      $region24: #{tpu_custom_call.1} parent=5 // pred_fallthru
        _
      %p247 = scmp.le.s32.totalorder 1, %s14
      %p248 = scmp.lt.s32.totalorder %s14, 17
      %p249 = pnand %p247, %p248
      %p250 = pneg %p249
      // Predicated region
      $region37: #{tpu_custom_call.1} parent=5 // pred_check
        _
      $region38: #{tpu_custom_call.1} parent=5 // pred_check_branch
        %252 = sbr.rel (%p249) target = $region40
      $region39: #{tpu_custom_call.1} parent=5 // pred_region
        %s253 = ssub.s32 %s14, 1
        %p254 = scmp.lt.s32.totalorder %s23, 1
        %s255 = scalar_select %p254, %s23, 1
        %p256 = scmp.lt.s32.totalorder %s24, 9
        %s257 = scalar_select %p256, %s24, 9
        %s258 = smul.addr %s257, 54
        %s259 = smul.addr %s255, 540
        %s260 = sadd.s32 %s258, %s259
        %s261 = smul.addr %s260, 4
        %s262 = scalar_lea.vmem %s0, %s261
        %p263 = pneg %p54
        %p264 = pneg %p51
        %s265 = sadd.s32 %s24, 1
        %p266 = scmp.lt.s32.totalorder %s23, 1
        %s267 = scalar_select %p266, %s23, 1
        %p268 = scmp.lt.s32.totalorder %s265, 9
        %s269 = scalar_select %p268, %s265, 9
        %s270 = smul.addr %s269, 54
        %s271 = smul.addr %s267, 540
        %s272 = sadd.s32 %s270, %s271
        %s273 = smul.addr %s272, 4
        %s274 = scalar_lea.vmem %s1, %s273
        %p275 = pneg %p84
        %p276 = pneg %p81
        %s277 = sadd.s32 %s24, 2
        %p278 = scmp.lt.s32.totalorder %s23, 1
        %s279 = scalar_select %p278, %s23, 1
        %p280 = scmp.lt.s32.totalorder %s277, 9
        %s281 = scalar_select %p280, %s277, 9
        %s282 = smul.addr %s281, 54
        %s283 = smul.addr %s279, 540
        %s284 = sadd.s32 %s282, %s283
        %s285 = smul.addr %s284, 4
        %s286 = scalar_lea.vmem %s2, %s285
        %p287 = pneg %p114
        %p288 = pneg %p111
        %p289 = pneg %p135
        %p290 = pneg %p132
        %p291 = pneg %p156
        %p292 = pneg %p153
        %p293 = pneg %p182
        %p294 = pneg %p179
        %s295 = sand.u32 %s169, 1
        %s296 = scalar_lea.sflag [#allocation4], %s295
        %s297 = sand.u32 %s169, 1
        %s298 = scalar_lea.vmem [#allocation3], %s297
        %p299 = scmp.lt.s32.totalorder %s23, 1
        %s300 = scalar_select %p299, %s23, 1
        %p301 = scmp.lt.s32.totalorder %s24, 9
        %s302 = scalar_select %p301, %s24, 9
        %s303 = smul.addr %s302, 54
        %s304 = smul.addr %s300, 540
        %s305 = sadd.s32 %s303, %s304
        %s306 = smul.addr %s305, 4
        %s307 = scalar_lea.vmem %s0, %s306
        %s308 = sadd.s32 %s24, 1
        %p309 = scmp.lt.s32.totalorder %s23, 1
        %s310 = scalar_select %p309, %s23, 1
        %p311 = scmp.lt.s32.totalorder %s308, 9
        %s312 = scalar_select %p311, %s308, 9
        %s313 = smul.addr %s312, 54
        %s314 = smul.addr %s310, 540
        %s315 = sadd.s32 %s313, %s314
        %s316 = smul.addr %s315, 4
        %s317 = scalar_lea.vmem %s1, %s316
        %s318 = sadd.s32 %s24, 1
        %s319 = sadd.s32 %s24, 2
        %p320 = scmp.lt.s32.totalorder %s23, 1
        %s321 = scalar_select %p320, %s23, 1
        %p322 = scmp.lt.s32.totalorder %s319, 9
        %s323 = scalar_select %p322, %s319, 9
        %s324 = smul.addr %s323, 54
        %s325 = smul.addr %s321, 540
        %s326 = sadd.s32 %s324, %s325
        %s327 = smul.addr %s326, 4
        %s328 = scalar_lea.vmem %s2, %s327
        %s329 = sadd.s32 %s24, 2
        %p331 = scmp.eq.s32.totalorder %s24, 0
        // Predicated region
        $region41: #{tpu_custom_call.1} parent=39 // pred_check
          %p332 = pneg %p331
        $region42: #{tpu_custom_call.1} parent=39 // pred_check_branch
          %334 = sbr.rel (%p332) target = $region44
        $region43: #{tpu_custom_call.1} parent=39 // pred_region
          %335 = vst [vmem:[%s298] sm:$0x1] 0.0
          %336 = vst [vmem:[#allocation2] sm:$0xff] 0
          %337 = vst [vmem:[#allocation2 + $0x8] sm:$0xff] 0
          %338 = vst [vmem:[#allocation2 + $0x10] sm:$0xff] 0
          %339 = vst [vmem:[#allocation2 + $0x18] sm:$0xff] 0
          %340 = vst [vmem:[#allocation2 + $0x20] sm:$0xff] 0
          %341 = vst [vmem:[#allocation2 + $0x28] sm:$0xff] 0
          %342 = vst [vmem:[#allocation2 + $0x30] sm:$0xff] 0
          %343 = vst [vmem:[#allocation2 + $0x38] sm:$0xff] 0
          %344 = vst [vmem:[#allocation2 + $0x40] sm:$0xff] 0
          %345 = vst [vmem:[#allocation2 + $0x48] sm:$0xff] 0
          %346 = vst [vmem:[#allocation2 + $0x50] sm:$0xff] 0
          %347 = vst [vmem:[#allocation2 + $0x58] sm:$0xff] 0
          %348 = vst [vmem:[#allocation2 + $0x60] sm:$0xff] 0
          %349 = vst [vmem:[#allocation2 + $0x68] sm:$0xff] 0
          %350 = vst [vmem:[#allocation2 + $0x70] sm:$0xff] 0
          %351 = vst [vmem:[#allocation2 + $0x78] sm:$0xff] 0
        $region44: #{tpu_custom_call.1} parent=39 // pred_fallthru
          _
        %v352 = vld [vmem:[%s307] sm:$0xf]
        %v353 = vld [vmem:[%s307 + $0x4] sm:$0xf]
        %v354 = vld [vmem:[%s307 + $0x8] sm:$0x1]
        %v355 = vld [vmem:[%s307 + $0xc] sm:$0xf]
        %v356 = vld [vmem:[%s307 + $0x10] sm:$0xf]
        %v357 = vld [vmem:[%s307 + $0x14] sm:$0x1]
        %v358 = vld [vmem:[%s307 + $0x18] sm:$0xf]
        %v359 = vld [vmem:[%s307 + $0x1c] sm:$0xf]
        %v360 = vld [vmem:[%s307 + $0x20] sm:$0x1]
        %v361 = vld [vmem:[%s307 + $0x24] sm:$0xf]
        %v362 = vld [vmem:[%s307 + $0x28] sm:$0xf]
        %v363 = vld [vmem:[%s307 + $0x2c] sm:$0x1]
        %v364 = vld [vmem:[%s307 + $0x30] sm:$0xf]
        %v365 = vld [vmem:[%s307 + $0x34] sm:$0xf]
        %v366 = vld [vmem:[%s307 + $0x38] sm:$0x1]
        %v367 = vld [vmem:[%s307 + $0x3c] sm:$0xf]
        %v368 = vld [vmem:[%s307 + $0x40] sm:$0xf]
        %v369 = vld [vmem:[%s307 + $0x44] sm:$0x1]
        %v370 = vld [vmem:[%s307 + $0x48] sm:$0xf]
        %v371 = vld [vmem:[%s307 + $0x4c] sm:$0xf]
        %v372 = vld [vmem:[%s307 + $0x50] sm:$0x1]
        %v373 = vld [vmem:[%s307 + $0x54] sm:$0xf]
        %v374 = vld [vmem:[%s307 + $0x58] sm:$0xf]
        %v375 = vld [vmem:[%s307 + $0x5c] sm:$0x1]
        %v376 = vld [vmem:[%s307 + $0x60] sm:$0xf]
        %v377 = vld [vmem:[%s307 + $0x64] sm:$0xf]
        %v378 = vld [vmem:[%s307 + $0x68] sm:$0x1]
        %v379 = vld [vmem:[%s307 + $0x6c] sm:$0xf]
        %v380 = vld [vmem:[%s307 + $0x70] sm:$0xf]
        %v381 = vld [vmem:[%s307 + $0x74] sm:$0x1]
        %v382 = vld [vmem:[%s307 + $0x78] sm:$0xf]
        %v383 = vld [vmem:[%s307 + $0x7c] sm:$0xf]
        %v384 = vld [vmem:[%s307 + $0x80] sm:$0x1]
        %v385 = vld [vmem:[%s307 + $0x84] sm:$0xf]
        %v386 = vld [vmem:[%s307 + $0x88] sm:$0xf]
        %v387 = vld [vmem:[%s307 + $0x8c] sm:$0x1]
        %v388 = vld [vmem:[%s307 + $0x90] sm:$0xf]
        %v389 = vld [vmem:[%s307 + $0x94] sm:$0xf]
        %v390 = vld [vmem:[%s307 + $0x98] sm:$0x1]
        %v391 = vld [vmem:[%s307 + $0x9c] sm:$0xf]
        %v392 = vld [vmem:[%s307 + $0xa0] sm:$0xf]
        %v393 = vld [vmem:[%s307 + $0xa4] sm:$0x1]
        %v394 = vld [vmem:[%s307 + $0xa8] sm:$0xf]
        %v395 = vld [vmem:[%s307 + $0xac] sm:$0xf]
        %v396 = vld [vmem:[%s307 + $0xb0] sm:$0x1]
        %v397 = vld [vmem:[%s307 + $0xb4] sm:$0xf]
        %v398 = vld [vmem:[%s307 + $0xb8] sm:$0xf]
        %v399 = vld [vmem:[%s307 + $0xbc] sm:$0x1]
        %v400 = vld [vmem:[%s307 + $0xc0] sm:$0xf]
        %v401 = vld [vmem:[%s307 + $0xc4] sm:$0xf]
        %v402 = vld [vmem:[%s307 + $0xc8] sm:$0x1]
        %v403 = vld [vmem:[%s307 + $0xcc] sm:$0xf]
        %v404 = vld [vmem:[%s307 + $0xd0] sm:$0xf]
        %v405 = vld [vmem:[%s307 + $0xd4] sm:$0x1]
        %v406 = vld [vmem:[%s317] sm:$0xf]
        %v407 = vld [vmem:[%s317 + $0x4] sm:$0xf]
        %v408 = vld [vmem:[%s317 + $0x8] sm:$0x1]
        %v409 = vld [vmem:[%s317 + $0xc] sm:$0xf]
        %v410 = vld [vmem:[%s317 + $0x10] sm:$0xf]
        %v411 = vld [vmem:[%s317 + $0x14] sm:$0x1]
        %v412 = vld [vmem:[%s317 + $0x18] sm:$0xf]
        %v413 = vld [vmem:[%s317 + $0x1c] sm:$0xf]
        %v414 = vld [vmem:[%s317 + $0x20] sm:$0x1]
        %v415 = vld [vmem:[%s317 + $0x24] sm:$0xf]
        %v416 = vld [vmem:[%s317 + $0x28] sm:$0xf]
        %v417 = vld [vmem:[%s317 + $0x2c] sm:$0x1]
        %v418 = vld [vmem:[%s317 + $0x30] sm:$0xf]
        %v419 = vld [vmem:[%s317 + $0x34] sm:$0xf]
        %v420 = vld [vmem:[%s317 + $0x38] sm:$0x1]
        %v421 = vld [vmem:[%s317 + $0x3c] sm:$0xf]
        %v422 = vld [vmem:[%s317 + $0x40] sm:$0xf]
        %v423 = vld [vmem:[%s317 + $0x44] sm:$0x1]
        %v424 = vld [vmem:[%s317 + $0x48] sm:$0xf]
        %v425 = vld [vmem:[%s317 + $0x4c] sm:$0xf]
        %v426 = vld [vmem:[%s317 + $0x50] sm:$0x1]
        %v427 = vld [vmem:[%s317 + $0x54] sm:$0xf]
        %v428 = vld [vmem:[%s317 + $0x58] sm:$0xf]
        %v429 = vld [vmem:[%s317 + $0x5c] sm:$0x1]
        %v430 = vld [vmem:[%s317 + $0x60] sm:$0xf]
        %v431 = vld [vmem:[%s317 + $0x64] sm:$0xf]
        %v432 = vld [vmem:[%s317 + $0x68] sm:$0x1]
        %v433 = vld [vmem:[%s317 + $0x6c] sm:$0xf]
        %v434 = vld [vmem:[%s317 + $0x70] sm:$0xf]
        %v435 = vld [vmem:[%s317 + $0x74] sm:$0x1]
        %v436 = vld [vmem:[%s317 + $0x78] sm:$0xf]
        %v437 = vld [vmem:[%s317 + $0x7c] sm:$0xf]
        %v438 = vld [vmem:[%s317 + $0x80] sm:$0x1]
        %v439 = vld [vmem:[%s317 + $0x84] sm:$0xf]
        %v440 = vld [vmem:[%s317 + $0x88] sm:$0xf]
        %v441 = vld [vmem:[%s317 + $0x8c] sm:$0x1]
        %v442 = vld [vmem:[%s317 + $0x90] sm:$0xf]
        %v443 = vld [vmem:[%s317 + $0x94] sm:$0xf]
        %v444 = vld [vmem:[%s317 + $0x98] sm:$0x1]
        %v445 = vld [vmem:[%s317 + $0x9c] sm:$0xf]
        %v446 = vld [vmem:[%s317 + $0xa0] sm:$0xf]
        %v447 = vld [vmem:[%s317 + $0xa4] sm:$0x1]
        %v448 = vld [vmem:[%s317 + $0xa8] sm:$0xf]
        %v449 = vld [vmem:[%s317 + $0xac] sm:$0xf]
        %v450 = vld [vmem:[%s317 + $0xb0] sm:$0x1]
        %v451 = vld [vmem:[%s317 + $0xb4] sm:$0xf]
        %v452 = vld [vmem:[%s317 + $0xb8] sm:$0xf]
        %v453 = vld [vmem:[%s317 + $0xbc] sm:$0x1]
        %v454 = vld [vmem:[%s317 + $0xc0] sm:$0xf]
        %v455 = vld [vmem:[%s317 + $0xc4] sm:$0xf]
        %v456 = vld [vmem:[%s317 + $0xc8] sm:$0x1]
        %v457 = vld [vmem:[%s317 + $0xcc] sm:$0xf]
        %v458 = vld [vmem:[%s317 + $0xd0] sm:$0xf]
        %v459 = vld [vmem:[%s317 + $0xd4] sm:$0x1]
        %v460 = vld [vmem:[%s328] sm:$0xf]
        %v461 = vld [vmem:[%s328 + $0x4] sm:$0xf]
        %v462 = vld [vmem:[%s328 + $0x8] sm:$0x1]
        %v463 = vld [vmem:[%s328 + $0xc] sm:$0xf]
        %v464 = vld [vmem:[%s328 + $0x10] sm:$0xf]
        %v465 = vld [vmem:[%s328 + $0x14] sm:$0x1]
        %v466 = vld [vmem:[%s328 + $0x18] sm:$0xf]
        %v467 = vld [vmem:[%s328 + $0x1c] sm:$0xf]
        %v468 = vld [vmem:[%s328 + $0x20] sm:$0x1]
        %v469 = vld [vmem:[%s328 + $0x24] sm:$0xf]
        %v470 = vld [vmem:[%s328 + $0x28] sm:$0xf]
        %v471 = vld [vmem:[%s328 + $0x2c] sm:$0x1]
        %v472 = vld [vmem:[%s328 + $0x30] sm:$0xf]
        %v473 = vld [vmem:[%s328 + $0x34] sm:$0xf]
        %v474 = vld [vmem:[%s328 + $0x38] sm:$0x1]
        %v475 = vld [vmem:[%s328 + $0x3c] sm:$0xf]
        %v476 = vld [vmem:[%s328 + $0x40] sm:$0xf]
        %v477 = vld [vmem:[%s328 + $0x44] sm:$0x1]
        %v478 = vld [vmem:[%s328 + $0x48] sm:$0xf]
        %v479 = vld [vmem:[%s328 + $0x4c] sm:$0xf]
        %v480 = vld [vmem:[%s328 + $0x50] sm:$0x1]
        %v481 = vld [vmem:[%s328 + $0x54] sm:$0xf]
        %v482 = vld [vmem:[%s328 + $0x58] sm:$0xf]
        %v483 = vld [vmem:[%s328 + $0x5c] sm:$0x1]
        %v484 = vld [vmem:[%s328 + $0x60] sm:$0xf]
        %v485 = vld [vmem:[%s328 + $0x64] sm:$0xf]
        %v486 = vld [vmem:[%s328 + $0x68] sm:$0x1]
        %v487 = vld [vmem:[%s328 + $0x6c] sm:$0xf]
        %v488 = vld [vmem:[%s328 + $0x70] sm:$0xf]
        %v489 = vld [vmem:[%s328 + $0x74] sm:$0x1]
        %v490 = vld [vmem:[%s328 + $0x78] sm:$0xf]
        %v491 = vld [vmem:[%s328 + $0x7c] sm:$0xf]
        %v492 = vld [vmem:[%s328 + $0x80] sm:$0x1]
        %v493 = vld [vmem:[%s328 + $0x84] sm:$0xf]
        %v494 = vld [vmem:[%s328 + $0x88] sm:$0xf]
        %v495 = vld [vmem:[%s328 + $0x8c] sm:$0x1]
        %v496 = vld [vmem:[%s328 + $0x90] sm:$0xf]
        %v497 = vld [vmem:[%s328 + $0x94] sm:$0xf]
        %v498 = vld [vmem:[%s328 + $0x98] sm:$0x1]
        %v499 = vld [vmem:[%s328 + $0x9c] sm:$0xf]
        %v500 = vld [vmem:[%s328 + $0xa0] sm:$0xf]
        %v501 = vld [vmem:[%s328 + $0xa4] sm:$0x1]
        %v502 = vld [vmem:[%s328 + $0xa8] sm:$0xf]
        %v503 = vld [vmem:[%s328 + $0xac] sm:$0xf]
        %v504 = vld [vmem:[%s328 + $0xb0] sm:$0x1]
        %v505 = vld [vmem:[%s328 + $0xb4] sm:$0xf]
        %v506 = vld [vmem:[%s328 + $0xb8] sm:$0xf]
        %v507 = vld [vmem:[%s328 + $0xbc] sm:$0x1]
        %v508 = vld [vmem:[%s328 + $0xc0] sm:$0xf]
        %v509 = vld [vmem:[%s328 + $0xc4] sm:$0xf]
        %v510 = vld [vmem:[%s328 + $0xc8] sm:$0x1]
        %v511 = vld [vmem:[%s328 + $0xcc] sm:$0xf]
        %v512 = vld [vmem:[%s328 + $0xd0] sm:$0xf]
        %v513 = vld [vmem:[%s328 + $0xd4] sm:$0x1]
        %v546 = vunpack.c.l.b16 %v352
        %v547 = vunpack.c.l.b16 %v353
        %v548 = vunpack.c.l.b16 %v355
        %v549 = vunpack.c.l.b16 %v356
        %v550 = vunpack.c.l.b16 %v358
        %v551 = vunpack.c.l.b16 %v359
        %v552 = vunpack.c.l.b16 %v361
        %v553 = vunpack.c.l.b16 %v362
        %v554 = vunpack.c.l.b16 %v364
        %v555 = vunpack.c.l.b16 %v365
        %v556 = vunpack.c.l.b16 %v367
        %v557 = vunpack.c.l.b16 %v368
        %v558 = vunpack.c.l.b16 %v370
        %v559 = vunpack.c.l.b16 %v371
        %v560 = vunpack.c.l.b16 %v373
        %v561 = vunpack.c.l.b16 %v374
        %v562 = vunpack.c.l.b16 %v376
        %v563 = vunpack.c.l.b16 %v377
        %v564 = vunpack.c.l.b16 %v379
        %v565 = vunpack.c.l.b16 %v380
        %v566 = vunpack.c.l.b16 %v382
        %v567 = vunpack.c.l.b16 %v383
        %v568 = vunpack.c.l.b16 %v385
        %v569 = vunpack.c.l.b16 %v386
        %v570 = vunpack.c.l.b16 %v388
        %v571 = vunpack.c.l.b16 %v389
        %v572 = vunpack.c.l.b16 %v391
        %v573 = vunpack.c.l.b16 %v392
        %v574 = vunpack.c.l.b16 %v394
        %v575 = vunpack.c.l.b16 %v395
        %v576 = vunpack.c.l.b16 %v397
        %v577 = vunpack.c.l.b16 %v398
        %v578 = vpack.c.b16 %v547, %v546
        %v579 = vpack.c.b16 %v549, %v548
        %v580 = vpack.c.b16 %v551, %v550
        %v581 = vpack.c.b16 %v553, %v552
        %v582 = vpack.c.b16 %v555, %v554
        %v583 = vpack.c.b16 %v557, %v556
        %v584 = vpack.c.b16 %v559, %v558
        %v585 = vpack.c.b16 %v561, %v560
        %v586 = vpack.c.b16 %v563, %v562
        %v587 = vpack.c.b16 %v565, %v564
        %v588 = vpack.c.b16 %v567, %v566
        %v589 = vpack.c.b16 %v569, %v568
        %v590 = vpack.c.b16 %v571, %v570
        %v591 = vpack.c.b16 %v573, %v572
        %v592 = vpack.c.b16 %v575, %v574
        %v593 = vpack.c.b16 %v577, %v576
        %vm610 = vcmask 31744
        %611 = vst.msk [vmem:[#allocation2] sm:$0xff] %vm610, %v578
        %612 = vst.msk [vmem:[#allocation2 + $0x8] sm:$0xff] %vm610, %v579
        %613 = vst.msk [vmem:[#allocation2 + $0x10] sm:$0xff] %vm610, %v580
        %614 = vst.msk [vmem:[#allocation2 + $0x18] sm:$0xff] %vm610, %v581
        %615 = vst.msk [vmem:[#allocation2 + $0x20] sm:$0xff] %vm610, %v582
        %616 = vst.msk [vmem:[#allocation2 + $0x28] sm:$0xff] %vm610, %v583
        %617 = vst.msk [vmem:[#allocation2 + $0x30] sm:$0xff] %vm610, %v584
        %618 = vst.msk [vmem:[#allocation2 + $0x38] sm:$0xff] %vm610, %v585
        %619 = vst.msk [vmem:[#allocation2 + $0x40] sm:$0xff] %vm610, %v586
        %620 = vst.msk [vmem:[#allocation2 + $0x48] sm:$0xff] %vm610, %v587
        %621 = vst.msk [vmem:[#allocation2 + $0x50] sm:$0xff] %vm610, %v588
        %622 = vst.msk [vmem:[#allocation2 + $0x58] sm:$0xff] %vm610, %v589
        %623 = vst.msk [vmem:[#allocation2 + $0x60] sm:$0xff] %vm610, %v590
        %624 = vst.msk [vmem:[#allocation2 + $0x68] sm:$0xff] %vm610, %v591
        %625 = vst.msk [vmem:[#allocation2 + $0x70] sm:$0xff] %vm610, %v592
        %626 = vst.msk [vmem:[#allocation2 + $0x78] sm:$0xff] %vm610, %v593
        %vm627 = vsmask.f32 3328
        %vm628 = vsmask.f32 7440
        %vm629 = vmor %vm627, %vm628
        %v631 = vshrl.u32 %v352, 16
        %v633 = vrot.slane %v631, 4
        %v634 = vshll.u32 %v352, 16
        %v636 = vrot.slane %v634, 5
        %v637 = vor.u32 %v633, %v636
        %v638 = vrot.slane %v637, 4
        %v640 = vshll.u32 %v353, 16
        %v642 = vrot.slane %v640, 5
        %v643 = vsel %vm629, %v638, %v642
        %v644 = vshrl.u32 %v353, 16
        %v646 = vrot.slane %v644, 4
        %v647 = vor.u32 %v646, %v642
        %v648 = vrot.slane %v647, 4
        %v650 = vshll.u32 %v354, 16
        %v652 = vrot.slane %v650, 5
        %v653 = vsel %vm629, %v648, %v652
        %v655 = vshrl.u32 %v355, 16
        %v657 = vrot.slane %v655, 4
        %v658 = vshll.u32 %v355, 16
        %v660 = vrot.slane %v658, 5
        %v661 = vor.u32 %v657, %v660
        %v662 = vrot.slane %v661, 4
        %v664 = vshll.u32 %v356, 16
        %v666 = vrot.slane %v664, 5
        %v667 = vsel %vm629, %v662, %v666
        %v668 = vshrl.u32 %v356, 16
        %v670 = vrot.slane %v668, 4
        %v671 = vor.u32 %v670, %v666
        %v672 = vrot.slane %v671, 4
        %v674 = vshll.u32 %v357, 16
        %v676 = vrot.slane %v674, 5
        %v677 = vsel %vm629, %v672, %v676
        %v679 = vshrl.u32 %v358, 16
        %v681 = vrot.slane %v679, 4
        %v682 = vshll.u32 %v358, 16
        %v684 = vrot.slane %v682, 5
        %v685 = vor.u32 %v681, %v684
        %v686 = vrot.slane %v685, 4
        %v688 = vshll.u32 %v359, 16
        %v690 = vrot.slane %v688, 5
        %v691 = vsel %vm629, %v686, %v690
        %v692 = vshrl.u32 %v359, 16
        %v694 = vrot.slane %v692, 4
        %v695 = vor.u32 %v694, %v690
        %v696 = vrot.slane %v695, 4
        %v698 = vshll.u32 %v360, 16
        %v700 = vrot.slane %v698, 5
        %v701 = vsel %vm629, %v696, %v700
        %v703 = vshrl.u32 %v361, 16
        %v705 = vrot.slane %v703, 4
        %v706 = vshll.u32 %v361, 16
        %v708 = vrot.slane %v706, 5
        %v709 = vor.u32 %v705, %v708
        %v710 = vrot.slane %v709, 4
        %v712 = vshll.u32 %v362, 16
        %v714 = vrot.slane %v712, 5
        %v715 = vsel %vm629, %v710, %v714
        %v716 = vshrl.u32 %v362, 16
        %v718 = vrot.slane %v716, 4
        %v719 = vor.u32 %v718, %v714
        %v720 = vrot.slane %v719, 4
        %v722 = vshll.u32 %v363, 16
        %v724 = vrot.slane %v722, 5
        %v725 = vsel %vm629, %v720, %v724
        %v727 = vshrl.u32 %v364, 16
        %v729 = vrot.slane %v727, 4
        %v730 = vshll.u32 %v364, 16
        %v732 = vrot.slane %v730, 5
        %v733 = vor.u32 %v729, %v732
        %v734 = vrot.slane %v733, 4
        %v736 = vshll.u32 %v365, 16
        %v738 = vrot.slane %v736, 5
        %v739 = vsel %vm629, %v734, %v738
        %v740 = vshrl.u32 %v365, 16
        %v742 = vrot.slane %v740, 4
        %v743 = vor.u32 %v742, %v738
        %v744 = vrot.slane %v743, 4
        %v746 = vshll.u32 %v366, 16
        %v748 = vrot.slane %v746, 5
        %v749 = vsel %vm629, %v744, %v748
        %v751 = vshrl.u32 %v367, 16
        %v753 = vrot.slane %v751, 4
        %v754 = vshll.u32 %v367, 16
        %v756 = vrot.slane %v754, 5
        %v757 = vor.u32 %v753, %v756
        %v758 = vrot.slane %v757, 4
        %v760 = vshll.u32 %v368, 16
        %v762 = vrot.slane %v760, 5
        %v763 = vsel %vm629, %v758, %v762
        %v764 = vshrl.u32 %v368, 16
        %v766 = vrot.slane %v764, 4
        %v767 = vor.u32 %v766, %v762
        %v768 = vrot.slane %v767, 4
        %v770 = vshll.u32 %v369, 16
        %v772 = vrot.slane %v770, 5
        %v773 = vsel %vm629, %v768, %v772
        %v775 = vshrl.u32 %v370, 16
        %v777 = vrot.slane %v775, 4
        %v778 = vshll.u32 %v370, 16
        %v780 = vrot.slane %v778, 5
        %v781 = vor.u32 %v777, %v780
        %v782 = vrot.slane %v781, 4
        %v784 = vshll.u32 %v371, 16
        %v786 = vrot.slane %v784, 5
        %v787 = vsel %vm629, %v782, %v786
        %v788 = vshrl.u32 %v371, 16
        %v790 = vrot.slane %v788, 4
        %v791 = vor.u32 %v790, %v786
        %v792 = vrot.slane %v791, 4
        %v794 = vshll.u32 %v372, 16
        %v796 = vrot.slane %v794, 5
        %v797 = vsel %vm629, %v792, %v796
        %v799 = vshrl.u32 %v373, 16
        %v801 = vrot.slane %v799, 4
        %v802 = vshll.u32 %v373, 16
        %v804 = vrot.slane %v802, 5
        %v805 = vor.u32 %v801, %v804
        %v806 = vrot.slane %v805, 4
        %v808 = vshll.u32 %v374, 16
        %v810 = vrot.slane %v808, 5
        %v811 = vsel %vm629, %v806, %v810
        %v812 = vshrl.u32 %v374, 16
        %v814 = vrot.slane %v812, 4
        %v815 = vor.u32 %v814, %v810
        %v816 = vrot.slane %v815, 4
        %v818 = vshll.u32 %v375, 16
        %v820 = vrot.slane %v818, 5
        %v821 = vsel %vm629, %v816, %v820
        %v823 = vshrl.u32 %v376, 16
        %v825 = vrot.slane %v823, 4
        %v826 = vshll.u32 %v376, 16
        %v828 = vrot.slane %v826, 5
        %v829 = vor.u32 %v825, %v828
        %v830 = vrot.slane %v829, 4
        %v832 = vshll.u32 %v377, 16
        %v834 = vrot.slane %v832, 5
        %v835 = vsel %vm629, %v830, %v834
        %v836 = vshrl.u32 %v377, 16
        %v838 = vrot.slane %v836, 4
        %v839 = vor.u32 %v838, %v834
        %v840 = vrot.slane %v839, 4
        %v842 = vshll.u32 %v378, 16
        %v844 = vrot.slane %v842, 5
        %v845 = vsel %vm629, %v840, %v844
        %v847 = vshrl.u32 %v379, 16
        %v849 = vrot.slane %v847, 4
        %v850 = vshll.u32 %v379, 16
        %v852 = vrot.slane %v850, 5
        %v853 = vor.u32 %v849, %v852
        %v854 = vrot.slane %v853, 4
        %v856 = vshll.u32 %v380, 16
        %v858 = vrot.slane %v856, 5
        %v859 = vsel %vm629, %v854, %v858
        %v860 = vshrl.u32 %v380, 16
        %v862 = vrot.slane %v860, 4
        %v863 = vor.u32 %v862, %v858
        %v864 = vrot.slane %v863, 4
        %v866 = vshll.u32 %v381, 16
        %v868 = vrot.slane %v866, 5
        %v869 = vsel %vm629, %v864, %v868
        %v871 = vshrl.u32 %v382, 16
        %v873 = vrot.slane %v871, 4
        %v874 = vshll.u32 %v382, 16
        %v876 = vrot.slane %v874, 5
        %v877 = vor.u32 %v873, %v876
        %v878 = vrot.slane %v877, 4
        %v880 = vshll.u32 %v383, 16
        %v882 = vrot.slane %v880, 5
        %v883 = vsel %vm629, %v878, %v882
        %v884 = vshrl.u32 %v383, 16
        %v886 = vrot.slane %v884, 4
        %v887 = vor.u32 %v886, %v882
        %v888 = vrot.slane %v887, 4
        %v890 = vshll.u32 %v384, 16
        %v892 = vrot.slane %v890, 5
        %v893 = vsel %vm629, %v888, %v892
        %v895 = vshrl.u32 %v385, 16
        %v897 = vrot.slane %v895, 4
        %v898 = vshll.u32 %v385, 16
        %v900 = vrot.slane %v898, 5
        %v901 = vor.u32 %v897, %v900
        %v902 = vrot.slane %v901, 4
        %v904 = vshll.u32 %v386, 16
        %v906 = vrot.slane %v904, 5
        %v907 = vsel %vm629, %v902, %v906
        %v908 = vshrl.u32 %v386, 16
        %v910 = vrot.slane %v908, 4
        %v911 = vor.u32 %v910, %v906
        %v912 = vrot.slane %v911, 4
        %v914 = vshll.u32 %v387, 16
        %v916 = vrot.slane %v914, 5
        %v917 = vsel %vm629, %v912, %v916
        %v919 = vshrl.u32 %v388, 16
        %v921 = vrot.slane %v919, 4
        %v922 = vshll.u32 %v388, 16
        %v924 = vrot.slane %v922, 5
        %v925 = vor.u32 %v921, %v924
        %v926 = vrot.slane %v925, 4
        %v928 = vshll.u32 %v389, 16
        %v930 = vrot.slane %v928, 5
        %v931 = vsel %vm629, %v926, %v930
        %v932 = vshrl.u32 %v389, 16
        %v934 = vrot.slane %v932, 4
        %v935 = vor.u32 %v934, %v930
        %v936 = vrot.slane %v935, 4
        %v938 = vshll.u32 %v390, 16
        %v940 = vrot.slane %v938, 5
        %v941 = vsel %vm629, %v936, %v940
        %v943 = vshrl.u32 %v391, 16
        %v945 = vrot.slane %v943, 4
        %v946 = vshll.u32 %v391, 16
        %v948 = vrot.slane %v946, 5
        %v949 = vor.u32 %v945, %v948
        %v950 = vrot.slane %v949, 4
        %v952 = vshll.u32 %v392, 16
        %v954 = vrot.slane %v952, 5
        %v955 = vsel %vm629, %v950, %v954
        %v956 = vshrl.u32 %v392, 16
        %v958 = vrot.slane %v956, 4
        %v959 = vor.u32 %v958, %v954
        %v960 = vrot.slane %v959, 4
        %v962 = vshll.u32 %v393, 16
        %v964 = vrot.slane %v962, 5
        %v965 = vsel %vm629, %v960, %v964
        %v967 = vshrl.u32 %v394, 16
        %v969 = vrot.slane %v967, 4
        %v970 = vshll.u32 %v394, 16
        %v972 = vrot.slane %v970, 5
        %v973 = vor.u32 %v969, %v972
        %v974 = vrot.slane %v973, 4
        %v976 = vshll.u32 %v395, 16
        %v978 = vrot.slane %v976, 5
        %v979 = vsel %vm629, %v974, %v978
        %v980 = vshrl.u32 %v395, 16
        %v982 = vrot.slane %v980, 4
        %v983 = vor.u32 %v982, %v978
        %v984 = vrot.slane %v983, 4
        %v986 = vshll.u32 %v396, 16
        %v988 = vrot.slane %v986, 5
        %v989 = vsel %vm629, %v984, %v988
        %v991 = vshrl.u32 %v397, 16
        %v993 = vrot.slane %v991, 4
        %v994 = vshll.u32 %v397, 16
        %v996 = vrot.slane %v994, 5
        %v997 = vor.u32 %v993, %v996
        %v998 = vrot.slane %v997, 4
        %v1000 = vshll.u32 %v398, 16
        %v1002 = vrot.slane %v1000, 5
        %v1003 = vsel %vm629, %v998, %v1002
        %v1004 = vshrl.u32 %v398, 16
        %v1006 = vrot.slane %v1004, 4
        %v1007 = vor.u32 %v1006, %v1002
        %v1008 = vrot.slane %v1007, 4
        %v1010 = vshll.u32 %v399, 16
        %v1012 = vrot.slane %v1010, 5
        %v1013 = vsel %vm629, %v1008, %v1012
        %v1014 = vunpack.c.l.b16 %v643
        %v1015 = vunpack.c.l.b16 %v653
        %v1016 = vunpack.c.l.b16 %v667
        %v1017 = vunpack.c.l.b16 %v677
        %v1018 = vunpack.c.l.b16 %v691
        %v1019 = vunpack.c.l.b16 %v701
        %v1020 = vunpack.c.l.b16 %v715
        %v1021 = vunpack.c.l.b16 %v725
        %v1022 = vunpack.c.l.b16 %v739
        %v1023 = vunpack.c.l.b16 %v749
        %v1024 = vunpack.c.l.b16 %v763
        %v1025 = vunpack.c.l.b16 %v773
        %v1026 = vunpack.c.l.b16 %v787
        %v1027 = vunpack.c.l.b16 %v797
        %v1028 = vunpack.c.l.b16 %v811
        %v1029 = vunpack.c.l.b16 %v821
        %v1030 = vunpack.c.l.b16 %v835
        %v1031 = vunpack.c.l.b16 %v845
        %v1032 = vunpack.c.l.b16 %v859
        %v1033 = vunpack.c.l.b16 %v869
        %v1034 = vunpack.c.l.b16 %v883
        %v1035 = vunpack.c.l.b16 %v893
        %v1036 = vunpack.c.l.b16 %v907
        %v1037 = vunpack.c.l.b16 %v917
        %v1038 = vunpack.c.l.b16 %v931
        %v1039 = vunpack.c.l.b16 %v941
        %v1040 = vunpack.c.l.b16 %v955
        %v1041 = vunpack.c.l.b16 %v965
        %v1042 = vunpack.c.l.b16 %v979
        %v1043 = vunpack.c.l.b16 %v989
        %v1044 = vunpack.c.l.b16 %v1003
        %v1045 = vunpack.c.l.b16 %v1013
        %v1046 = vpack.c.b16 %v1015, %v1014
        %v1047 = vpack.c.b16 %v1017, %v1016
        %v1048 = vpack.c.b16 %v1019, %v1018
        %v1049 = vpack.c.b16 %v1021, %v1020
        %v1050 = vpack.c.b16 %v1023, %v1022
        %v1051 = vpack.c.b16 %v1025, %v1024
        %v1052 = vpack.c.b16 %v1027, %v1026
        %v1053 = vpack.c.b16 %v1029, %v1028
        %v1054 = vpack.c.b16 %v1031, %v1030
        %v1055 = vpack.c.b16 %v1033, %v1032
        %v1056 = vpack.c.b16 %v1035, %v1034
        %v1057 = vpack.c.b16 %v1037, %v1036
        %v1058 = vpack.c.b16 %v1039, %v1038
        %v1059 = vpack.c.b16 %v1041, %v1040
        %v1060 = vpack.c.b16 %v1043, %v1042
        %v1061 = vpack.c.b16 %v1045, %v1044
        %1062 = vrot.lane.b32.xlu0 %v1046, 4
        %v1063 = vpop.permute.xlu0 %1062
        %1064 = vrot.lane.b32.xlu0 %v1047, 4
        %v1065 = vpop.permute.xlu0 %1064
        %1066 = vrot.lane.b32.xlu0 %v1048, 4
        %v1067 = vpop.permute.xlu0 %1066
        %1068 = vrot.lane.b32.xlu0 %v1049, 4
        %v1069 = vpop.permute.xlu0 %1068
        %1070 = vrot.lane.b32.xlu0 %v1050, 4
        %v1071 = vpop.permute.xlu0 %1070
        %1072 = vrot.lane.b32.xlu0 %v1051, 4
        %v1073 = vpop.permute.xlu0 %1072
        %1074 = vrot.lane.b32.xlu0 %v1052, 4
        %v1075 = vpop.permute.xlu0 %1074
        %1076 = vrot.lane.b32.xlu0 %v1053, 4
        %v1077 = vpop.permute.xlu0 %1076
        %1078 = vrot.lane.b32.xlu0 %v1054, 4
        %v1079 = vpop.permute.xlu0 %1078
        %1080 = vrot.lane.b32.xlu0 %v1055, 4
        %v1081 = vpop.permute.xlu0 %1080
        %1082 = vrot.lane.b32.xlu0 %v1056, 4
        %v1083 = vpop.permute.xlu0 %1082
        %1084 = vrot.lane.b32.xlu0 %v1057, 4
        %v1085 = vpop.permute.xlu0 %1084
        %1086 = vrot.lane.b32.xlu0 %v1058, 4
        %v1087 = vpop.permute.xlu0 %1086
        %1088 = vrot.lane.b32.xlu0 %v1059, 4
        %v1089 = vpop.permute.xlu0 %1088
        %1090 = vrot.lane.b32.xlu0 %v1060, 4
        %v1091 = vpop.permute.xlu0 %1090
        %1092 = vrot.lane.b32.xlu0 %v1061, 4
        %v1093 = vpop.permute.xlu0 %1092
        %vm1110 = vcmask 64544
        %1111 = vst.msk [vmem:[#allocation2] sm:$0xff] %vm1110, %v1063
        %1112 = vst.msk [vmem:[#allocation2 + $0x8] sm:$0xff] %vm1110, %v1065
        %1113 = vst.msk [vmem:[#allocation2 + $0x10] sm:$0xff] %vm1110, %v1067
        %1114 = vst.msk [vmem:[#allocation2 + $0x18] sm:$0xff] %vm1110, %v1069
        %1115 = vst.msk [vmem:[#allocation2 + $0x20] sm:$0xff] %vm1110, %v1071
        %1116 = vst.msk [vmem:[#allocation2 + $0x28] sm:$0xff] %vm1110, %v1073
        %1117 = vst.msk [vmem:[#allocation2 + $0x30] sm:$0xff] %vm1110, %v1075
        %1118 = vst.msk [vmem:[#allocation2 + $0x38] sm:$0xff] %vm1110, %v1077
        %1119 = vst.msk [vmem:[#allocation2 + $0x40] sm:$0xff] %vm1110, %v1079
        %1120 = vst.msk [vmem:[#allocation2 + $0x48] sm:$0xff] %vm1110, %v1081
        %1121 = vst.msk [vmem:[#allocation2 + $0x50] sm:$0xff] %vm1110, %v1083
        %1122 = vst.msk [vmem:[#allocation2 + $0x58] sm:$0xff] %vm1110, %v1085
        %1123 = vst.msk [vmem:[#allocation2 + $0x60] sm:$0xff] %vm1110, %v1087
        %1124 = vst.msk [vmem:[#allocation2 + $0x68] sm:$0xff] %vm1110, %v1089
        %1125 = vst.msk [vmem:[#allocation2 + $0x70] sm:$0xff] %vm1110, %v1091
        %1126 = vst.msk [vmem:[#allocation2 + $0x78] sm:$0xff] %vm1110, %v1093
        %vm1143 = vcmask 1042432
        %vm1144 = vcmask 1046532
        %vm1145 = vmor %vm1143, %vm1144
        %v1146 = vrot.slane %v352, 5
        %v1147 = vrot.slane %v1146, 4
        %v1148 = vrot.slane %v353, 5
        %v1149 = vsel %vm1145, %v1147, %v1148
        %v1150 = vrot.slane %v1148, 4
        %v1151 = vrot.slane %v354, 5
        %v1152 = vsel %vm1145, %v1150, %v1151
        %v1153 = vrot.slane %v355, 5
        %v1154 = vrot.slane %v1153, 4
        %v1155 = vrot.slane %v356, 5
        %v1156 = vsel %vm1145, %v1154, %v1155
        %v1157 = vrot.slane %v1155, 4
        %v1158 = vrot.slane %v357, 5
        %v1159 = vsel %vm1145, %v1157, %v1158
        %v1160 = vrot.slane %v358, 5
        %v1161 = vrot.slane %v1160, 4
        %v1162 = vrot.slane %v359, 5
        %v1163 = vsel %vm1145, %v1161, %v1162
        %v1164 = vrot.slane %v1162, 4
        %v1165 = vrot.slane %v360, 5
        %v1166 = vsel %vm1145, %v1164, %v1165
        %v1167 = vrot.slane %v361, 5
        %v1168 = vrot.slane %v1167, 4
        %v1169 = vrot.slane %v362, 5
        %v1170 = vsel %vm1145, %v1168, %v1169
        %v1171 = vrot.slane %v1169, 4
        %v1172 = vrot.slane %v363, 5
        %v1173 = vsel %vm1145, %v1171, %v1172
        %v1174 = vrot.slane %v364, 5
        %v1175 = vrot.slane %v1174, 4
        %v1176 = vrot.slane %v365, 5
        %v1177 = vsel %vm1145, %v1175, %v1176
        %v1178 = vrot.slane %v1176, 4
        %v1179 = vrot.slane %v366, 5
        %v1180 = vsel %vm1145, %v1178, %v1179
        %v1181 = vrot.slane %v367, 5
        %v1182 = vrot.slane %v1181, 4
        %v1183 = vrot.slane %v368, 5
        %v1184 = vsel %vm1145, %v1182, %v1183
        %v1185 = vrot.slane %v1183, 4
        %v1186 = vrot.slane %v369, 5
        %v1187 = vsel %vm1145, %v1185, %v1186
        %v1188 = vrot.slane %v370, 5
        %v1189 = vrot.slane %v1188, 4
        %v1190 = vrot.slane %v371, 5
        %v1191 = vsel %vm1145, %v1189, %v1190
        %v1192 = vrot.slane %v1190, 4
        %v1193 = vrot.slane %v372, 5
        %v1194 = vsel %vm1145, %v1192, %v1193
        %v1195 = vrot.slane %v373, 5
        %v1196 = vrot.slane %v1195, 4
        %v1197 = vrot.slane %v374, 5
        %v1198 = vsel %vm1145, %v1196, %v1197
        %v1199 = vrot.slane %v1197, 4
        %v1200 = vrot.slane %v375, 5
        %v1201 = vsel %vm1145, %v1199, %v1200
        %v1202 = vrot.slane %v376, 5
        %v1203 = vrot.slane %v1202, 4
        %v1204 = vrot.slane %v377, 5
        %v1205 = vsel %vm1145, %v1203, %v1204
        %v1206 = vrot.slane %v1204, 4
        %v1207 = vrot.slane %v378, 5
        %v1208 = vsel %vm1145, %v1206, %v1207
        %v1209 = vrot.slane %v379, 5
        %v1210 = vrot.slane %v1209, 4
        %v1211 = vrot.slane %v380, 5
        %v1212 = vsel %vm1145, %v1210, %v1211
        %v1213 = vrot.slane %v1211, 4
        %v1214 = vrot.slane %v381, 5
        %v1215 = vsel %vm1145, %v1213, %v1214
        %v1216 = vrot.slane %v382, 5
        %v1217 = vrot.slane %v1216, 4
        %v1218 = vrot.slane %v383, 5
        %v1219 = vsel %vm1145, %v1217, %v1218
        %v1220 = vrot.slane %v1218, 4
        %v1221 = vrot.slane %v384, 5
        %v1222 = vsel %vm1145, %v1220, %v1221
        %v1223 = vrot.slane %v385, 5
        %v1224 = vrot.slane %v1223, 4
        %v1225 = vrot.slane %v386, 5
        %v1226 = vsel %vm1145, %v1224, %v1225
        %v1227 = vrot.slane %v1225, 4
        %v1228 = vrot.slane %v387, 5
        %v1229 = vsel %vm1145, %v1227, %v1228
        %v1230 = vrot.slane %v388, 5
        %v1231 = vrot.slane %v1230, 4
        %v1232 = vrot.slane %v389, 5
        %v1233 = vsel %vm1145, %v1231, %v1232
        %v1234 = vrot.slane %v1232, 4
        %v1235 = vrot.slane %v390, 5
        %v1236 = vsel %vm1145, %v1234, %v1235
        %v1237 = vrot.slane %v391, 5
        %v1238 = vrot.slane %v1237, 4
        %v1239 = vrot.slane %v392, 5
        %v1240 = vsel %vm1145, %v1238, %v1239
        %v1241 = vrot.slane %v1239, 4
        %v1242 = vrot.slane %v393, 5
        %v1243 = vsel %vm1145, %v1241, %v1242
        %v1244 = vrot.slane %v394, 5
        %v1245 = vrot.slane %v1244, 4
        %v1246 = vrot.slane %v395, 5
        %v1247 = vsel %vm1145, %v1245, %v1246
        %v1248 = vrot.slane %v1246, 4
        %v1249 = vrot.slane %v396, 5
        %v1250 = vsel %vm1145, %v1248, %v1249
        %v1251 = vrot.slane %v397, 5
        %v1252 = vrot.slane %v1251, 4
        %v1253 = vrot.slane %v398, 5
        %v1254 = vsel %vm1145, %v1252, %v1253
        %v1255 = vrot.slane %v1253, 4
        %v1256 = vrot.slane %v399, 5
        %v1257 = vsel %vm1145, %v1255, %v1256
        %v1258 = vunpack.c.l.b16 %v1149
        %v1259 = vunpack.c.l.b16 %v1152
        %v1260 = vunpack.c.l.b16 %v1156
        %v1261 = vunpack.c.l.b16 %v1159
        %v1262 = vunpack.c.l.b16 %v1163
        %v1263 = vunpack.c.l.b16 %v1166
        %v1264 = vunpack.c.l.b16 %v1170
        %v1265 = vunpack.c.l.b16 %v1173
        %v1266 = vunpack.c.l.b16 %v1177
        %v1267 = vunpack.c.l.b16 %v1180
        %v1268 = vunpack.c.l.b16 %v1184
        %v1269 = vunpack.c.l.b16 %v1187
        %v1270 = vunpack.c.l.b16 %v1191
        %v1271 = vunpack.c.l.b16 %v1194
        %v1272 = vunpack.c.l.b16 %v1198
        %v1273 = vunpack.c.l.b16 %v1201
        %v1274 = vunpack.c.l.b16 %v1205
        %v1275 = vunpack.c.l.b16 %v1208
        %v1276 = vunpack.c.l.b16 %v1212
        %v1277 = vunpack.c.l.b16 %v1215
        %v1278 = vunpack.c.l.b16 %v1219
        %v1279 = vunpack.c.l.b16 %v1222
        %v1280 = vunpack.c.l.b16 %v1226
        %v1281 = vunpack.c.l.b16 %v1229
        %v1282 = vunpack.c.l.b16 %v1233
        %v1283 = vunpack.c.l.b16 %v1236
        %v1284 = vunpack.c.l.b16 %v1240
        %v1285 = vunpack.c.l.b16 %v1243
        %v1286 = vunpack.c.l.b16 %v1247
        %v1287 = vunpack.c.l.b16 %v1250
        %v1288 = vunpack.c.l.b16 %v1254
        %v1289 = vunpack.c.l.b16 %v1257
        %v1290 = vpack.c.b16 %v1259, %v1258
        %v1291 = vpack.c.b16 %v1261, %v1260
        %v1292 = vpack.c.b16 %v1263, %v1262
        %v1293 = vpack.c.b16 %v1265, %v1264
        %v1294 = vpack.c.b16 %v1267, %v1266
        %v1295 = vpack.c.b16 %v1269, %v1268
        %v1296 = vpack.c.b16 %v1271, %v1270
        %v1297 = vpack.c.b16 %v1273, %v1272
        %v1298 = vpack.c.b16 %v1275, %v1274
        %v1299 = vpack.c.b16 %v1277, %v1276
        %v1300 = vpack.c.b16 %v1279, %v1278
        %v1301 = vpack.c.b16 %v1281, %v1280
        %v1302 = vpack.c.b16 %v1283, %v1282
        %v1303 = vpack.c.b16 %v1285, %v1284
        %v1304 = vpack.c.b16 %v1287, %v1286
        %v1305 = vpack.c.b16 %v1289, %v1288
        %1306 = vrot.lane.b32.xlu0 %v1290, 8
        %v1307 = vpop.permute.xlu0 %1306
        %1308 = vrot.lane.b32.xlu0 %v1291, 8
        %v1309 = vpop.permute.xlu0 %1308
        %1310 = vrot.lane.b32.xlu0 %v1292, 8
        %v1311 = vpop.permute.xlu0 %1310
        %1312 = vrot.lane.b32.xlu0 %v1293, 8
        %v1313 = vpop.permute.xlu0 %1312
        %1314 = vrot.lane.b32.xlu0 %v1294, 8
        %v1315 = vpop.permute.xlu0 %1314
        %1316 = vrot.lane.b32.xlu0 %v1295, 8
        %v1317 = vpop.permute.xlu0 %1316
        %1318 = vrot.lane.b32.xlu0 %v1296, 8
        %v1319 = vpop.permute.xlu0 %1318
        %1320 = vrot.lane.b32.xlu0 %v1297, 8
        %v1321 = vpop.permute.xlu0 %1320
        %1322 = vrot.lane.b32.xlu0 %v1298, 8
        %v1323 = vpop.permute.xlu0 %1322
        %1324 = vrot.lane.b32.xlu0 %v1299, 8
        %v1325 = vpop.permute.xlu0 %1324
        %1326 = vrot.lane.b32.xlu0 %v1300, 8
        %v1327 = vpop.permute.xlu0 %1326
        %1328 = vrot.lane.b32.xlu0 %v1301, 8
        %v1329 = vpop.permute.xlu0 %1328
        %1330 = vrot.lane.b32.xlu0 %v1302, 8
        %v1331 = vpop.permute.xlu0 %1330
        %1332 = vrot.lane.b32.xlu0 %v1303, 8
        %v1333 = vpop.permute.xlu0 %1332
        %1334 = vrot.lane.b32.xlu0 %v1304, 8
        %v1335 = vpop.permute.xlu0 %1334
        %1336 = vrot.lane.b32.xlu0 %v1305, 8
        %v1337 = vpop.permute.xlu0 %1336
        %vm1354 = vcmask 97344
        %1355 = vst.msk [vmem:[#allocation2] sm:$0xff] %vm1354, %v1307
        %1356 = vst.msk [vmem:[#allocation2 + $0x8] sm:$0xff] %vm1354, %v1309
        %1357 = vst.msk [vmem:[#allocation2 + $0x10] sm:$0xff] %vm1354, %v1311
        %1358 = vst.msk [vmem:[#allocation2 + $0x18] sm:$0xff] %vm1354, %v1313
        %1359 = vst.msk [vmem:[#allocation2 + $0x20] sm:$0xff] %vm1354, %v1315
        %1360 = vst.msk [vmem:[#allocation2 + $0x28] sm:$0xff] %vm1354, %v1317
        %1361 = vst.msk [vmem:[#allocation2 + $0x30] sm:$0xff] %vm1354, %v1319
        %1362 = vst.msk [vmem:[#allocation2 + $0x38] sm:$0xff] %vm1354, %v1321
        %1363 = vst.msk [vmem:[#allocation2 + $0x40] sm:$0xff] %vm1354, %v1323
        %1364 = vst.msk [vmem:[#allocation2 + $0x48] sm:$0xff] %vm1354, %v1325
        %1365 = vst.msk [vmem:[#allocation2 + $0x50] sm:$0xff] %vm1354, %v1327
        %1366 = vst.msk [vmem:[#allocation2 + $0x58] sm:$0xff] %vm1354, %v1329
        %1367 = vst.msk [vmem:[#allocation2 + $0x60] sm:$0xff] %vm1354, %v1331
        %1368 = vst.msk [vmem:[#allocation2 + $0x68] sm:$0xff] %vm1354, %v1333
        %1369 = vst.msk [vmem:[#allocation2 + $0x70] sm:$0xff] %vm1354, %v1335
        %1370 = vst.msk [vmem:[#allocation2 + $0x78] sm:$0xff] %vm1354, %v1337
        %v1373 = vunpack.c.l.b16 %v400
        %v1374 = vunpack.c.l.b16 %v401
        %v1375 = vpack.c.b16 %v1374, %v1373
        %1376 = vrot.lane.b32.xlu0 %v579, 12
        %v1377 = vpop.permute.xlu0 %1376
        %1378 = vrot.lane.b32.xlu0 %v580, 12
        %v1379 = vpop.permute.xlu0 %1378
        %1380 = vrot.lane.b32.xlu0 %v581, 12
        %v1381 = vpop.permute.xlu0 %1380
        %1382 = vrot.lane.b32.xlu0 %v582, 12
        %v1383 = vpop.permute.xlu0 %1382
        %1384 = vrot.lane.b32.xlu0 %v583, 12
        %v1385 = vpop.permute.xlu0 %1384
        %1386 = vrot.lane.b32.xlu0 %v584, 12
        %v1387 = vpop.permute.xlu0 %1386
        %1388 = vrot.lane.b32.xlu0 %v585, 12
        %v1389 = vpop.permute.xlu0 %1388
        %1390 = vrot.lane.b32.xlu0 %v586, 12
        %v1391 = vpop.permute.xlu0 %1390
        %1392 = vrot.lane.b32.xlu0 %v587, 12
        %v1393 = vpop.permute.xlu0 %1392
        %1394 = vrot.lane.b32.xlu0 %v588, 12
        %v1395 = vpop.permute.xlu0 %1394
        %1396 = vrot.lane.b32.xlu0 %v589, 12
        %v1397 = vpop.permute.xlu0 %1396
        %1398 = vrot.lane.b32.xlu0 %v590, 12
        %v1399 = vpop.permute.xlu0 %1398
        %1400 = vrot.lane.b32.xlu0 %v591, 12
        %v1401 = vpop.permute.xlu0 %1400
        %1402 = vrot.lane.b32.xlu0 %v592, 12
        %v1403 = vpop.permute.xlu0 %1402
        %1404 = vrot.lane.b32.xlu0 %v593, 12
        %v1405 = vpop.permute.xlu0 %1404
        %1406 = vrot.lane.b32.xlu0 %v1375, 12
        %v1407 = vpop.permute.xlu0 %1406
        %vm1424 = vcmask 130144
        %1425 = vst.msk [vmem:[#allocation2] sm:$0xff] %vm1424, %v1377
        %1426 = vst.msk [vmem:[#allocation2 + $0x8] sm:$0xff] %vm1424, %v1379
        %1427 = vst.msk [vmem:[#allocation2 + $0x10] sm:$0xff] %vm1424, %v1381
        %1428 = vst.msk [vmem:[#allocation2 + $0x18] sm:$0xff] %vm1424, %v1383
        %1429 = vst.msk [vmem:[#allocation2 + $0x20] sm:$0xff] %vm1424, %v1385
        %1430 = vst.msk [vmem:[#allocation2 + $0x28] sm:$0xff] %vm1424, %v1387
        %1431 = vst.msk [vmem:[#allocation2 + $0x30] sm:$0xff] %vm1424, %v1389
        %1432 = vst.msk [vmem:[#allocation2 + $0x38] sm:$0xff] %vm1424, %v1391
        %1433 = vst.msk [vmem:[#allocation2 + $0x40] sm:$0xff] %vm1424, %v1393
        %1434 = vst.msk [vmem:[#allocation2 + $0x48] sm:$0xff] %vm1424, %v1395
        %1435 = vst.msk [vmem:[#allocation2 + $0x50] sm:$0xff] %vm1424, %v1397
        %1436 = vst.msk [vmem:[#allocation2 + $0x58] sm:$0xff] %vm1424, %v1399
        %1437 = vst.msk [vmem:[#allocation2 + $0x60] sm:$0xff] %vm1424, %v1401
        %1438 = vst.msk [vmem:[#allocation2 + $0x68] sm:$0xff] %vm1424, %v1403
        %1439 = vst.msk [vmem:[#allocation2 + $0x70] sm:$0xff] %vm1424, %v1405
        %1440 = vst.msk [vmem:[#allocation2 + $0x78] sm:$0xff] %vm1424, %v1407
        %v1442 = vshrl.u32 %v400, 16
        %v1444 = vrot.slane %v1442, 4
        %v1445 = vshll.u32 %v400, 16
        %v1447 = vrot.slane %v1445, 5
        %v1448 = vor.u32 %v1444, %v1447
        %v1449 = vrot.slane %v1448, 4
        %v1451 = vshll.u32 %v401, 16
        %v1453 = vrot.slane %v1451, 5
        %v1454 = vsel %vm629, %v1449, %v1453
        %v1455 = vshrl.u32 %v401, 16
        %v1457 = vrot.slane %v1455, 4
        %v1458 = vor.u32 %v1457, %v1453
        %v1459 = vrot.slane %v1458, 4
        %v1461 = vshll.u32 %v402, 16
        %v1463 = vrot.slane %v1461, 5
        %v1464 = vsel %vm629, %v1459, %v1463
        %v1465 = vunpack.c.l.b16 %v1454
        %v1466 = vunpack.c.l.b16 %v1464
        %v1467 = vpack.c.b16 %v1466, %v1465
        %1468 = vrot.lane.b32.xlu0 %v1047, 16
        %v1469 = vpop.permute.xlu0 %1468
        %1470 = vrot.lane.b32.xlu0 %v1048, 16
        %v1471 = vpop.permute.xlu0 %1470
        %1472 = vrot.lane.b32.xlu0 %v1049, 16
        %v1473 = vpop.permute.xlu0 %1472
        %1474 = vrot.lane.b32.xlu0 %v1050, 16
        %v1475 = vpop.permute.xlu0 %1474
        %1476 = vrot.lane.b32.xlu0 %v1051, 16
        %v1477 = vpop.permute.xlu0 %1476
        %1478 = vrot.lane.b32.xlu0 %v1052, 16
        %v1479 = vpop.permute.xlu0 %1478
        %1480 = vrot.lane.b32.xlu0 %v1053, 16
        %v1481 = vpop.permute.xlu0 %1480
        %1482 = vrot.lane.b32.xlu0 %v1054, 16
        %v1483 = vpop.permute.xlu0 %1482
        %1484 = vrot.lane.b32.xlu0 %v1055, 16
        %v1485 = vpop.permute.xlu0 %1484
        %1486 = vrot.lane.b32.xlu0 %v1056, 16
        %v1487 = vpop.permute.xlu0 %1486
        %1488 = vrot.lane.b32.xlu0 %v1057, 16
        %v1489 = vpop.permute.xlu0 %1488
        %1490 = vrot.lane.b32.xlu0 %v1058, 16
        %v1491 = vpop.permute.xlu0 %1490
        %1492 = vrot.lane.b32.xlu0 %v1059, 16
        %v1493 = vpop.permute.xlu0 %1492
        %1494 = vrot.lane.b32.xlu0 %v1060, 16
        %v1495 = vpop.permute.xlu0 %1494
        %1496 = vrot.lane.b32.xlu0 %v1061, 16
        %v1497 = vpop.permute.xlu0 %1496
        %1498 = vrot.lane.b32.xlu0 %v1467, 16
        %v1499 = vpop.permute.xlu0 %1498
        %vm1516 = vcmask 162944
        %1517 = vst.msk [vmem:[#allocation2] sm:$0xff] %vm1516, %v1469
        %1518 = vst.msk [vmem:[#allocation2 + $0x8] sm:$0xff] %vm1516, %v1471
        %1519 = vst.msk [vmem:[#allocation2 + $0x10] sm:$0xff] %vm1516, %v1473
        %1520 = vst.msk [vmem:[#allocation2 + $0x18] sm:$0xff] %vm1516, %v1475
        %1521 = vst.msk [vmem:[#allocation2 + $0x20] sm:$0xff] %vm1516, %v1477
        %1522 = vst.msk [vmem:[#allocation2 + $0x28] sm:$0xff] %vm1516, %v1479
        %1523 = vst.msk [vmem:[#allocation2 + $0x30] sm:$0xff] %vm1516, %v1481
        %1524 = vst.msk [vmem:[#allocation2 + $0x38] sm:$0xff] %vm1516, %v1483
        %1525 = vst.msk [vmem:[#allocation2 + $0x40] sm:$0xff] %vm1516, %v1485
        %1526 = vst.msk [vmem:[#allocation2 + $0x48] sm:$0xff] %vm1516, %v1487
        %1527 = vst.msk [vmem:[#allocation2 + $0x50] sm:$0xff] %vm1516, %v1489
        %1528 = vst.msk [vmem:[#allocation2 + $0x58] sm:$0xff] %vm1516, %v1491
        %1529 = vst.msk [vmem:[#allocation2 + $0x60] sm:$0xff] %vm1516, %v1493
        %1530 = vst.msk [vmem:[#allocation2 + $0x68] sm:$0xff] %vm1516, %v1495
        %1531 = vst.msk [vmem:[#allocation2 + $0x70] sm:$0xff] %vm1516, %v1497
        %1532 = vst.msk [vmem:[#allocation2 + $0x78] sm:$0xff] %vm1516, %v1499
        %v1534 = vrot.slane %v400, 5
        %v1535 = vrot.slane %v1534, 4
        %v1536 = vrot.slane %v401, 5
        %v1537 = vsel %vm1145, %v1535, %v1536
        %v1538 = vrot.slane %v1536, 4
        %v1539 = vrot.slane %v402, 5
        %v1540 = vsel %vm1145, %v1538, %v1539
        %v1541 = vunpack.c.l.b16 %v1537
        %v1542 = vunpack.c.l.b16 %v1540
        %v1543 = vpack.c.b16 %v1542, %v1541
        %1544 = vrot.lane.b32.xlu0 %v1291, 20
        %v1545 = vpop.permute.xlu0 %1544
        %1546 = vrot.lane.b32.xlu0 %v1292, 20
        %v1547 = vpop.permute.xlu0 %1546
        %1548 = vrot.lane.b32.xlu0 %v1293, 20
        %v1549 = vpop.permute.xlu0 %1548
        %1550 = vrot.lane.b32.xlu0 %v1294, 20
        %v1551 = vpop.permute.xlu0 %1550
        %1552 = vrot.lane.b32.xlu0 %v1295, 20
        %v1553 = vpop.permute.xlu0 %1552
        %1554 = vrot.lane.b32.xlu0 %v1296, 20
        %v1555 = vpop.permute.xlu0 %1554
        %1556 = vrot.lane.b32.xlu0 %v1297, 20
        %v1557 = vpop.permute.xlu0 %1556
        %1558 = vrot.lane.b32.xlu0 %v1298, 20
        %v1559 = vpop.permute.xlu0 %1558
        %1560 = vrot.lane.b32.xlu0 %v1299, 20
        %v1561 = vpop.permute.xlu0 %1560
        %1562 = vrot.lane.b32.xlu0 %v1300, 20
        %v1563 = vpop.permute.xlu0 %1562
        %1564 = vrot.lane.b32.xlu0 %v1301, 20
        %v1565 = vpop.permute.xlu0 %1564
        %1566 = vrot.lane.b32.xlu0 %v1302, 20
        %v1567 = vpop.permute.xlu0 %1566
        %1568 = vrot.lane.b32.xlu0 %v1303, 20
        %v1569 = vpop.permute.xlu0 %1568
        %1570 = vrot.lane.b32.xlu0 %v1304, 20
        %v1571 = vpop.permute.xlu0 %1570
        %1572 = vrot.lane.b32.xlu0 %v1305, 20
        %v1573 = vpop.permute.xlu0 %1572
        %1574 = vrot.lane.b32.xlu0 %v1543, 20
        %v1575 = vpop.permute.xlu0 %1574
        %vm1592 = vcmask 195744
        %1593 = vst.msk [vmem:[#allocation2] sm:$0xff] %vm1592, %v1545
        %1594 = vst.msk [vmem:[#allocation2 + $0x8] sm:$0xff] %vm1592, %v1547
        %1595 = vst.msk [vmem:[#allocation2 + $0x10] sm:$0xff] %vm1592, %v1549
        %1596 = vst.msk [vmem:[#allocation2 + $0x18] sm:$0xff] %vm1592, %v1551
        %1597 = vst.msk [vmem:[#allocation2 + $0x20] sm:$0xff] %vm1592, %v1553
        %1598 = vst.msk [vmem:[#allocation2 + $0x28] sm:$0xff] %vm1592, %v1555
        %1599 = vst.msk [vmem:[#allocation2 + $0x30] sm:$0xff] %vm1592, %v1557
        %1600 = vst.msk [vmem:[#allocation2 + $0x38] sm:$0xff] %vm1592, %v1559
        %1601 = vst.msk [vmem:[#allocation2 + $0x40] sm:$0xff] %vm1592, %v1561
        %1602 = vst.msk [vmem:[#allocation2 + $0x48] sm:$0xff] %vm1592, %v1563
        %1603 = vst.msk [vmem:[#allocation2 + $0x50] sm:$0xff] %vm1592, %v1565
        %1604 = vst.msk [vmem:[#allocation2 + $0x58] sm:$0xff] %vm1592, %v1567
        %1605 = vst.msk [vmem:[#allocation2 + $0x60] sm:$0xff] %vm1592, %v1569
        %1606 = vst.msk [vmem:[#allocation2 + $0x68] sm:$0xff] %vm1592, %v1571
        %1607 = vst.msk [vmem:[#allocation2 + $0x70] sm:$0xff] %vm1592, %v1573
        %1608 = vst.msk [vmem:[#allocation2 + $0x78] sm:$0xff] %vm1592, %v1575
        %v1611 = vunpack.c.l.b16 %v403
        %v1612 = vunpack.c.l.b16 %v404
        %v1613 = vpack.c.b16 %v1612, %v1611
        %1614 = vrot.lane.b32.xlu0 %v580, 24
        %v1615 = vpop.permute.xlu0 %1614
        %1616 = vrot.lane.b32.xlu0 %v581, 24
        %v1617 = vpop.permute.xlu0 %1616
        %1618 = vrot.lane.b32.xlu0 %v582, 24
        %v1619 = vpop.permute.xlu0 %1618
        %1620 = vrot.lane.b32.xlu0 %v583, 24
        %v1621 = vpop.permute.xlu0 %1620
        %1622 = vrot.lane.b32.xlu0 %v584, 24
        %v1623 = vpop.permute.xlu0 %1622
        %1624 = vrot.lane.b32.xlu0 %v585, 24
        %v1625 = vpop.permute.xlu0 %1624
        %1626 = vrot.lane.b32.xlu0 %v586, 24
        %v1627 = vpop.permute.xlu0 %1626
        %1628 = vrot.lane.b32.xlu0 %v587, 24
        %v1629 = vpop.permute.xlu0 %1628
        %1630 = vrot.lane.b32.xlu0 %v588, 24
        %v1631 = vpop.permute.xlu0 %1630
        %1632 = vrot.lane.b32.xlu0 %v589, 24
        %v1633 = vpop.permute.xlu0 %1632
        %1634 = vrot.lane.b32.xlu0 %v590, 24
        %v1635 = vpop.permute.xlu0 %1634
        %1636 = vrot.lane.b32.xlu0 %v591, 24
        %v1637 = vpop.permute.xlu0 %1636
        %1638 = vrot.lane.b32.xlu0 %v592, 24
        %v1639 = vpop.permute.xlu0 %1638
        %1640 = vrot.lane.b32.xlu0 %v593, 24
        %v1641 = vpop.permute.xlu0 %1640
        %1642 = vrot.lane.b32.xlu0 %v1375, 24
        %v1643 = vpop.permute.xlu0 %1642
        %1644 = vrot.lane.b32.xlu0 %v1613, 24
        %v1645 = vpop.permute.xlu0 %1644
        %vm1662 = vcmask 228544
        %1663 = vst.msk [vmem:[#allocation2] sm:$0xff] %vm1662, %v1615
        %1664 = vst.msk [vmem:[#allocation2 + $0x8] sm:$0xff] %vm1662, %v1617
        %1665 = vst.msk [vmem:[#allocation2 + $0x10] sm:$0xff] %vm1662, %v1619
        %1666 = vst.msk [vmem:[#allocation2 + $0x18] sm:$0xff] %vm1662, %v1621
        %1667 = vst.msk [vmem:[#allocation2 + $0x20] sm:$0xff] %vm1662, %v1623
        %1668 = vst.msk [vmem:[#allocation2 + $0x28] sm:$0xff] %vm1662, %v1625
        %1669 = vst.msk [vmem:[#allocation2 + $0x30] sm:$0xff] %vm1662, %v1627
        %1670 = vst.msk [vmem:[#allocation2 + $0x38] sm:$0xff] %vm1662, %v1629
        %1671 = vst.msk [vmem:[#allocation2 + $0x40] sm:$0xff] %vm1662, %v1631
        %1672 = vst.msk [vmem:[#allocation2 + $0x48] sm:$0xff] %vm1662, %v1633
        %1673 = vst.msk [vmem:[#allocation2 + $0x50] sm:$0xff] %vm1662, %v1635
        %1674 = vst.msk [vmem:[#allocation2 + $0x58] sm:$0xff] %vm1662, %v1637
        %1675 = vst.msk [vmem:[#allocation2 + $0x60] sm:$0xff] %vm1662, %v1639
        %1676 = vst.msk [vmem:[#allocation2 + $0x68] sm:$0xff] %vm1662, %v1641
        %1677 = vst.msk [vmem:[#allocation2 + $0x70] sm:$0xff] %vm1662, %v1643
        %1678 = vst.msk [vmem:[#allocation2 + $0x78] sm:$0xff] %vm1662, %v1645
        %v1680 = vshrl.u32 %v403, 16
        %v1682 = vrot.slane %v1680, 4
        %v1683 = vshll.u32 %v403, 16
        %v1685 = vrot.slane %v1683, 5
        %v1686 = vor.u32 %v1682, %v1685
        %v1687 = vrot.slane %v1686, 4
        %v1689 = vshll.u32 %v404, 16
        %v1691 = vrot.slane %v1689, 5
        %v1692 = vsel %vm629, %v1687, %v1691
        %v1693 = vshrl.u32 %v404, 16
        %v1695 = vrot.slane %v1693, 4
        %v1696 = vor.u32 %v1695, %v1691
        %v1697 = vrot.slane %v1696, 4
        %v1699 = vshll.u32 %v405, 16
        %v1701 = vrot.slane %v1699, 5
        %v1702 = vsel %vm629, %v1697, %v1701
        %v1703 = vunpack.c.l.b16 %v1692
        %v1704 = vunpack.c.l.b16 %v1702
        %v1705 = vpack.c.b16 %v1704, %v1703
        %1706 = vrot.lane.b32.xlu0 %v1048, 28
        %v1707 = vpop.permute.xlu0 %1706
        %1708 = vrot.lane.b32.xlu0 %v1049, 28
        %v1709 = vpop.permute.xlu0 %1708
        %1710 = vrot.lane.b32.xlu0 %v1050, 28
        %v1711 = vpop.permute.xlu0 %1710
        %1712 = vrot.lane.b32.xlu0 %v1051, 28
        %v1713 = vpop.permute.xlu0 %1712
        %1714 = vrot.lane.b32.xlu0 %v1052, 28
        %v1715 = vpop.permute.xlu0 %1714
        %1716 = vrot.lane.b32.xlu0 %v1053, 28
        %v1717 = vpop.permute.xlu0 %1716
        %1718 = vrot.lane.b32.xlu0 %v1054, 28
        %v1719 = vpop.permute.xlu0 %1718
        %1720 = vrot.lane.b32.xlu0 %v1055, 28
        %v1721 = vpop.permute.xlu0 %1720
        %1722 = vrot.lane.b32.xlu0 %v1056, 28
        %v1723 = vpop.permute.xlu0 %1722
        %1724 = vrot.lane.b32.xlu0 %v1057, 28
        %v1725 = vpop.permute.xlu0 %1724
        %1726 = vrot.lane.b32.xlu0 %v1058, 28
        %v1727 = vpop.permute.xlu0 %1726
        %1728 = vrot.lane.b32.xlu0 %v1059, 28
        %v1729 = vpop.permute.xlu0 %1728
        %1730 = vrot.lane.b32.xlu0 %v1060, 28
        %v1731 = vpop.permute.xlu0 %1730
        %1732 = vrot.lane.b32.xlu0 %v1061, 28
        %v1733 = vpop.permute.xlu0 %1732
        %1734 = vrot.lane.b32.xlu0 %v1467, 28
        %v1735 = vpop.permute.xlu0 %1734
        %1736 = vrot.lane.b32.xlu0 %v1705, 28
        %v1737 = vpop.permute.xlu0 %1736
        %vm1754 = vcmask 261344
        %1755 = vst.msk [vmem:[#allocation2] sm:$0xff] %vm1754, %v1707
        %1756 = vst.msk [vmem:[#allocation2 + $0x8] sm:$0xff] %vm1754, %v1709
        %1757 = vst.msk [vmem:[#allocation2 + $0x10] sm:$0xff] %vm1754, %v1711
        %1758 = vst.msk [vmem:[#allocation2 + $0x18] sm:$0xff] %vm1754, %v1713
        %1759 = vst.msk [vmem:[#allocation2 + $0x20] sm:$0xff] %vm1754, %v1715
        %1760 = vst.msk [vmem:[#allocation2 + $0x28] sm:$0xff] %vm1754, %v1717
        %1761 = vst.msk [vmem:[#allocation2 + $0x30] sm:$0xff] %vm1754, %v1719
        %1762 = vst.msk [vmem:[#allocation2 + $0x38] sm:$0xff] %vm1754, %v1721
        %1763 = vst.msk [vmem:[#allocation2 + $0x40] sm:$0xff] %vm1754, %v1723
        %1764 = vst.msk [vmem:[#allocation2 + $0x48] sm:$0xff] %vm1754, %v1725
        %1765 = vst.msk [vmem:[#allocation2 + $0x50] sm:$0xff] %vm1754, %v1727
        %1766 = vst.msk [vmem:[#allocation2 + $0x58] sm:$0xff] %vm1754, %v1729
        %1767 = vst.msk [vmem:[#allocation2 + $0x60] sm:$0xff] %vm1754, %v1731
        %1768 = vst.msk [vmem:[#allocation2 + $0x68] sm:$0xff] %vm1754, %v1733
        %1769 = vst.msk [vmem:[#allocation2 + $0x70] sm:$0xff] %vm1754, %v1735
        %1770 = vst.msk [vmem:[#allocation2 + $0x78] sm:$0xff] %vm1754, %v1737
        %v1772 = vrot.slane %v403, 5
        %v1773 = vrot.slane %v1772, 4
        %v1774 = vrot.slane %v404, 5
        %v1775 = vsel %vm1145, %v1773, %v1774
        %v1776 = vrot.slane %v1774, 4
        %v1777 = vrot.slane %v405, 5
        %v1778 = vsel %vm1145, %v1776, %v1777
        %v1779 = vunpack.c.l.b16 %v1775
        %v1780 = vunpack.c.l.b16 %v1778
        %v1781 = vpack.c.b16 %v1780, %v1779
        %1782 = vrot.lane.b32.xlu0 %v1292, 32
        %v1783 = vpop.permute.xlu0 %1782
        %1784 = vrot.lane.b32.xlu0 %v1293, 32
        %v1785 = vpop.permute.xlu0 %1784
        %1786 = vrot.lane.b32.xlu0 %v1294, 32
        %v1787 = vpop.permute.xlu0 %1786
        %1788 = vrot.lane.b32.xlu0 %v1295, 32
        %v1789 = vpop.permute.xlu0 %1788
        %1790 = vrot.lane.b32.xlu0 %v1296, 32
        %v1791 = vpop.permute.xlu0 %1790
        %1792 = vrot.lane.b32.xlu0 %v1297, 32
        %v1793 = vpop.permute.xlu0 %1792
        %1794 = vrot.lane.b32.xlu0 %v1298, 32
        %v1795 = vpop.permute.xlu0 %1794
        %1796 = vrot.lane.b32.xlu0 %v1299, 32
        %v1797 = vpop.permute.xlu0 %1796
        %1798 = vrot.lane.b32.xlu0 %v1300, 32
        %v1799 = vpop.permute.xlu0 %1798
        %1800 = vrot.lane.b32.xlu0 %v1301, 32
        %v1801 = vpop.permute.xlu0 %1800
        %1802 = vrot.lane.b32.xlu0 %v1302, 32
        %v1803 = vpop.permute.xlu0 %1802
        %1804 = vrot.lane.b32.xlu0 %v1303, 32
        %v1805 = vpop.permute.xlu0 %1804
        %1806 = vrot.lane.b32.xlu0 %v1304, 32
        %v1807 = vpop.permute.xlu0 %1806
        %1808 = vrot.lane.b32.xlu0 %v1305, 32
        %v1809 = vpop.permute.xlu0 %1808
        %1810 = vrot.lane.b32.xlu0 %v1543, 32
        %v1811 = vpop.permute.xlu0 %1810
        %1812 = vrot.lane.b32.xlu0 %v1781, 32
        %v1813 = vpop.permute.xlu0 %1812
        %vm1830 = vcmask 294144
        %1831 = vst.msk [vmem:[#allocation2] sm:$0xff] %vm1830, %v1783
        %1832 = vst.msk [vmem:[#allocation2 + $0x8] sm:$0xff] %vm1830, %v1785
        %1833 = vst.msk [vmem:[#allocation2 + $0x10] sm:$0xff] %vm1830, %v1787
        %1834 = vst.msk [vmem:[#allocation2 + $0x18] sm:$0xff] %vm1830, %v1789
        %1835 = vst.msk [vmem:[#allocation2 + $0x20] sm:$0xff] %vm1830, %v1791
        %1836 = vst.msk [vmem:[#allocation2 + $0x28] sm:$0xff] %vm1830, %v1793
        %1837 = vst.msk [vmem:[#allocation2 + $0x30] sm:$0xff] %vm1830, %v1795
        %1838 = vst.msk [vmem:[#allocation2 + $0x38] sm:$0xff] %vm1830, %v1797
        %1839 = vst.msk [vmem:[#allocation2 + $0x40] sm:$0xff] %vm1830, %v1799
        %1840 = vst.msk [vmem:[#allocation2 + $0x48] sm:$0xff] %vm1830, %v1801
        %1841 = vst.msk [vmem:[#allocation2 + $0x50] sm:$0xff] %vm1830, %v1803
        %1842 = vst.msk [vmem:[#allocation2 + $0x58] sm:$0xff] %vm1830, %v1805
        %1843 = vst.msk [vmem:[#allocation2 + $0x60] sm:$0xff] %vm1830, %v1807
        %1844 = vst.msk [vmem:[#allocation2 + $0x68] sm:$0xff] %vm1830, %v1809
        %1845 = vst.msk [vmem:[#allocation2 + $0x70] sm:$0xff] %vm1830, %v1811
        %1846 = vst.msk [vmem:[#allocation2 + $0x78] sm:$0xff] %vm1830, %v1813
        %v1879 = vunpack.c.l.b16 %v406
        %v1880 = vunpack.c.l.b16 %v407
        %v1881 = vunpack.c.l.b16 %v409
        %v1882 = vunpack.c.l.b16 %v410
        %v1883 = vunpack.c.l.b16 %v412
        %v1884 = vunpack.c.l.b16 %v413
        %v1885 = vunpack.c.l.b16 %v415
        %v1886 = vunpack.c.l.b16 %v416
        %v1887 = vunpack.c.l.b16 %v418
        %v1888 = vunpack.c.l.b16 %v419
        %v1889 = vunpack.c.l.b16 %v421
        %v1890 = vunpack.c.l.b16 %v422
        %v1891 = vunpack.c.l.b16 %v424
        %v1892 = vunpack.c.l.b16 %v425
        %v1893 = vunpack.c.l.b16 %v427
        %v1894 = vunpack.c.l.b16 %v428
        %v1895 = vunpack.c.l.b16 %v430
        %v1896 = vunpack.c.l.b16 %v431
        %v1897 = vunpack.c.l.b16 %v433
        %v1898 = vunpack.c.l.b16 %v434
        %v1899 = vunpack.c.l.b16 %v436
        %v1900 = vunpack.c.l.b16 %v437
        %v1901 = vunpack.c.l.b16 %v439
        %v1902 = vunpack.c.l.b16 %v440
        %v1903 = vunpack.c.l.b16 %v442
        %v1904 = vunpack.c.l.b16 %v443
        %v1905 = vunpack.c.l.b16 %v445
        %v1906 = vunpack.c.l.b16 %v446
        %v1907 = vunpack.c.l.b16 %v448
        %v1908 = vunpack.c.l.b16 %v449
        %v1909 = vunpack.c.l.b16 %v451
        %v1910 = vunpack.c.l.b16 %v452
        %v1911 = vpack.c.b16 %v1880, %v1879
        %v1912 = vpack.c.b16 %v1882, %v1881
        %v1913 = vpack.c.b16 %v1884, %v1883
        %v1914 = vpack.c.b16 %v1886, %v1885
        %v1915 = vpack.c.b16 %v1888, %v1887
        %v1916 = vpack.c.b16 %v1890, %v1889
        %v1917 = vpack.c.b16 %v1892, %v1891
        %v1918 = vpack.c.b16 %v1894, %v1893
        %v1919 = vpack.c.b16 %v1896, %v1895
        %v1920 = vpack.c.b16 %v1898, %v1897
        %v1921 = vpack.c.b16 %v1900, %v1899
        %v1922 = vpack.c.b16 %v1902, %v1901
        %v1923 = vpack.c.b16 %v1904, %v1903
        %v1924 = vpack.c.b16 %v1906, %v1905
        %v1925 = vpack.c.b16 %v1908, %v1907
        %v1926 = vpack.c.b16 %v1910, %v1909
        %1927 = vrot.lane.b32.xlu0 %v1911, 36
        %v1928 = vpop.permute.xlu0 %1927
        %1929 = vrot.lane.b32.xlu0 %v1912, 36
        %v1930 = vpop.permute.xlu0 %1929
        %1931 = vrot.lane.b32.xlu0 %v1913, 36
        %v1932 = vpop.permute.xlu0 %1931
        %1933 = vrot.lane.b32.xlu0 %v1914, 36
        %v1934 = vpop.permute.xlu0 %1933
        %1935 = vrot.lane.b32.xlu0 %v1915, 36
        %v1936 = vpop.permute.xlu0 %1935
        %1937 = vrot.lane.b32.xlu0 %v1916, 36
        %v1938 = vpop.permute.xlu0 %1937
        %1939 = vrot.lane.b32.xlu0 %v1917, 36
        %v1940 = vpop.permute.xlu0 %1939
        %1941 = vrot.lane.b32.xlu0 %v1918, 36
        %v1942 = vpop.permute.xlu0 %1941
        %1943 = vrot.lane.b32.xlu0 %v1919, 36
        %v1944 = vpop.permute.xlu0 %1943
        %1945 = vrot.lane.b32.xlu0 %v1920, 36
        %v1946 = vpop.permute.xlu0 %1945
        %1947 = vrot.lane.b32.xlu0 %v1921, 36
        %v1948 = vpop.permute.xlu0 %1947
        %1949 = vrot.lane.b32.xlu0 %v1922, 36
        %v1950 = vpop.permute.xlu0 %1949
        %1951 = vrot.lane.b32.xlu0 %v1923, 36
        %v1952 = vpop.permute.xlu0 %1951
        %1953 = vrot.lane.b32.xlu0 %v1924, 36
        %v1954 = vpop.permute.xlu0 %1953
        %1955 = vrot.lane.b32.xlu0 %v1925, 36
        %v1956 = vpop.permute.xlu0 %1955
        %1957 = vrot.lane.b32.xlu0 %v1926, 36
        %v1958 = vpop.permute.xlu0 %1957
        %vm1975 = vcmask 326944
        %1976 = vst.msk [vmem:[#allocation2] sm:$0xff] %vm1975, %v1928
        %1977 = vst.msk [vmem:[#allocation2 + $0x8] sm:$0xff] %vm1975, %v1930
        %1978 = vst.msk [vmem:[#allocation2 + $0x10] sm:$0xff] %vm1975, %v1932
        %1979 = vst.msk [vmem:[#allocation2 + $0x18] sm:$0xff] %vm1975, %v1934
        %1980 = vst.msk [vmem:[#allocation2 + $0x20] sm:$0xff] %vm1975, %v1936
        %1981 = vst.msk [vmem:[#allocation2 + $0x28] sm:$0xff] %vm1975, %v1938
        %1982 = vst.msk [vmem:[#allocation2 + $0x30] sm:$0xff] %vm1975, %v1940
        %1983 = vst.msk [vmem:[#allocation2 + $0x38] sm:$0xff] %vm1975, %v1942
        %1984 = vst.msk [vmem:[#allocation2 + $0x40] sm:$0xff] %vm1975, %v1944
        %1985 = vst.msk [vmem:[#allocation2 + $0x48] sm:$0xff] %vm1975, %v1946
        %1986 = vst.msk [vmem:[#allocation2 + $0x50] sm:$0xff] %vm1975, %v1948
        %1987 = vst.msk [vmem:[#allocation2 + $0x58] sm:$0xff] %vm1975, %v1950
        %1988 = vst.msk [vmem:[#allocation2 + $0x60] sm:$0xff] %vm1975, %v1952
        %1989 = vst.msk [vmem:[#allocation2 + $0x68] sm:$0xff] %vm1975, %v1954
        %1990 = vst.msk [vmem:[#allocation2 + $0x70] sm:$0xff] %vm1975, %v1956
        %1991 = vst.msk [vmem:[#allocation2 + $0x78] sm:$0xff] %vm1975, %v1958
        %v1993 = vshrl.u32 %v406, 16
        %v1995 = vrot.slane %v1993, 4
        %v1996 = vshll.u32 %v406, 16
        %v1998 = vrot.slane %v1996, 5
        %v1999 = vor.u32 %v1995, %v1998
        %v2000 = vrot.slane %v1999, 4
        %v2002 = vshll.u32 %v407, 16
        %v2004 = vrot.slane %v2002, 5
        %v2005 = vsel %vm629, %v2000, %v2004
        %v2006 = vshrl.u32 %v407, 16
        %v2008 = vrot.slane %v2006, 4
        %v2009 = vor.u32 %v2008, %v2004
        %v2010 = vrot.slane %v2009, 4
        %v2012 = vshll.u32 %v408, 16
        %v2014 = vrot.slane %v2012, 5
        %v2015 = vsel %vm629, %v2010, %v2014
        %v2017 = vshrl.u32 %v409, 16
        %v2019 = vrot.slane %v2017, 4
        %v2020 = vshll.u32 %v409, 16
        %v2022 = vrot.slane %v2020, 5
        %v2023 = vor.u32 %v2019, %v2022
        %v2024 = vrot.slane %v2023, 4
        %v2026 = vshll.u32 %v410, 16
        %v2028 = vrot.slane %v2026, 5
        %v2029 = vsel %vm629, %v2024, %v2028
        %v2030 = vshrl.u32 %v410, 16
        %v2032 = vrot.slane %v2030, 4
        %v2033 = vor.u32 %v2032, %v2028
        %v2034 = vrot.slane %v2033, 4
        %v2036 = vshll.u32 %v411, 16
        %v2038 = vrot.slane %v2036, 5
        %v2039 = vsel %vm629, %v2034, %v2038
        %v2041 = vshrl.u32 %v412, 16
        %v2043 = vrot.slane %v2041, 4
        %v2044 = vshll.u32 %v412, 16
        %v2046 = vrot.slane %v2044, 5
        %v2047 = vor.u32 %v2043, %v2046
        %v2048 = vrot.slane %v2047, 4
        %v2050 = vshll.u32 %v413, 16
        %v2052 = vrot.slane %v2050, 5
        %v2053 = vsel %vm629, %v2048, %v2052
        %v2054 = vshrl.u32 %v413, 16
        %v2056 = vrot.slane %v2054, 4
        %v2057 = vor.u32 %v2056, %v2052
        %v2058 = vrot.slane %v2057, 4
        %v2060 = vshll.u32 %v414, 16
        %v2062 = vrot.slane %v2060, 5
        %v2063 = vsel %vm629, %v2058, %v2062
        %v2065 = vshrl.u32 %v415, 16
        %v2067 = vrot.slane %v2065, 4
        %v2068 = vshll.u32 %v415, 16
        %v2070 = vrot.slane %v2068, 5
        %v2071 = vor.u32 %v2067, %v2070
        %v2072 = vrot.slane %v2071, 4
        %v2074 = vshll.u32 %v416, 16
        %v2076 = vrot.slane %v2074, 5
        %v2077 = vsel %vm629, %v2072, %v2076
        %v2078 = vshrl.u32 %v416, 16
        %v2080 = vrot.slane %v2078, 4
        %v2081 = vor.u32 %v2080, %v2076
        %v2082 = vrot.slane %v2081, 4
        %v2084 = vshll.u32 %v417, 16
        %v2086 = vrot.slane %v2084, 5
        %v2087 = vsel %vm629, %v2082, %v2086
        %v2089 = vshrl.u32 %v418, 16
        %v2091 = vrot.slane %v2089, 4
        %v2092 = vshll.u32 %v418, 16
        %v2094 = vrot.slane %v2092, 5
        %v2095 = vor.u32 %v2091, %v2094
        %v2096 = vrot.slane %v2095, 4
        %v2098 = vshll.u32 %v419, 16
        %v2100 = vrot.slane %v2098, 5
        %v2101 = vsel %vm629, %v2096, %v2100
        %v2102 = vshrl.u32 %v419, 16
        %v2104 = vrot.slane %v2102, 4
        %v2105 = vor.u32 %v2104, %v2100
        %v2106 = vrot.slane %v2105, 4
        %v2108 = vshll.u32 %v420, 16
        %v2110 = vrot.slane %v2108, 5
        %v2111 = vsel %vm629, %v2106, %v2110
        %v2113 = vshrl.u32 %v421, 16
        %v2115 = vrot.slane %v2113, 4
        %v2116 = vshll.u32 %v421, 16
        %v2118 = vrot.slane %v2116, 5
        %v2119 = vor.u32 %v2115, %v2118
        %v2120 = vrot.slane %v2119, 4
        %v2122 = vshll.u32 %v422, 16
        %v2124 = vrot.slane %v2122, 5
        %v2125 = vsel %vm629, %v2120, %v2124
        %v2126 = vshrl.u32 %v422, 16
        %v2128 = vrot.slane %v2126, 4
        %v2129 = vor.u32 %v2128, %v2124
        %v2130 = vrot.slane %v2129, 4
        %v2132 = vshll.u32 %v423, 16
        %v2134 = vrot.slane %v2132, 5
        %v2135 = vsel %vm629, %v2130, %v2134
        %v2137 = vshrl.u32 %v424, 16
        %v2139 = vrot.slane %v2137, 4
        %v2140 = vshll.u32 %v424, 16
        %v2142 = vrot.slane %v2140, 5
        %v2143 = vor.u32 %v2139, %v2142
        %v2144 = vrot.slane %v2143, 4
        %v2146 = vshll.u32 %v425, 16
        %v2148 = vrot.slane %v2146, 5
        %v2149 = vsel %vm629, %v2144, %v2148
        %v2150 = vshrl.u32 %v425, 16
        %v2152 = vrot.slane %v2150, 4
        %v2153 = vor.u32 %v2152, %v2148
        %v2154 = vrot.slane %v2153, 4
        %v2156 = vshll.u32 %v426, 16
        %v2158 = vrot.slane %v2156, 5
        %v2159 = vsel %vm629, %v2154, %v2158
        %v2161 = vshrl.u32 %v427, 16
        %v2163 = vrot.slane %v2161, 4
        %v2164 = vshll.u32 %v427, 16
        %v2166 = vrot.slane %v2164, 5
        %v2167 = vor.u32 %v2163, %v2166
        %v2168 = vrot.slane %v2167, 4
        %v2170 = vshll.u32 %v428, 16
        %v2172 = vrot.slane %v2170, 5
        %v2173 = vsel %vm629, %v2168, %v2172
        %v2174 = vshrl.u32 %v428, 16
        %v2176 = vrot.slane %v2174, 4
        %v2177 = vor.u32 %v2176, %v2172
        %v2178 = vrot.slane %v2177, 4
        %v2180 = vshll.u32 %v429, 16
        %v2182 = vrot.slane %v2180, 5
        %v2183 = vsel %vm629, %v2178, %v2182
        %v2185 = vshrl.u32 %v430, 16
        %v2187 = vrot.slane %v2185, 4
        %v2188 = vshll.u32 %v430, 16
        %v2190 = vrot.slane %v2188, 5
        %v2191 = vor.u32 %v2187, %v2190
        %v2192 = vrot.slane %v2191, 4
        %v2194 = vshll.u32 %v431, 16
        %v2196 = vrot.slane %v2194, 5
        %v2197 = vsel %vm629, %v2192, %v2196
        %v2198 = vshrl.u32 %v431, 16
        %v2200 = vrot.slane %v2198, 4
        %v2201 = vor.u32 %v2200, %v2196
        %v2202 = vrot.slane %v2201, 4
        %v2204 = vshll.u32 %v432, 16
        %v2206 = vrot.slane %v2204, 5
        %v2207 = vsel %vm629, %v2202, %v2206
        %v2209 = vshrl.u32 %v433, 16
        %v2211 = vrot.slane %v2209, 4
        %v2212 = vshll.u32 %v433, 16
        %v2214 = vrot.slane %v2212, 5
        %v2215 = vor.u32 %v2211, %v2214
        %v2216 = vrot.slane %v2215, 4
        %v2218 = vshll.u32 %v434, 16
        %v2220 = vrot.slane %v2218, 5
        %v2221 = vsel %vm629, %v2216, %v2220
        %v2222 = vshrl.u32 %v434, 16
        %v2224 = vrot.slane %v2222, 4
        %v2225 = vor.u32 %v2224, %v2220
        %v2226 = vrot.slane %v2225, 4
        %v2228 = vshll.u32 %v435, 16
        %v2230 = vrot.slane %v2228, 5
        %v2231 = vsel %vm629, %v2226, %v2230
        %v2233 = vshrl.u32 %v436, 16
        %v2235 = vrot.slane %v2233, 4
        %v2236 = vshll.u32 %v436, 16
        %v2238 = vrot.slane %v2236, 5
        %v2239 = vor.u32 %v2235, %v2238
        %v2240 = vrot.slane %v2239, 4
        %v2242 = vshll.u32 %v437, 16
        %v2244 = vrot.slane %v2242, 5
        %v2245 = vsel %vm629, %v2240, %v2244
        %v2246 = vshrl.u32 %v437, 16
        %v2248 = vrot.slane %v2246, 4
        %v2249 = vor.u32 %v2248, %v2244
        %v2250 = vrot.slane %v2249, 4
        %v2252 = vshll.u32 %v438, 16
        %v2254 = vrot.slane %v2252, 5
        %v2255 = vsel %vm629, %v2250, %v2254
        %v2257 = vshrl.u32 %v439, 16
        %v2259 = vrot.slane %v2257, 4
        %v2260 = vshll.u32 %v439, 16
        %v2262 = vrot.slane %v2260, 5
        %v2263 = vor.u32 %v2259, %v2262
        %v2264 = vrot.slane %v2263, 4
        %v2266 = vshll.u32 %v440, 16
        %v2268 = vrot.slane %v2266, 5
        %v2269 = vsel %vm629, %v2264, %v2268
        %v2270 = vshrl.u32 %v440, 16
        %v2272 = vrot.slane %v2270, 4
        %v2273 = vor.u32 %v2272, %v2268
        %v2274 = vrot.slane %v2273, 4
        %v2276 = vshll.u32 %v441, 16
        %v2278 = vrot.slane %v2276, 5
        %v2279 = vsel %vm629, %v2274, %v2278
        %v2281 = vshrl.u32 %v442, 16
        %v2283 = vrot.slane %v2281, 4
        %v2284 = vshll.u32 %v442, 16
        %v2286 = vrot.slane %v2284, 5
        %v2287 = vor.u32 %v2283, %v2286
        %v2288 = vrot.slane %v2287, 4
        %v2290 = vshll.u32 %v443, 16
        %v2292 = vrot.slane %v2290, 5
        %v2293 = vsel %vm629, %v2288, %v2292
        %v2294 = vshrl.u32 %v443, 16
        %v2296 = vrot.slane %v2294, 4
        %v2297 = vor.u32 %v2296, %v2292
        %v2298 = vrot.slane %v2297, 4
        %v2300 = vshll.u32 %v444, 16
        %v2302 = vrot.slane %v2300, 5
        %v2303 = vsel %vm629, %v2298, %v2302
        %v2305 = vshrl.u32 %v445, 16
        %v2307 = vrot.slane %v2305, 4
        %v2308 = vshll.u32 %v445, 16
        %v2310 = vrot.slane %v2308, 5
        %v2311 = vor.u32 %v2307, %v2310
        %v2312 = vrot.slane %v2311, 4
        %v2314 = vshll.u32 %v446, 16
        %v2316 = vrot.slane %v2314, 5
        %v2317 = vsel %vm629, %v2312, %v2316
        %v2318 = vshrl.u32 %v446, 16
        %v2320 = vrot.slane %v2318, 4
        %v2321 = vor.u32 %v2320, %v2316
        %v2322 = vrot.slane %v2321, 4
        %v2324 = vshll.u32 %v447, 16
        %v2326 = vrot.slane %v2324, 5
        %v2327 = vsel %vm629, %v2322, %v2326
        %v2329 = vshrl.u32 %v448, 16
        %v2331 = vrot.slane %v2329, 4
        %v2332 = vshll.u32 %v448, 16
        %v2334 = vrot.slane %v2332, 5
        %v2335 = vor.u32 %v2331, %v2334
        %v2336 = vrot.slane %v2335, 4
        %v2338 = vshll.u32 %v449, 16
        %v2340 = vrot.slane %v2338, 5
        %v2341 = vsel %vm629, %v2336, %v2340
        %v2342 = vshrl.u32 %v449, 16
        %v2344 = vrot.slane %v2342, 4
        %v2345 = vor.u32 %v2344, %v2340
        %v2346 = vrot.slane %v2345, 4
        %v2348 = vshll.u32 %v450, 16
        %v2350 = vrot.slane %v2348, 5
        %v2351 = vsel %vm629, %v2346, %v2350
        %v2353 = vshrl.u32 %v451, 16
        %v2355 = vrot.slane %v2353, 4
        %v2356 = vshll.u32 %v451, 16
        %v2358 = vrot.slane %v2356, 5
        %v2359 = vor.u32 %v2355, %v2358
        %v2360 = vrot.slane %v2359, 4
        %v2362 = vshll.u32 %v452, 16
        %v2364 = vrot.slane %v2362, 5
        %v2365 = vsel %vm629, %v2360, %v2364
        %v2366 = vshrl.u32 %v452, 16
        %v2368 = vrot.slane %v2366, 4
        %v2369 = vor.u32 %v2368, %v2364
        %v2370 = vrot.slane %v2369, 4
        %v2372 = vshll.u32 %v453, 16
        %v2374 = vrot.slane %v2372, 5
        %v2375 = vsel %vm629, %v2370, %v2374
        %v2376 = vunpack.c.l.b16 %v2005
        %v2377 = vunpack.c.l.b16 %v2015
        %v2378 = vunpack.c.l.b16 %v2029
        %v2379 = vunpack.c.l.b16 %v2039
        %v2380 = vunpack.c.l.b16 %v2053
        %v2381 = vunpack.c.l.b16 %v2063
        %v2382 = vunpack.c.l.b16 %v2077
        %v2383 = vunpack.c.l.b16 %v2087
        %v2384 = vunpack.c.l.b16 %v2101
        %v2385 = vunpack.c.l.b16 %v2111
        %v2386 = vunpack.c.l.b16 %v2125
        %v2387 = vunpack.c.l.b16 %v2135
        %v2388 = vunpack.c.l.b16 %v2149
        %v2389 = vunpack.c.l.b16 %v2159
        %v2390 = vunpack.c.l.b16 %v2173
        %v2391 = vunpack.c.l.b16 %v2183
        %v2392 = vunpack.c.l.b16 %v2197
        %v2393 = vunpack.c.l.b16 %v2207
        %v2394 = vunpack.c.l.b16 %v2221
        %v2395 = vunpack.c.l.b16 %v2231
        %v2396 = vunpack.c.l.b16 %v2245
        %v2397 = vunpack.c.l.b16 %v2255
        %v2398 = vunpack.c.l.b16 %v2269
        %v2399 = vunpack.c.l.b16 %v2279
        %v2400 = vunpack.c.l.b16 %v2293
        %v2401 = vunpack.c.l.b16 %v2303
        %v2402 = vunpack.c.l.b16 %v2317
        %v2403 = vunpack.c.l.b16 %v2327
        %v2404 = vunpack.c.l.b16 %v2341
        %v2405 = vunpack.c.l.b16 %v2351
        %v2406 = vunpack.c.l.b16 %v2365
        %v2407 = vunpack.c.l.b16 %v2375
        %v2408 = vpack.c.b16 %v2377, %v2376
        %v2409 = vpack.c.b16 %v2379, %v2378
        %v2410 = vpack.c.b16 %v2381, %v2380
        %v2411 = vpack.c.b16 %v2383, %v2382
        %v2412 = vpack.c.b16 %v2385, %v2384
        %v2413 = vpack.c.b16 %v2387, %v2386
        %v2414 = vpack.c.b16 %v2389, %v2388
        %v2415 = vpack.c.b16 %v2391, %v2390
        %v2416 = vpack.c.b16 %v2393, %v2392
        %v2417 = vpack.c.b16 %v2395, %v2394
        %v2418 = vpack.c.b16 %v2397, %v2396
        %v2419 = vpack.c.b16 %v2399, %v2398
        %v2420 = vpack.c.b16 %v2401, %v2400
        %v2421 = vpack.c.b16 %v2403, %v2402
        %v2422 = vpack.c.b16 %v2405, %v2404
        %v2423 = vpack.c.b16 %v2407, %v2406
        %2424 = vrot.lane.b32.xlu0 %v2408, 40
        %v2425 = vpop.permute.xlu0 %2424
        %2426 = vrot.lane.b32.xlu0 %v2409, 40
        %v2427 = vpop.permute.xlu0 %2426
        %2428 = vrot.lane.b32.xlu0 %v2410, 40
        %v2429 = vpop.permute.xlu0 %2428
        %2430 = vrot.lane.b32.xlu0 %v2411, 40
        %v2431 = vpop.permute.xlu0 %2430
        %2432 = vrot.lane.b32.xlu0 %v2412, 40
        %v2433 = vpop.permute.xlu0 %2432
        %2434 = vrot.lane.b32.xlu0 %v2413, 40
        %v2435 = vpop.permute.xlu0 %2434
        %2436 = vrot.lane.b32.xlu0 %v2414, 40
        %v2437 = vpop.permute.xlu0 %2436
        %2438 = vrot.lane.b32.xlu0 %v2415, 40
        %v2439 = vpop.permute.xlu0 %2438
        %2440 = vrot.lane.b32.xlu0 %v2416, 40
        %v2441 = vpop.permute.xlu0 %2440
        %2442 = vrot.lane.b32.xlu0 %v2417, 40
        %v2443 = vpop.permute.xlu0 %2442
        %2444 = vrot.lane.b32.xlu0 %v2418, 40
        %v2445 = vpop.permute.xlu0 %2444
        %2446 = vrot.lane.b32.xlu0 %v2419, 40
        %v2447 = vpop.permute.xlu0 %2446
        %2448 = vrot.lane.b32.xlu0 %v2420, 40
        %v2449 = vpop.permute.xlu0 %2448
        %2450 = vrot.lane.b32.xlu0 %v2421, 40
        %v2451 = vpop.permute.xlu0 %2450
        %2452 = vrot.lane.b32.xlu0 %v2422, 40
        %v2453 = vpop.permute.xlu0 %2452
        %2454 = vrot.lane.b32.xlu0 %v2423, 40
        %v2455 = vpop.permute.xlu0 %2454
        %vm2472 = vcmask 359744
        %2473 = vst.msk [vmem:[#allocation2] sm:$0xff] %vm2472, %v2425
        %2474 = vst.msk [vmem:[#allocation2 + $0x8] sm:$0xff] %vm2472, %v2427
        %2475 = vst.msk [vmem:[#allocation2 + $0x10] sm:$0xff] %vm2472, %v2429
        %2476 = vst.msk [vmem:[#allocation2 + $0x18] sm:$0xff] %vm2472, %v2431
        %2477 = vst.msk [vmem:[#allocation2 + $0x20] sm:$0xff] %vm2472, %v2433
        %2478 = vst.msk [vmem:[#allocation2 + $0x28] sm:$0xff] %vm2472, %v2435
        %2479 = vst.msk [vmem:[#allocation2 + $0x30] sm:$0xff] %vm2472, %v2437
        %2480 = vst.msk [vmem:[#allocation2 + $0x38] sm:$0xff] %vm2472, %v2439
        %2481 = vst.msk [vmem:[#allocation2 + $0x40] sm:$0xff] %vm2472, %v2441
        %2482 = vst.msk [vmem:[#allocation2 + $0x48] sm:$0xff] %vm2472, %v2443
        %2483 = vst.msk [vmem:[#allocation2 + $0x50] sm:$0xff] %vm2472, %v2445
        %2484 = vst.msk [vmem:[#allocation2 + $0x58] sm:$0xff] %vm2472, %v2447
        %2485 = vst.msk [vmem:[#allocation2 + $0x60] sm:$0xff] %vm2472, %v2449
        %2486 = vst.msk [vmem:[#allocation2 + $0x68] sm:$0xff] %vm2472, %v2451
        %2487 = vst.msk [vmem:[#allocation2 + $0x70] sm:$0xff] %vm2472, %v2453
        %2488 = vst.msk [vmem:[#allocation2 + $0x78] sm:$0xff] %vm2472, %v2455
        %v2505 = vrot.slane %v406, 5
        %v2506 = vrot.slane %v2505, 4
        %v2507 = vrot.slane %v407, 5
        %v2508 = vsel %vm1145, %v2506, %v2507
        %v2509 = vrot.slane %v2507, 4
        %v2510 = vrot.slane %v408, 5
        %v2511 = vsel %vm1145, %v2509, %v2510
        %v2512 = vrot.slane %v409, 5
        %v2513 = vrot.slane %v2512, 4
        %v2514 = vrot.slane %v410, 5
        %v2515 = vsel %vm1145, %v2513, %v2514
        %v2516 = vrot.slane %v2514, 4
        %v2517 = vrot.slane %v411, 5
        %v2518 = vsel %vm1145, %v2516, %v2517
        %v2519 = vrot.slane %v412, 5
        %v2520 = vrot.slane %v2519, 4
        %v2521 = vrot.slane %v413, 5
        %v2522 = vsel %vm1145, %v2520, %v2521
        %v2523 = vrot.slane %v2521, 4
        %v2524 = vrot.slane %v414, 5
        %v2525 = vsel %vm1145, %v2523, %v2524
        %v2526 = vrot.slane %v415, 5
        %v2527 = vrot.slane %v2526, 4
        %v2528 = vrot.slane %v416, 5
        %v2529 = vsel %vm1145, %v2527, %v2528
        %v2530 = vrot.slane %v2528, 4
        %v2531 = vrot.slane %v417, 5
        %v2532 = vsel %vm1145, %v2530, %v2531
        %v2533 = vrot.slane %v418, 5
        %v2534 = vrot.slane %v2533, 4
        %v2535 = vrot.slane %v419, 5
        %v2536 = vsel %vm1145, %v2534, %v2535
        %v2537 = vrot.slane %v2535, 4
        %v2538 = vrot.slane %v420, 5
        %v2539 = vsel %vm1145, %v2537, %v2538
        %v2540 = vrot.slane %v421, 5
        %v2541 = vrot.slane %v2540, 4
        %v2542 = vrot.slane %v422, 5
        %v2543 = vsel %vm1145, %v2541, %v2542
        %v2544 = vrot.slane %v2542, 4
        %v2545 = vrot.slane %v423, 5
        %v2546 = vsel %vm1145, %v2544, %v2545
        %v2547 = vrot.slane %v424, 5
        %v2548 = vrot.slane %v2547, 4
        %v2549 = vrot.slane %v425, 5
        %v2550 = vsel %vm1145, %v2548, %v2549
        %v2551 = vrot.slane %v2549, 4
        %v2552 = vrot.slane %v426, 5
        %v2553 = vsel %vm1145, %v2551, %v2552
        %v2554 = vrot.slane %v427, 5
        %v2555 = vrot.slane %v2554, 4
        %v2556 = vrot.slane %v428, 5
        %v2557 = vsel %vm1145, %v2555, %v2556
        %v2558 = vrot.slane %v2556, 4
        %v2559 = vrot.slane %v429, 5
        %v2560 = vsel %vm1145, %v2558, %v2559
        %v2561 = vrot.slane %v430, 5
        %v2562 = vrot.slane %v2561, 4
        %v2563 = vrot.slane %v431, 5
        %v2564 = vsel %vm1145, %v2562, %v2563
        %v2565 = vrot.slane %v2563, 4
        %v2566 = vrot.slane %v432, 5
        %v2567 = vsel %vm1145, %v2565, %v2566
        %v2568 = vrot.slane %v433, 5
        %v2569 = vrot.slane %v2568, 4
        %v2570 = vrot.slane %v434, 5
        %v2571 = vsel %vm1145, %v2569, %v2570
        %v2572 = vrot.slane %v2570, 4
        %v2573 = vrot.slane %v435, 5
        %v2574 = vsel %vm1145, %v2572, %v2573
        %v2575 = vrot.slane %v436, 5
        %v2576 = vrot.slane %v2575, 4
        %v2577 = vrot.slane %v437, 5
        %v2578 = vsel %vm1145, %v2576, %v2577
        %v2579 = vrot.slane %v2577, 4
        %v2580 = vrot.slane %v438, 5
        %v2581 = vsel %vm1145, %v2579, %v2580
        %v2582 = vrot.slane %v439, 5
        %v2583 = vrot.slane %v2582, 4
        %v2584 = vrot.slane %v440, 5
        %v2585 = vsel %vm1145, %v2583, %v2584
        %v2586 = vrot.slane %v2584, 4
        %v2587 = vrot.slane %v441, 5
        %v2588 = vsel %vm1145, %v2586, %v2587
        %v2589 = vrot.slane %v442, 5
        %v2590 = vrot.slane %v2589, 4
        %v2591 = vrot.slane %v443, 5
        %v2592 = vsel %vm1145, %v2590, %v2591
        %v2593 = vrot.slane %v2591, 4
        %v2594 = vrot.slane %v444, 5
        %v2595 = vsel %vm1145, %v2593, %v2594
        %v2596 = vrot.slane %v445, 5
        %v2597 = vrot.slane %v2596, 4
        %v2598 = vrot.slane %v446, 5
        %v2599 = vsel %vm1145, %v2597, %v2598
        %v2600 = vrot.slane %v2598, 4
        %v2601 = vrot.slane %v447, 5
        %v2602 = vsel %vm1145, %v2600, %v2601
        %v2603 = vrot.slane %v448, 5
        %v2604 = vrot.slane %v2603, 4
        %v2605 = vrot.slane %v449, 5
        %v2606 = vsel %vm1145, %v2604, %v2605
        %v2607 = vrot.slane %v2605, 4
        %v2608 = vrot.slane %v450, 5
        %v2609 = vsel %vm1145, %v2607, %v2608
        %v2610 = vrot.slane %v451, 5
        %v2611 = vrot.slane %v2610, 4
        %v2612 = vrot.slane %v452, 5
        %v2613 = vsel %vm1145, %v2611, %v2612
        %v2614 = vrot.slane %v2612, 4
        %v2615 = vrot.slane %v453, 5
        %v2616 = vsel %vm1145, %v2614, %v2615
        %v2617 = vunpack.c.l.b16 %v2508
        %v2618 = vunpack.c.l.b16 %v2511
        %v2619 = vunpack.c.l.b16 %v2515
        %v2620 = vunpack.c.l.b16 %v2518
        %v2621 = vunpack.c.l.b16 %v2522
        %v2622 = vunpack.c.l.b16 %v2525
        %v2623 = vunpack.c.l.b16 %v2529
        %v2624 = vunpack.c.l.b16 %v2532
        %v2625 = vunpack.c.l.b16 %v2536
        %v2626 = vunpack.c.l.b16 %v2539
        %v2627 = vunpack.c.l.b16 %v2543
        %v2628 = vunpack.c.l.b16 %v2546
        %v2629 = vunpack.c.l.b16 %v2550
        %v2630 = vunpack.c.l.b16 %v2553
        %v2631 = vunpack.c.l.b16 %v2557
        %v2632 = vunpack.c.l.b16 %v2560
        %v2633 = vunpack.c.l.b16 %v2564
        %v2634 = vunpack.c.l.b16 %v2567
        %v2635 = vunpack.c.l.b16 %v2571
        %v2636 = vunpack.c.l.b16 %v2574
        %v2637 = vunpack.c.l.b16 %v2578
        %v2638 = vunpack.c.l.b16 %v2581
        %v2639 = vunpack.c.l.b16 %v2585
        %v2640 = vunpack.c.l.b16 %v2588
        %v2641 = vunpack.c.l.b16 %v2592
        %v2642 = vunpack.c.l.b16 %v2595
        %v2643 = vunpack.c.l.b16 %v2599
        %v2644 = vunpack.c.l.b16 %v2602
        %v2645 = vunpack.c.l.b16 %v2606
        %v2646 = vunpack.c.l.b16 %v2609
        %v2647 = vunpack.c.l.b16 %v2613
        %v2648 = vunpack.c.l.b16 %v2616
        %v2649 = vpack.c.b16 %v2618, %v2617
        %v2650 = vpack.c.b16 %v2620, %v2619
        %v2651 = vpack.c.b16 %v2622, %v2621
        %v2652 = vpack.c.b16 %v2624, %v2623
        %v2653 = vpack.c.b16 %v2626, %v2625
        %v2654 = vpack.c.b16 %v2628, %v2627
        %v2655 = vpack.c.b16 %v2630, %v2629
        %v2656 = vpack.c.b16 %v2632, %v2631
        %v2657 = vpack.c.b16 %v2634, %v2633
        %v2658 = vpack.c.b16 %v2636, %v2635
        %v2659 = vpack.c.b16 %v2638, %v2637
        %v2660 = vpack.c.b16 %v2640, %v2639
        %v2661 = vpack.c.b16 %v2642, %v2641
        %v2662 = vpack.c.b16 %v2644, %v2643
        %v2663 = vpack.c.b16 %v2646, %v2645
        %v2664 = vpack.c.b16 %v2648, %v2647
        %2665 = vrot.lane.b32.xlu0 %v2649, 44
        %v2666 = vpop.permute.xlu0 %2665
        %2667 = vrot.lane.b32.xlu0 %v2650, 44
        %v2668 = vpop.permute.xlu0 %2667
        %2669 = vrot.lane.b32.xlu0 %v2651, 44
        %v2670 = vpop.permute.xlu0 %2669
        %2671 = vrot.lane.b32.xlu0 %v2652, 44
        %v2672 = vpop.permute.xlu0 %2671
        %2673 = vrot.lane.b32.xlu0 %v2653, 44
        %v2674 = vpop.permute.xlu0 %2673
        %2675 = vrot.lane.b32.xlu0 %v2654, 44
        %v2676 = vpop.permute.xlu0 %2675
        %2677 = vrot.lane.b32.xlu0 %v2655, 44
        %v2678 = vpop.permute.xlu0 %2677
        %2679 = vrot.lane.b32.xlu0 %v2656, 44
        %v2680 = vpop.permute.xlu0 %2679
        %2681 = vrot.lane.b32.xlu0 %v2657, 44
        %v2682 = vpop.permute.xlu0 %2681
        %2683 = vrot.lane.b32.xlu0 %v2658, 44
        %v2684 = vpop.permute.xlu0 %2683
        %2685 = vrot.lane.b32.xlu0 %v2659, 44
        %v2686 = vpop.permute.xlu0 %2685
        %2687 = vrot.lane.b32.xlu0 %v2660, 44
        %v2688 = vpop.permute.xlu0 %2687
        %2689 = vrot.lane.b32.xlu0 %v2661, 44
        %v2690 = vpop.permute.xlu0 %2689
        %2691 = vrot.lane.b32.xlu0 %v2662, 44
        %v2692 = vpop.permute.xlu0 %2691
        %2693 = vrot.lane.b32.xlu0 %v2663, 44
        %v2694 = vpop.permute.xlu0 %2693
        %2695 = vrot.lane.b32.xlu0 %v2664, 44
        %v2696 = vpop.permute.xlu0 %2695
        %vm2713 = vcmask 392544
        %2714 = vst.msk [vmem:[#allocation2] sm:$0xff] %vm2713, %v2666
        %2715 = vst.msk [vmem:[#allocation2 + $0x8] sm:$0xff] %vm2713, %v2668
        %2716 = vst.msk [vmem:[#allocation2 + $0x10] sm:$0xff] %vm2713, %v2670
        %2717 = vst.msk [vmem:[#allocation2 + $0x18] sm:$0xff] %vm2713, %v2672
        %2718 = vst.msk [vmem:[#allocation2 + $0x20] sm:$0xff] %vm2713, %v2674
        %2719 = vst.msk [vmem:[#allocation2 + $0x28] sm:$0xff] %vm2713, %v2676
        %2720 = vst.msk [vmem:[#allocation2 + $0x30] sm:$0xff] %vm2713, %v2678
        %2721 = vst.msk [vmem:[#allocation2 + $0x38] sm:$0xff] %vm2713, %v2680
        %2722 = vst.msk [vmem:[#allocation2 + $0x40] sm:$0xff] %vm2713, %v2682
        %2723 = vst.msk [vmem:[#allocation2 + $0x48] sm:$0xff] %vm2713, %v2684
        %2724 = vst.msk [vmem:[#allocation2 + $0x50] sm:$0xff] %vm2713, %v2686
        %2725 = vst.msk [vmem:[#allocation2 + $0x58] sm:$0xff] %vm2713, %v2688
        %2726 = vst.msk [vmem:[#allocation2 + $0x60] sm:$0xff] %vm2713, %v2690
        %2727 = vst.msk [vmem:[#allocation2 + $0x68] sm:$0xff] %vm2713, %v2692
        %2728 = vst.msk [vmem:[#allocation2 + $0x70] sm:$0xff] %vm2713, %v2694
        %2729 = vst.msk [vmem:[#allocation2 + $0x78] sm:$0xff] %vm2713, %v2696
        %v2732 = vunpack.c.l.b16 %v454
        %v2733 = vunpack.c.l.b16 %v455
        %v2734 = vpack.c.b16 %v2733, %v2732
        %2735 = vrot.lane.b32.xlu0 %v1912, 48
        %v2736 = vpop.permute.xlu0 %2735
        %2737 = vrot.lane.b32.xlu0 %v1913, 48
        %v2738 = vpop.permute.xlu0 %2737
        %2739 = vrot.lane.b32.xlu0 %v1914, 48
        %v2740 = vpop.permute.xlu0 %2739
        %2741 = vrot.lane.b32.xlu0 %v1915, 48
        %v2742 = vpop.permute.xlu0 %2741
        %2743 = vrot.lane.b32.xlu0 %v1916, 48
        %v2744 = vpop.permute.xlu0 %2743
        %2745 = vrot.lane.b32.xlu0 %v1917, 48
        %v2746 = vpop.permute.xlu0 %2745
        %2747 = vrot.lane.b32.xlu0 %v1918, 48
        %v2748 = vpop.permute.xlu0 %2747
        %2749 = vrot.lane.b32.xlu0 %v1919, 48
        %v2750 = vpop.permute.xlu0 %2749
        %2751 = vrot.lane.b32.xlu0 %v1920, 48
        %v2752 = vpop.permute.xlu0 %2751
        %2753 = vrot.lane.b32.xlu0 %v1921, 48
        %v2754 = vpop.permute.xlu0 %2753
        %2755 = vrot.lane.b32.xlu0 %v1922, 48
        %v2756 = vpop.permute.xlu0 %2755
        %2757 = vrot.lane.b32.xlu0 %v1923, 48
        %v2758 = vpop.permute.xlu0 %2757
        %2759 = vrot.lane.b32.xlu0 %v1924, 48
        %v2760 = vpop.permute.xlu0 %2759
        %2761 = vrot.lane.b32.xlu0 %v1925, 48
        %v2762 = vpop.permute.xlu0 %2761
        %2763 = vrot.lane.b32.xlu0 %v1926, 48
        %v2764 = vpop.permute.xlu0 %2763
        %2765 = vrot.lane.b32.xlu0 %v2734, 48
        %v2766 = vpop.permute.xlu0 %2765
        %vm2783 = vcmask 425344
        %2784 = vst.msk [vmem:[#allocation2] sm:$0xff] %vm2783, %v2736
        %2785 = vst.msk [vmem:[#allocation2 + $0x8] sm:$0xff] %vm2783, %v2738
        %2786 = vst.msk [vmem:[#allocation2 + $0x10] sm:$0xff] %vm2783, %v2740
        %2787 = vst.msk [vmem:[#allocation2 + $0x18] sm:$0xff] %vm2783, %v2742
        %2788 = vst.msk [vmem:[#allocation2 + $0x20] sm:$0xff] %vm2783, %v2744
        %2789 = vst.msk [vmem:[#allocation2 + $0x28] sm:$0xff] %vm2783, %v2746
        %2790 = vst.msk [vmem:[#allocation2 + $0x30] sm:$0xff] %vm2783, %v2748
        %2791 = vst.msk [vmem:[#allocation2 + $0x38] sm:$0xff] %vm2783, %v2750
        %2792 = vst.msk [vmem:[#allocation2 + $0x40] sm:$0xff] %vm2783, %v2752
        %2793 = vst.msk [vmem:[#allocation2 + $0x48] sm:$0xff] %vm2783, %v2754
        %2794 = vst.msk [vmem:[#allocation2 + $0x50] sm:$0xff] %vm2783, %v2756
        %2795 = vst.msk [vmem:[#allocation2 + $0x58] sm:$0xff] %vm2783, %v2758
        %2796 = vst.msk [vmem:[#allocation2 + $0x60] sm:$0xff] %vm2783, %v2760
        %2797 = vst.msk [vmem:[#allocation2 + $0x68] sm:$0xff] %vm2783, %v2762
        %2798 = vst.msk [vmem:[#allocation2 + $0x70] sm:$0xff] %vm2783, %v2764
        %2799 = vst.msk [vmem:[#allocation2 + $0x78] sm:$0xff] %vm2783, %v2766
        %v2801 = vshrl.u32 %v454, 16
        %v2803 = vrot.slane %v2801, 4
        %v2804 = vshll.u32 %v454, 16
        %v2806 = vrot.slane %v2804, 5
        %v2807 = vor.u32 %v2803, %v2806
        %v2808 = vrot.slane %v2807, 4
        %v2810 = vshll.u32 %v455, 16
        %v2812 = vrot.slane %v2810, 5
        %v2813 = vsel %vm629, %v2808, %v2812
        %v2814 = vshrl.u32 %v455, 16
        %v2816 = vrot.slane %v2814, 4
        %v2817 = vor.u32 %v2816, %v2812
        %v2818 = vrot.slane %v2817, 4
        %v2820 = vshll.u32 %v456, 16
        %v2822 = vrot.slane %v2820, 5
        %v2823 = vsel %vm629, %v2818, %v2822
        %v2824 = vunpack.c.l.b16 %v2813
        %v2825 = vunpack.c.l.b16 %v2823
        %v2826 = vpack.c.b16 %v2825, %v2824
        %2827 = vrot.lane.b32.xlu0 %v2409, 52
        %v2828 = vpop.permute.xlu0 %2827
        %2829 = vrot.lane.b32.xlu0 %v2410, 52
        %v2830 = vpop.permute.xlu0 %2829
        %2831 = vrot.lane.b32.xlu0 %v2411, 52
        %v2832 = vpop.permute.xlu0 %2831
        %2833 = vrot.lane.b32.xlu0 %v2412, 52
        %v2834 = vpop.permute.xlu0 %2833
        %2835 = vrot.lane.b32.xlu0 %v2413, 52
        %v2836 = vpop.permute.xlu0 %2835
        %2837 = vrot.lane.b32.xlu0 %v2414, 52
        %v2838 = vpop.permute.xlu0 %2837
        %2839 = vrot.lane.b32.xlu0 %v2415, 52
        %v2840 = vpop.permute.xlu0 %2839
        %2841 = vrot.lane.b32.xlu0 %v2416, 52
        %v2842 = vpop.permute.xlu0 %2841
        %2843 = vrot.lane.b32.xlu0 %v2417, 52
        %v2844 = vpop.permute.xlu0 %2843
        %2845 = vrot.lane.b32.xlu0 %v2418, 52
        %v2846 = vpop.permute.xlu0 %2845
        %2847 = vrot.lane.b32.xlu0 %v2419, 52
        %v2848 = vpop.permute.xlu0 %2847
        %2849 = vrot.lane.b32.xlu0 %v2420, 52
        %v2850 = vpop.permute.xlu0 %2849
        %2851 = vrot.lane.b32.xlu0 %v2421, 52
        %v2852 = vpop.permute.xlu0 %2851
        %2853 = vrot.lane.b32.xlu0 %v2422, 52
        %v2854 = vpop.permute.xlu0 %2853
        %2855 = vrot.lane.b32.xlu0 %v2423, 52
        %v2856 = vpop.permute.xlu0 %2855
        %2857 = vrot.lane.b32.xlu0 %v2826, 52
        %v2858 = vpop.permute.xlu0 %2857
        %vm2875 = vcmask 458144
        %2876 = vst.msk [vmem:[#allocation2] sm:$0xff] %vm2875, %v2828
        %2877 = vst.msk [vmem:[#allocation2 + $0x8] sm:$0xff] %vm2875, %v2830
        %2878 = vst.msk [vmem:[#allocation2 + $0x10] sm:$0xff] %vm2875, %v2832
        %2879 = vst.msk [vmem:[#allocation2 + $0x18] sm:$0xff] %vm2875, %v2834
        %2880 = vst.msk [vmem:[#allocation2 + $0x20] sm:$0xff] %vm2875, %v2836
        %2881 = vst.msk [vmem:[#allocation2 + $0x28] sm:$0xff] %vm2875, %v2838
        %2882 = vst.msk [vmem:[#allocation2 + $0x30] sm:$0xff] %vm2875, %v2840
        %2883 = vst.msk [vmem:[#allocation2 + $0x38] sm:$0xff] %vm2875, %v2842
        %2884 = vst.msk [vmem:[#allocation2 + $0x40] sm:$0xff] %vm2875, %v2844
        %2885 = vst.msk [vmem:[#allocation2 + $0x48] sm:$0xff] %vm2875, %v2846
        %2886 = vst.msk [vmem:[#allocation2 + $0x50] sm:$0xff] %vm2875, %v2848
        %2887 = vst.msk [vmem:[#allocation2 + $0x58] sm:$0xff] %vm2875, %v2850
        %2888 = vst.msk [vmem:[#allocation2 + $0x60] sm:$0xff] %vm2875, %v2852
        %2889 = vst.msk [vmem:[#allocation2 + $0x68] sm:$0xff] %vm2875, %v2854
        %2890 = vst.msk [vmem:[#allocation2 + $0x70] sm:$0xff] %vm2875, %v2856
        %2891 = vst.msk [vmem:[#allocation2 + $0x78] sm:$0xff] %vm2875, %v2858
        %v2893 = vrot.slane %v454, 5
        %v2894 = vrot.slane %v2893, 4
        %v2895 = vrot.slane %v455, 5
        %v2896 = vsel %vm1145, %v2894, %v2895
        %v2897 = vrot.slane %v2895, 4
        %v2898 = vrot.slane %v456, 5
        %v2899 = vsel %vm1145, %v2897, %v2898
        %v2900 = vunpack.c.l.b16 %v2896
        %v2901 = vunpack.c.l.b16 %v2899
        %v2902 = vpack.c.b16 %v2901, %v2900
        %2903 = vrot.lane.b32.xlu0 %v2650, 56
        %v2904 = vpop.permute.xlu0 %2903
        %2905 = vrot.lane.b32.xlu0 %v2651, 56
        %v2906 = vpop.permute.xlu0 %2905
        %2907 = vrot.lane.b32.xlu0 %v2652, 56
        %v2908 = vpop.permute.xlu0 %2907
        %2909 = vrot.lane.b32.xlu0 %v2653, 56
        %v2910 = vpop.permute.xlu0 %2909
        %2911 = vrot.lane.b32.xlu0 %v2654, 56
        %v2912 = vpop.permute.xlu0 %2911
        %2913 = vrot.lane.b32.xlu0 %v2655, 56
        %v2914 = vpop.permute.xlu0 %2913
        %2915 = vrot.lane.b32.xlu0 %v2656, 56
        %v2916 = vpop.permute.xlu0 %2915
        %2917 = vrot.lane.b32.xlu0 %v2657, 56
        %v2918 = vpop.permute.xlu0 %2917
        %2919 = vrot.lane.b32.xlu0 %v2658, 56
        %v2920 = vpop.permute.xlu0 %2919
        %2921 = vrot.lane.b32.xlu0 %v2659, 56
        %v2922 = vpop.permute.xlu0 %2921
        %2923 = vrot.lane.b32.xlu0 %v2660, 56
        %v2924 = vpop.permute.xlu0 %2923
        %2925 = vrot.lane.b32.xlu0 %v2661, 56
        %v2926 = vpop.permute.xlu0 %2925
        %2927 = vrot.lane.b32.xlu0 %v2662, 56
        %v2928 = vpop.permute.xlu0 %2927
        %2929 = vrot.lane.b32.xlu0 %v2663, 56
        %v2930 = vpop.permute.xlu0 %2929
        %2931 = vrot.lane.b32.xlu0 %v2664, 56
        %v2932 = vpop.permute.xlu0 %2931
        %2933 = vrot.lane.b32.xlu0 %v2902, 56
        %v2934 = vpop.permute.xlu0 %2933
        %vm2951 = vcmask 490944
        %2952 = vst.msk [vmem:[#allocation2] sm:$0xff] %vm2951, %v2904
        %2953 = vst.msk [vmem:[#allocation2 + $0x8] sm:$0xff] %vm2951, %v2906
        %2954 = vst.msk [vmem:[#allocation2 + $0x10] sm:$0xff] %vm2951, %v2908
        %2955 = vst.msk [vmem:[#allocation2 + $0x18] sm:$0xff] %vm2951, %v2910
        %2956 = vst.msk [vmem:[#allocation2 + $0x20] sm:$0xff] %vm2951, %v2912
        %2957 = vst.msk [vmem:[#allocation2 + $0x28] sm:$0xff] %vm2951, %v2914
        %2958 = vst.msk [vmem:[#allocation2 + $0x30] sm:$0xff] %vm2951, %v2916
        %2959 = vst.msk [vmem:[#allocation2 + $0x38] sm:$0xff] %vm2951, %v2918
        %2960 = vst.msk [vmem:[#allocation2 + $0x40] sm:$0xff] %vm2951, %v2920
        %2961 = vst.msk [vmem:[#allocation2 + $0x48] sm:$0xff] %vm2951, %v2922
        %2962 = vst.msk [vmem:[#allocation2 + $0x50] sm:$0xff] %vm2951, %v2924
        %2963 = vst.msk [vmem:[#allocation2 + $0x58] sm:$0xff] %vm2951, %v2926
        %2964 = vst.msk [vmem:[#allocation2 + $0x60] sm:$0xff] %vm2951, %v2928
        %2965 = vst.msk [vmem:[#allocation2 + $0x68] sm:$0xff] %vm2951, %v2930
        %2966 = vst.msk [vmem:[#allocation2 + $0x70] sm:$0xff] %vm2951, %v2932
        %2967 = vst.msk [vmem:[#allocation2 + $0x78] sm:$0xff] %vm2951, %v2934
        %v2970 = vunpack.c.l.b16 %v457
        %v2971 = vunpack.c.l.b16 %v458
        %v2972 = vpack.c.b16 %v2971, %v2970
        %2973 = vrot.lane.b32.xlu0 %v1913, 60
        %v2974 = vpop.permute.xlu0 %2973
        %2975 = vrot.lane.b32.xlu0 %v1914, 60
        %v2976 = vpop.permute.xlu0 %2975
        %2977 = vrot.lane.b32.xlu0 %v1915, 60
        %v2978 = vpop.permute.xlu0 %2977
        %2979 = vrot.lane.b32.xlu0 %v1916, 60
        %v2980 = vpop.permute.xlu0 %2979
        %2981 = vrot.lane.b32.xlu0 %v1917, 60
        %v2982 = vpop.permute.xlu0 %2981
        %2983 = vrot.lane.b32.xlu0 %v1918, 60
        %v2984 = vpop.permute.xlu0 %2983
        %2985 = vrot.lane.b32.xlu0 %v1919, 60
        %v2986 = vpop.permute.xlu0 %2985
        %2987 = vrot.lane.b32.xlu0 %v1920, 60
        %v2988 = vpop.permute.xlu0 %2987
        %2989 = vrot.lane.b32.xlu0 %v1921, 60
        %v2990 = vpop.permute.xlu0 %2989
        %2991 = vrot.lane.b32.xlu0 %v1922, 60
        %v2992 = vpop.permute.xlu0 %2991
        %2993 = vrot.lane.b32.xlu0 %v1923, 60
        %v2994 = vpop.permute.xlu0 %2993
        %2995 = vrot.lane.b32.xlu0 %v1924, 60
        %v2996 = vpop.permute.xlu0 %2995
        %2997 = vrot.lane.b32.xlu0 %v1925, 60
        %v2998 = vpop.permute.xlu0 %2997
        %2999 = vrot.lane.b32.xlu0 %v1926, 60
        %v3000 = vpop.permute.xlu0 %2999
        %3001 = vrot.lane.b32.xlu0 %v2734, 60
        %v3002 = vpop.permute.xlu0 %3001
        %3003 = vrot.lane.b32.xlu0 %v2972, 60
        %v3004 = vpop.permute.xlu0 %3003
        %vm3021 = vcmask 523744
        %3022 = vst.msk [vmem:[#allocation2] sm:$0xff] %vm3021, %v2974
        %3023 = vst.msk [vmem:[#allocation2 + $0x8] sm:$0xff] %vm3021, %v2976
        %3024 = vst.msk [vmem:[#allocation2 + $0x10] sm:$0xff] %vm3021, %v2978
        %3025 = vst.msk [vmem:[#allocation2 + $0x18] sm:$0xff] %vm3021, %v2980
        %3026 = vst.msk [vmem:[#allocation2 + $0x20] sm:$0xff] %vm3021, %v2982
        %3027 = vst.msk [vmem:[#allocation2 + $0x28] sm:$0xff] %vm3021, %v2984
        %3028 = vst.msk [vmem:[#allocation2 + $0x30] sm:$0xff] %vm3021, %v2986
        %3029 = vst.msk [vmem:[#allocation2 + $0x38] sm:$0xff] %vm3021, %v2988
        %3030 = vst.msk [vmem:[#allocation2 + $0x40] sm:$0xff] %vm3021, %v2990
        %3031 = vst.msk [vmem:[#allocation2 + $0x48] sm:$0xff] %vm3021, %v2992
        %3032 = vst.msk [vmem:[#allocation2 + $0x50] sm:$0xff] %vm3021, %v2994
        %3033 = vst.msk [vmem:[#allocation2 + $0x58] sm:$0xff] %vm3021, %v2996
        %3034 = vst.msk [vmem:[#allocation2 + $0x60] sm:$0xff] %vm3021, %v2998
        %3035 = vst.msk [vmem:[#allocation2 + $0x68] sm:$0xff] %vm3021, %v3000
        %3036 = vst.msk [vmem:[#allocation2 + $0x70] sm:$0xff] %vm3021, %v3002
        %3037 = vst.msk [vmem:[#allocation2 + $0x78] sm:$0xff] %vm3021, %v3004
        %v3039 = vshrl.u32 %v457, 16
        %v3041 = vrot.slane %v3039, 4
        %v3042 = vshll.u32 %v457, 16
        %v3044 = vrot.slane %v3042, 5
        %v3045 = vor.u32 %v3041, %v3044
        %v3046 = vrot.slane %v3045, 4
        %v3048 = vshll.u32 %v458, 16
        %v3050 = vrot.slane %v3048, 5
        %v3051 = vsel %vm629, %v3046, %v3050
        %v3052 = vshrl.u32 %v458, 16
        %v3054 = vrot.slane %v3052, 4
        %v3055 = vor.u32 %v3054, %v3050
        %v3056 = vrot.slane %v3055, 4
        %v3058 = vshll.u32 %v459, 16
        %v3060 = vrot.slane %v3058, 5
        %v3061 = vsel %vm629, %v3056, %v3060
        %v3062 = vunpack.c.l.b16 %v3051
        %v3063 = vunpack.c.l.b16 %v3061
        %v3064 = vpack.c.b16 %v3063, %v3062
        %3065 = vrot.lane.b32.xlu0 %v2410, 64
        %v3066 = vpop.permute.xlu0 %3065
        %3067 = vrot.lane.b32.xlu0 %v2411, 64
        %v3068 = vpop.permute.xlu0 %3067
        %3069 = vrot.lane.b32.xlu0 %v2412, 64
        %v3070 = vpop.permute.xlu0 %3069
        %3071 = vrot.lane.b32.xlu0 %v2413, 64
        %v3072 = vpop.permute.xlu0 %3071
        %3073 = vrot.lane.b32.xlu0 %v2414, 64
        %v3074 = vpop.permute.xlu0 %3073
        %3075 = vrot.lane.b32.xlu0 %v2415, 64
        %v3076 = vpop.permute.xlu0 %3075
        %3077 = vrot.lane.b32.xlu0 %v2416, 64
        %v3078 = vpop.permute.xlu0 %3077
        %3079 = vrot.lane.b32.xlu0 %v2417, 64
        %v3080 = vpop.permute.xlu0 %3079
        %3081 = vrot.lane.b32.xlu0 %v2418, 64
        %v3082 = vpop.permute.xlu0 %3081
        %3083 = vrot.lane.b32.xlu0 %v2419, 64
        %v3084 = vpop.permute.xlu0 %3083
        %3085 = vrot.lane.b32.xlu0 %v2420, 64
        %v3086 = vpop.permute.xlu0 %3085
        %3087 = vrot.lane.b32.xlu0 %v2421, 64
        %v3088 = vpop.permute.xlu0 %3087
        %3089 = vrot.lane.b32.xlu0 %v2422, 64
        %v3090 = vpop.permute.xlu0 %3089
        %3091 = vrot.lane.b32.xlu0 %v2423, 64
        %v3092 = vpop.permute.xlu0 %3091
        %3093 = vrot.lane.b32.xlu0 %v2826, 64
        %v3094 = vpop.permute.xlu0 %3093
        %3095 = vrot.lane.b32.xlu0 %v3064, 64
        %v3096 = vpop.permute.xlu0 %3095
        %vm3113 = vcmask 556544
        %3114 = vst.msk [vmem:[#allocation2] sm:$0xff] %vm3113, %v3066
        %3115 = vst.msk [vmem:[#allocation2 + $0x8] sm:$0xff] %vm3113, %v3068
        %3116 = vst.msk [vmem:[#allocation2 + $0x10] sm:$0xff] %vm3113, %v3070
        %3117 = vst.msk [vmem:[#allocation2 + $0x18] sm:$0xff] %vm3113, %v3072
        %3118 = vst.msk [vmem:[#allocation2 + $0x20] sm:$0xff] %vm3113, %v3074
        %3119 = vst.msk [vmem:[#allocation2 + $0x28] sm:$0xff] %vm3113, %v3076
        %3120 = vst.msk [vmem:[#allocation2 + $0x30] sm:$0xff] %vm3113, %v3078
        %3121 = vst.msk [vmem:[#allocation2 + $0x38] sm:$0xff] %vm3113, %v3080
        %3122 = vst.msk [vmem:[#allocation2 + $0x40] sm:$0xff] %vm3113, %v3082
        %3123 = vst.msk [vmem:[#allocation2 + $0x48] sm:$0xff] %vm3113, %v3084
        %3124 = vst.msk [vmem:[#allocation2 + $0x50] sm:$0xff] %vm3113, %v3086
        %3125 = vst.msk [vmem:[#allocation2 + $0x58] sm:$0xff] %vm3113, %v3088
        %3126 = vst.msk [vmem:[#allocation2 + $0x60] sm:$0xff] %vm3113, %v3090
        %3127 = vst.msk [vmem:[#allocation2 + $0x68] sm:$0xff] %vm3113, %v3092
        %3128 = vst.msk [vmem:[#allocation2 + $0x70] sm:$0xff] %vm3113, %v3094
        %3129 = vst.msk [vmem:[#allocation2 + $0x78] sm:$0xff] %vm3113, %v3096
        %v3131 = vrot.slane %v457, 5
        %v3132 = vrot.slane %v3131, 4
        %v3133 = vrot.slane %v458, 5
        %v3134 = vsel %vm1145, %v3132, %v3133
        %v3135 = vrot.slane %v3133, 4
        %v3136 = vrot.slane %v459, 5
        %v3137 = vsel %vm1145, %v3135, %v3136
        %v3138 = vunpack.c.l.b16 %v3134
        %v3139 = vunpack.c.l.b16 %v3137
        %v3140 = vpack.c.b16 %v3139, %v3138
        %3141 = vrot.lane.b32.xlu0 %v2651, 68
        %v3142 = vpop.permute.xlu0 %3141
        %3143 = vrot.lane.b32.xlu0 %v2652, 68
        %v3144 = vpop.permute.xlu0 %3143
        %3145 = vrot.lane.b32.xlu0 %v2653, 68
        %v3146 = vpop.permute.xlu0 %3145
        %3147 = vrot.lane.b32.xlu0 %v2654, 68
        %v3148 = vpop.permute.xlu0 %3147
        %3149 = vrot.lane.b32.xlu0 %v2655, 68
        %v3150 = vpop.permute.xlu0 %3149
        %3151 = vrot.lane.b32.xlu0 %v2656, 68
        %v3152 = vpop.permute.xlu0 %3151
        %3153 = vrot.lane.b32.xlu0 %v2657, 68
        %v3154 = vpop.permute.xlu0 %3153
        %3155 = vrot.lane.b32.xlu0 %v2658, 68
        %v3156 = vpop.permute.xlu0 %3155
        %3157 = vrot.lane.b32.xlu0 %v2659, 68
        %v3158 = vpop.permute.xlu0 %3157
        %3159 = vrot.lane.b32.xlu0 %v2660, 68
        %v3160 = vpop.permute.xlu0 %3159
        %3161 = vrot.lane.b32.xlu0 %v2661, 68
        %v3162 = vpop.permute.xlu0 %3161
        %3163 = vrot.lane.b32.xlu0 %v2662, 68
        %v3164 = vpop.permute.xlu0 %3163
        %3165 = vrot.lane.b32.xlu0 %v2663, 68
        %v3166 = vpop.permute.xlu0 %3165
        %3167 = vrot.lane.b32.xlu0 %v2664, 68
        %v3168 = vpop.permute.xlu0 %3167
        %3169 = vrot.lane.b32.xlu0 %v2902, 68
        %v3170 = vpop.permute.xlu0 %3169
        %3171 = vrot.lane.b32.xlu0 %v3140, 68
        %v3172 = vpop.permute.xlu0 %3171
        %vm3189 = vcmask 589344
        %3190 = vst.msk [vmem:[#allocation2] sm:$0xff] %vm3189, %v3142
        %3191 = vst.msk [vmem:[#allocation2 + $0x8] sm:$0xff] %vm3189, %v3144
        %3192 = vst.msk [vmem:[#allocation2 + $0x10] sm:$0xff] %vm3189, %v3146
        %3193 = vst.msk [vmem:[#allocation2 + $0x18] sm:$0xff] %vm3189, %v3148
        %3194 = vst.msk [vmem:[#allocation2 + $0x20] sm:$0xff] %vm3189, %v3150
        %3195 = vst.msk [vmem:[#allocation2 + $0x28] sm:$0xff] %vm3189, %v3152
        %3196 = vst.msk [vmem:[#allocation2 + $0x30] sm:$0xff] %vm3189, %v3154
        %3197 = vst.msk [vmem:[#allocation2 + $0x38] sm:$0xff] %vm3189, %v3156
        %3198 = vst.msk [vmem:[#allocation2 + $0x40] sm:$0xff] %vm3189, %v3158
        %3199 = vst.msk [vmem:[#allocation2 + $0x48] sm:$0xff] %vm3189, %v3160
        %3200 = vst.msk [vmem:[#allocation2 + $0x50] sm:$0xff] %vm3189, %v3162
        %3201 = vst.msk [vmem:[#allocation2 + $0x58] sm:$0xff] %vm3189, %v3164
        %3202 = vst.msk [vmem:[#allocation2 + $0x60] sm:$0xff] %vm3189, %v3166
        %3203 = vst.msk [vmem:[#allocation2 + $0x68] sm:$0xff] %vm3189, %v3168
        %3204 = vst.msk [vmem:[#allocation2 + $0x70] sm:$0xff] %vm3189, %v3170
        %3205 = vst.msk [vmem:[#allocation2 + $0x78] sm:$0xff] %vm3189, %v3172
        %v3238 = vunpack.c.l.b16 %v460
        %v3239 = vunpack.c.l.b16 %v461
        %v3240 = vunpack.c.l.b16 %v463
        %v3241 = vunpack.c.l.b16 %v464
        %v3242 = vunpack.c.l.b16 %v466
        %v3243 = vunpack.c.l.b16 %v467
        %v3244 = vunpack.c.l.b16 %v469
        %v3245 = vunpack.c.l.b16 %v470
        %v3246 = vunpack.c.l.b16 %v472
        %v3247 = vunpack.c.l.b16 %v473
        %v3248 = vunpack.c.l.b16 %v475
        %v3249 = vunpack.c.l.b16 %v476
        %v3250 = vunpack.c.l.b16 %v478
        %v3251 = vunpack.c.l.b16 %v479
        %v3252 = vunpack.c.l.b16 %v481
        %v3253 = vunpack.c.l.b16 %v482
        %v3254 = vunpack.c.l.b16 %v484
        %v3255 = vunpack.c.l.b16 %v485
        %v3256 = vunpack.c.l.b16 %v487
        %v3257 = vunpack.c.l.b16 %v488
        %v3258 = vunpack.c.l.b16 %v490
        %v3259 = vunpack.c.l.b16 %v491
        %v3260 = vunpack.c.l.b16 %v493
        %v3261 = vunpack.c.l.b16 %v494
        %v3262 = vunpack.c.l.b16 %v496
        %v3263 = vunpack.c.l.b16 %v497
        %v3264 = vunpack.c.l.b16 %v499
        %v3265 = vunpack.c.l.b16 %v500
        %v3266 = vunpack.c.l.b16 %v502
        %v3267 = vunpack.c.l.b16 %v503
        %v3268 = vunpack.c.l.b16 %v505
        %v3269 = vunpack.c.l.b16 %v506
        %v3270 = vpack.c.b16 %v3239, %v3238
        %v3271 = vpack.c.b16 %v3241, %v3240
        %v3272 = vpack.c.b16 %v3243, %v3242
        %v3273 = vpack.c.b16 %v3245, %v3244
        %v3274 = vpack.c.b16 %v3247, %v3246
        %v3275 = vpack.c.b16 %v3249, %v3248
        %v3276 = vpack.c.b16 %v3251, %v3250
        %v3277 = vpack.c.b16 %v3253, %v3252
        %v3278 = vpack.c.b16 %v3255, %v3254
        %v3279 = vpack.c.b16 %v3257, %v3256
        %v3280 = vpack.c.b16 %v3259, %v3258
        %v3281 = vpack.c.b16 %v3261, %v3260
        %v3282 = vpack.c.b16 %v3263, %v3262
        %v3283 = vpack.c.b16 %v3265, %v3264
        %v3284 = vpack.c.b16 %v3267, %v3266
        %v3285 = vpack.c.b16 %v3269, %v3268
        %3286 = vrot.lane.b32.xlu0 %v3270, 72
        %v3287 = vpop.permute.xlu0 %3286
        %3288 = vrot.lane.b32.xlu0 %v3271, 72
        %v3289 = vpop.permute.xlu0 %3288
        %3290 = vrot.lane.b32.xlu0 %v3272, 72
        %v3291 = vpop.permute.xlu0 %3290
        %3292 = vrot.lane.b32.xlu0 %v3273, 72
        %v3293 = vpop.permute.xlu0 %3292
        %3294 = vrot.lane.b32.xlu0 %v3274, 72
        %v3295 = vpop.permute.xlu0 %3294
        %3296 = vrot.lane.b32.xlu0 %v3275, 72
        %v3297 = vpop.permute.xlu0 %3296
        %3298 = vrot.lane.b32.xlu0 %v3276, 72
        %v3299 = vpop.permute.xlu0 %3298
        %3300 = vrot.lane.b32.xlu0 %v3277, 72
        %v3301 = vpop.permute.xlu0 %3300
        %3302 = vrot.lane.b32.xlu0 %v3278, 72
        %v3303 = vpop.permute.xlu0 %3302
        %3304 = vrot.lane.b32.xlu0 %v3279, 72
        %v3305 = vpop.permute.xlu0 %3304
        %3306 = vrot.lane.b32.xlu0 %v3280, 72
        %v3307 = vpop.permute.xlu0 %3306
        %3308 = vrot.lane.b32.xlu0 %v3281, 72
        %v3309 = vpop.permute.xlu0 %3308
        %3310 = vrot.lane.b32.xlu0 %v3282, 72
        %v3311 = vpop.permute.xlu0 %3310
        %3312 = vrot.lane.b32.xlu0 %v3283, 72
        %v3313 = vpop.permute.xlu0 %3312
        %3314 = vrot.lane.b32.xlu0 %v3284, 72
        %v3315 = vpop.permute.xlu0 %3314
        %3316 = vrot.lane.b32.xlu0 %v3285, 72
        %v3317 = vpop.permute.xlu0 %3316
        %vm3334 = vcmask 622144
        %3335 = vst.msk [vmem:[#allocation2] sm:$0xff] %vm3334, %v3287
        %3336 = vst.msk [vmem:[#allocation2 + $0x8] sm:$0xff] %vm3334, %v3289
        %3337 = vst.msk [vmem:[#allocation2 + $0x10] sm:$0xff] %vm3334, %v3291
        %3338 = vst.msk [vmem:[#allocation2 + $0x18] sm:$0xff] %vm3334, %v3293
        %3339 = vst.msk [vmem:[#allocation2 + $0x20] sm:$0xff] %vm3334, %v3295
        %3340 = vst.msk [vmem:[#allocation2 + $0x28] sm:$0xff] %vm3334, %v3297
        %3341 = vst.msk [vmem:[#allocation2 + $0x30] sm:$0xff] %vm3334, %v3299
        %3342 = vst.msk [vmem:[#allocation2 + $0x38] sm:$0xff] %vm3334, %v3301
        %3343 = vst.msk [vmem:[#allocation2 + $0x40] sm:$0xff] %vm3334, %v3303
        %3344 = vst.msk [vmem:[#allocation2 + $0x48] sm:$0xff] %vm3334, %v3305
        %3345 = vst.msk [vmem:[#allocation2 + $0x50] sm:$0xff] %vm3334, %v3307
        %3346 = vst.msk [vmem:[#allocation2 + $0x58] sm:$0xff] %vm3334, %v3309
        %3347 = vst.msk [vmem:[#allocation2 + $0x60] sm:$0xff] %vm3334, %v3311
        %3348 = vst.msk [vmem:[#allocation2 + $0x68] sm:$0xff] %vm3334, %v3313
        %3349 = vst.msk [vmem:[#allocation2 + $0x70] sm:$0xff] %vm3334, %v3315
        %3350 = vst.msk [vmem:[#allocation2 + $0x78] sm:$0xff] %vm3334, %v3317
        %v3352 = vshrl.u32 %v460, 16
        %v3354 = vrot.slane %v3352, 4
        %v3355 = vshll.u32 %v460, 16
        %v3357 = vrot.slane %v3355, 5
        %v3358 = vor.u32 %v3354, %v3357
        %v3359 = vrot.slane %v3358, 4
        %v3361 = vshll.u32 %v461, 16
        %v3363 = vrot.slane %v3361, 5
        %v3364 = vsel %vm629, %v3359, %v3363
        %v3365 = vshrl.u32 %v461, 16
        %v3367 = vrot.slane %v3365, 4
        %v3368 = vor.u32 %v3367, %v3363
        %v3369 = vrot.slane %v3368, 4
        %v3371 = vshll.u32 %v462, 16
        %v3373 = vrot.slane %v3371, 5
        %v3374 = vsel %vm629, %v3369, %v3373
        %v3376 = vshrl.u32 %v463, 16
        %v3378 = vrot.slane %v3376, 4
        %v3379 = vshll.u32 %v463, 16
        %v3381 = vrot.slane %v3379, 5
        %v3382 = vor.u32 %v3378, %v3381
        %v3383 = vrot.slane %v3382, 4
        %v3385 = vshll.u32 %v464, 16
        %v3387 = vrot.slane %v3385, 5
        %v3388 = vsel %vm629, %v3383, %v3387
        %v3389 = vshrl.u32 %v464, 16
        %v3391 = vrot.slane %v3389, 4
        %v3392 = vor.u32 %v3391, %v3387
        %v3393 = vrot.slane %v3392, 4
        %v3395 = vshll.u32 %v465, 16
        %v3397 = vrot.slane %v3395, 5
        %v3398 = vsel %vm629, %v3393, %v3397
        %v3400 = vshrl.u32 %v466, 16
        %v3402 = vrot.slane %v3400, 4
        %v3403 = vshll.u32 %v466, 16
        %v3405 = vrot.slane %v3403, 5
        %v3406 = vor.u32 %v3402, %v3405
        %v3407 = vrot.slane %v3406, 4
        %v3409 = vshll.u32 %v467, 16
        %v3411 = vrot.slane %v3409, 5
        %v3412 = vsel %vm629, %v3407, %v3411
        %v3413 = vshrl.u32 %v467, 16
        %v3415 = vrot.slane %v3413, 4
        %v3416 = vor.u32 %v3415, %v3411
        %v3417 = vrot.slane %v3416, 4
        %v3419 = vshll.u32 %v468, 16
        %v3421 = vrot.slane %v3419, 5
        %v3422 = vsel %vm629, %v3417, %v3421
        %v3424 = vshrl.u32 %v469, 16
        %v3426 = vrot.slane %v3424, 4
        %v3427 = vshll.u32 %v469, 16
        %v3429 = vrot.slane %v3427, 5
        %v3430 = vor.u32 %v3426, %v3429
        %v3431 = vrot.slane %v3430, 4
        %v3433 = vshll.u32 %v470, 16
        %v3435 = vrot.slane %v3433, 5
        %v3436 = vsel %vm629, %v3431, %v3435
        %v3437 = vshrl.u32 %v470, 16
        %v3439 = vrot.slane %v3437, 4
        %v3440 = vor.u32 %v3439, %v3435
        %v3441 = vrot.slane %v3440, 4
        %v3443 = vshll.u32 %v471, 16
        %v3445 = vrot.slane %v3443, 5
        %v3446 = vsel %vm629, %v3441, %v3445
        %v3448 = vshrl.u32 %v472, 16
        %v3450 = vrot.slane %v3448, 4
        %v3451 = vshll.u32 %v472, 16
        %v3453 = vrot.slane %v3451, 5
        %v3454 = vor.u32 %v3450, %v3453
        %v3455 = vrot.slane %v3454, 4
        %v3457 = vshll.u32 %v473, 16
        %v3459 = vrot.slane %v3457, 5
        %v3460 = vsel %vm629, %v3455, %v3459
        %v3461 = vshrl.u32 %v473, 16
        %v3463 = vrot.slane %v3461, 4
        %v3464 = vor.u32 %v3463, %v3459
        %v3465 = vrot.slane %v3464, 4
        %v3467 = vshll.u32 %v474, 16
        %v3469 = vrot.slane %v3467, 5
        %v3470 = vsel %vm629, %v3465, %v3469
        %v3472 = vshrl.u32 %v475, 16
        %v3474 = vrot.slane %v3472, 4
        %v3475 = vshll.u32 %v475, 16
        %v3477 = vrot.slane %v3475, 5
        %v3478 = vor.u32 %v3474, %v3477
        %v3479 = vrot.slane %v3478, 4
        %v3481 = vshll.u32 %v476, 16
        %v3483 = vrot.slane %v3481, 5
        %v3484 = vsel %vm629, %v3479, %v3483
        %v3485 = vshrl.u32 %v476, 16
        %v3487 = vrot.slane %v3485, 4
        %v3488 = vor.u32 %v3487, %v3483
        %v3489 = vrot.slane %v3488, 4
        %v3491 = vshll.u32 %v477, 16
        %v3493 = vrot.slane %v3491, 5
        %v3494 = vsel %vm629, %v3489, %v3493
        %v3496 = vshrl.u32 %v478, 16
        %v3498 = vrot.slane %v3496, 4
        %v3499 = vshll.u32 %v478, 16
        %v3501 = vrot.slane %v3499, 5
        %v3502 = vor.u32 %v3498, %v3501
        %v3503 = vrot.slane %v3502, 4
        %v3505 = vshll.u32 %v479, 16
        %v3507 = vrot.slane %v3505, 5
        %v3508 = vsel %vm629, %v3503, %v3507
        %v3509 = vshrl.u32 %v479, 16
        %v3511 = vrot.slane %v3509, 4
        %v3512 = vor.u32 %v3511, %v3507
        %v3513 = vrot.slane %v3512, 4
        %v3515 = vshll.u32 %v480, 16
        %v3517 = vrot.slane %v3515, 5
        %v3518 = vsel %vm629, %v3513, %v3517
        %v3520 = vshrl.u32 %v481, 16
        %v3522 = vrot.slane %v3520, 4
        %v3523 = vshll.u32 %v481, 16
        %v3525 = vrot.slane %v3523, 5
        %v3526 = vor.u32 %v3522, %v3525
        %v3527 = vrot.slane %v3526, 4
        %v3529 = vshll.u32 %v482, 16
        %v3531 = vrot.slane %v3529, 5
        %v3532 = vsel %vm629, %v3527, %v3531
        %v3533 = vshrl.u32 %v482, 16
        %v3535 = vrot.slane %v3533, 4
        %v3536 = vor.u32 %v3535, %v3531
        %v3537 = vrot.slane %v3536, 4
        %v3539 = vshll.u32 %v483, 16
        %v3541 = vrot.slane %v3539, 5
        %v3542 = vsel %vm629, %v3537, %v3541
        %v3544 = vshrl.u32 %v484, 16
        %v3546 = vrot.slane %v3544, 4
        %v3547 = vshll.u32 %v484, 16
        %v3549 = vrot.slane %v3547, 5
        %v3550 = vor.u32 %v3546, %v3549
        %v3551 = vrot.slane %v3550, 4
        %v3553 = vshll.u32 %v485, 16
        %v3555 = vrot.slane %v3553, 5
        %v3556 = vsel %vm629, %v3551, %v3555
        %v3557 = vshrl.u32 %v485, 16
        %v3559 = vrot.slane %v3557, 4
        %v3560 = vor.u32 %v3559, %v3555
        %v3561 = vrot.slane %v3560, 4
        %v3563 = vshll.u32 %v486, 16
        %v3565 = vrot.slane %v3563, 5
        %v3566 = vsel %vm629, %v3561, %v3565
        %v3568 = vshrl.u32 %v487, 16
        %v3570 = vrot.slane %v3568, 4
        %v3571 = vshll.u32 %v487, 16
        %v3573 = vrot.slane %v3571, 5
        %v3574 = vor.u32 %v3570, %v3573
        %v3575 = vrot.slane %v3574, 4
        %v3577 = vshll.u32 %v488, 16
        %v3579 = vrot.slane %v3577, 5
        %v3580 = vsel %vm629, %v3575, %v3579
        %v3581 = vshrl.u32 %v488, 16
        %v3583 = vrot.slane %v3581, 4
        %v3584 = vor.u32 %v3583, %v3579
        %v3585 = vrot.slane %v3584, 4
        %v3587 = vshll.u32 %v489, 16
        %v3589 = vrot.slane %v3587, 5
        %v3590 = vsel %vm629, %v3585, %v3589
        %v3592 = vshrl.u32 %v490, 16
        %v3594 = vrot.slane %v3592, 4
        %v3595 = vshll.u32 %v490, 16
        %v3597 = vrot.slane %v3595, 5
        %v3598 = vor.u32 %v3594, %v3597
        %v3599 = vrot.slane %v3598, 4
        %v3601 = vshll.u32 %v491, 16
        %v3603 = vrot.slane %v3601, 5
        %v3604 = vsel %vm629, %v3599, %v3603
        %v3605 = vshrl.u32 %v491, 16
        %v3607 = vrot.slane %v3605, 4
        %v3608 = vor.u32 %v3607, %v3603
        %v3609 = vrot.slane %v3608, 4
        %v3611 = vshll.u32 %v492, 16
        %v3613 = vrot.slane %v3611, 5
        %v3614 = vsel %vm629, %v3609, %v3613
        %v3616 = vshrl.u32 %v493, 16
        %v3618 = vrot.slane %v3616, 4
        %v3619 = vshll.u32 %v493, 16
        %v3621 = vrot.slane %v3619, 5
        %v3622 = vor.u32 %v3618, %v3621
        %v3623 = vrot.slane %v3622, 4
        %v3625 = vshll.u32 %v494, 16
        %v3627 = vrot.slane %v3625, 5
        %v3628 = vsel %vm629, %v3623, %v3627
        %v3629 = vshrl.u32 %v494, 16
        %v3631 = vrot.slane %v3629, 4
        %v3632 = vor.u32 %v3631, %v3627
        %v3633 = vrot.slane %v3632, 4
        %v3635 = vshll.u32 %v495, 16
        %v3637 = vrot.slane %v3635, 5
        %v3638 = vsel %vm629, %v3633, %v3637
        %v3640 = vshrl.u32 %v496, 16
        %v3642 = vrot.slane %v3640, 4
        %v3643 = vshll.u32 %v496, 16
        %v3645 = vrot.slane %v3643, 5
        %v3646 = vor.u32 %v3642, %v3645
        %v3647 = vrot.slane %v3646, 4
        %v3649 = vshll.u32 %v497, 16
        %v3651 = vrot.slane %v3649, 5
        %v3652 = vsel %vm629, %v3647, %v3651
        %v3653 = vshrl.u32 %v497, 16
        %v3655 = vrot.slane %v3653, 4
        %v3656 = vor.u32 %v3655, %v3651
        %v3657 = vrot.slane %v3656, 4
        %v3659 = vshll.u32 %v498, 16
        %v3661 = vrot.slane %v3659, 5
        %v3662 = vsel %vm629, %v3657, %v3661
        %v3664 = vshrl.u32 %v499, 16
        %v3666 = vrot.slane %v3664, 4
        %v3667 = vshll.u32 %v499, 16
        %v3669 = vrot.slane %v3667, 5
        %v3670 = vor.u32 %v3666, %v3669
        %v3671 = vrot.slane %v3670, 4
        %v3673 = vshll.u32 %v500, 16
        %v3675 = vrot.slane %v3673, 5
        %v3676 = vsel %vm629, %v3671, %v3675
        %v3677 = vshrl.u32 %v500, 16
        %v3679 = vrot.slane %v3677, 4
        %v3680 = vor.u32 %v3679, %v3675
        %v3681 = vrot.slane %v3680, 4
        %v3683 = vshll.u32 %v501, 16
        %v3685 = vrot.slane %v3683, 5
        %v3686 = vsel %vm629, %v3681, %v3685
        %v3688 = vshrl.u32 %v502, 16
        %v3690 = vrot.slane %v3688, 4
        %v3691 = vshll.u32 %v502, 16
        %v3693 = vrot.slane %v3691, 5
        %v3694 = vor.u32 %v3690, %v3693
        %v3695 = vrot.slane %v3694, 4
        %v3697 = vshll.u32 %v503, 16
        %v3699 = vrot.slane %v3697, 5
        %v3700 = vsel %vm629, %v3695, %v3699
        %v3701 = vshrl.u32 %v503, 16
        %v3703 = vrot.slane %v3701, 4
        %v3704 = vor.u32 %v3703, %v3699
        %v3705 = vrot.slane %v3704, 4
        %v3707 = vshll.u32 %v504, 16
        %v3709 = vrot.slane %v3707, 5
        %v3710 = vsel %vm629, %v3705, %v3709
        %v3712 = vshrl.u32 %v505, 16
        %v3714 = vrot.slane %v3712, 4
        %v3715 = vshll.u32 %v505, 16
        %v3717 = vrot.slane %v3715, 5
        %v3718 = vor.u32 %v3714, %v3717
        %v3719 = vrot.slane %v3718, 4
        %v3721 = vshll.u32 %v506, 16
        %v3723 = vrot.slane %v3721, 5
        %v3724 = vsel %vm629, %v3719, %v3723
        %v3725 = vshrl.u32 %v506, 16
        %v3727 = vrot.slane %v3725, 4
        %v3728 = vor.u32 %v3727, %v3723
        %v3729 = vrot.slane %v3728, 4
        %v3731 = vshll.u32 %v507, 16
        %v3733 = vrot.slane %v3731, 5
        %v3734 = vsel %vm629, %v3729, %v3733
        %v3735 = vunpack.c.l.b16 %v3364
        %v3736 = vunpack.c.l.b16 %v3374
        %v3737 = vunpack.c.l.b16 %v3388
        %v3738 = vunpack.c.l.b16 %v3398
        %v3739 = vunpack.c.l.b16 %v3412
        %v3740 = vunpack.c.l.b16 %v3422
        %v3741 = vunpack.c.l.b16 %v3436
        %v3742 = vunpack.c.l.b16 %v3446
        %v3743 = vunpack.c.l.b16 %v3460
        %v3744 = vunpack.c.l.b16 %v3470
        %v3745 = vunpack.c.l.b16 %v3484
        %v3746 = vunpack.c.l.b16 %v3494
        %v3747 = vunpack.c.l.b16 %v3508
        %v3748 = vunpack.c.l.b16 %v3518
        %v3749 = vunpack.c.l.b16 %v3532
        %v3750 = vunpack.c.l.b16 %v3542
        %v3751 = vunpack.c.l.b16 %v3556
        %v3752 = vunpack.c.l.b16 %v3566
        %v3753 = vunpack.c.l.b16 %v3580
        %v3754 = vunpack.c.l.b16 %v3590
        %v3755 = vunpack.c.l.b16 %v3604
        %v3756 = vunpack.c.l.b16 %v3614
        %v3757 = vunpack.c.l.b16 %v3628
        %v3758 = vunpack.c.l.b16 %v3638
        %v3759 = vunpack.c.l.b16 %v3652
        %v3760 = vunpack.c.l.b16 %v3662
        %v3761 = vunpack.c.l.b16 %v3676
        %v3762 = vunpack.c.l.b16 %v3686
        %v3763 = vunpack.c.l.b16 %v3700
        %v3764 = vunpack.c.l.b16 %v3710
        %v3765 = vunpack.c.l.b16 %v3724
        %v3766 = vunpack.c.l.b16 %v3734
        %v3767 = vpack.c.b16 %v3736, %v3735
        %v3768 = vpack.c.b16 %v3738, %v3737
        %v3769 = vpack.c.b16 %v3740, %v3739
        %v3770 = vpack.c.b16 %v3742, %v3741
        %v3771 = vpack.c.b16 %v3744, %v3743
        %v3772 = vpack.c.b16 %v3746, %v3745
        %v3773 = vpack.c.b16 %v3748, %v3747
        %v3774 = vpack.c.b16 %v3750, %v3749
        %v3775 = vpack.c.b16 %v3752, %v3751
        %v3776 = vpack.c.b16 %v3754, %v3753
        %v3777 = vpack.c.b16 %v3756, %v3755
        %v3778 = vpack.c.b16 %v3758, %v3757
        %v3779 = vpack.c.b16 %v3760, %v3759
        %v3780 = vpack.c.b16 %v3762, %v3761
        %v3781 = vpack.c.b16 %v3764, %v3763
        %v3782 = vpack.c.b16 %v3766, %v3765
        %3783 = vrot.lane.b32.xlu0 %v3767, 76
        %v3784 = vpop.permute.xlu0 %3783
        %3785 = vrot.lane.b32.xlu0 %v3768, 76
        %v3786 = vpop.permute.xlu0 %3785
        %3787 = vrot.lane.b32.xlu0 %v3769, 76
        %v3788 = vpop.permute.xlu0 %3787
        %3789 = vrot.lane.b32.xlu0 %v3770, 76
        %v3790 = vpop.permute.xlu0 %3789
        %3791 = vrot.lane.b32.xlu0 %v3771, 76
        %v3792 = vpop.permute.xlu0 %3791
        %3793 = vrot.lane.b32.xlu0 %v3772, 76
        %v3794 = vpop.permute.xlu0 %3793
        %3795 = vrot.lane.b32.xlu0 %v3773, 76
        %v3796 = vpop.permute.xlu0 %3795
        %3797 = vrot.lane.b32.xlu0 %v3774, 76
        %v3798 = vpop.permute.xlu0 %3797
        %3799 = vrot.lane.b32.xlu0 %v3775, 76
        %v3800 = vpop.permute.xlu0 %3799
        %3801 = vrot.lane.b32.xlu0 %v3776, 76
        %v3802 = vpop.permute.xlu0 %3801
        %3803 = vrot.lane.b32.xlu0 %v3777, 76
        %v3804 = vpop.permute.xlu0 %3803
        %3805 = vrot.lane.b32.xlu0 %v3778, 76
        %v3806 = vpop.permute.xlu0 %3805
        %3807 = vrot.lane.b32.xlu0 %v3779, 76
        %v3808 = vpop.permute.xlu0 %3807
        %3809 = vrot.lane.b32.xlu0 %v3780, 76
        %v3810 = vpop.permute.xlu0 %3809
        %3811 = vrot.lane.b32.xlu0 %v3781, 76
        %v3812 = vpop.permute.xlu0 %3811
        %3813 = vrot.lane.b32.xlu0 %v3782, 76
        %v3814 = vpop.permute.xlu0 %3813
        %vm3831 = vcmask 654944
        %3832 = vst.msk [vmem:[#allocation2] sm:$0xff] %vm3831, %v3784
        %3833 = vst.msk [vmem:[#allocation2 + $0x8] sm:$0xff] %vm3831, %v3786
        %3834 = vst.msk [vmem:[#allocation2 + $0x10] sm:$0xff] %vm3831, %v3788
        %3835 = vst.msk [vmem:[#allocation2 + $0x18] sm:$0xff] %vm3831, %v3790
        %3836 = vst.msk [vmem:[#allocation2 + $0x20] sm:$0xff] %vm3831, %v3792
        %3837 = vst.msk [vmem:[#allocation2 + $0x28] sm:$0xff] %vm3831, %v3794
        %3838 = vst.msk [vmem:[#allocation2 + $0x30] sm:$0xff] %vm3831, %v3796
        %3839 = vst.msk [vmem:[#allocation2 + $0x38] sm:$0xff] %vm3831, %v3798
        %3840 = vst.msk [vmem:[#allocation2 + $0x40] sm:$0xff] %vm3831, %v3800
        %3841 = vst.msk [vmem:[#allocation2 + $0x48] sm:$0xff] %vm3831, %v3802
        %3842 = vst.msk [vmem:[#allocation2 + $0x50] sm:$0xff] %vm3831, %v3804
        %3843 = vst.msk [vmem:[#allocation2 + $0x58] sm:$0xff] %vm3831, %v3806
        %3844 = vst.msk [vmem:[#allocation2 + $0x60] sm:$0xff] %vm3831, %v3808
        %3845 = vst.msk [vmem:[#allocation2 + $0x68] sm:$0xff] %vm3831, %v3810
        %3846 = vst.msk [vmem:[#allocation2 + $0x70] sm:$0xff] %vm3831, %v3812
        %3847 = vst.msk [vmem:[#allocation2 + $0x78] sm:$0xff] %vm3831, %v3814
        %v3864 = vrot.slane %v460, 5
        %v3865 = vrot.slane %v3864, 4
        %v3866 = vrot.slane %v461, 5
        %v3867 = vsel %vm1145, %v3865, %v3866
        %v3868 = vrot.slane %v3866, 4
        %v3869 = vrot.slane %v462, 5
        %v3870 = vsel %vm1145, %v3868, %v3869
        %v3871 = vrot.slane %v463, 5
        %v3872 = vrot.slane %v3871, 4
        %v3873 = vrot.slane %v464, 5
        %v3874 = vsel %vm1145, %v3872, %v3873
        %v3875 = vrot.slane %v3873, 4
        %v3876 = vrot.slane %v465, 5
        %v3877 = vsel %vm1145, %v3875, %v3876
        %v3878 = vrot.slane %v466, 5
        %v3879 = vrot.slane %v3878, 4
        %v3880 = vrot.slane %v467, 5
        %v3881 = vsel %vm1145, %v3879, %v3880
        %v3882 = vrot.slane %v3880, 4
        %v3883 = vrot.slane %v468, 5
        %v3884 = vsel %vm1145, %v3882, %v3883
        %v3885 = vrot.slane %v469, 5
        %v3886 = vrot.slane %v3885, 4
        %v3887 = vrot.slane %v470, 5
        %v3888 = vsel %vm1145, %v3886, %v3887
        %v3889 = vrot.slane %v3887, 4
        %v3890 = vrot.slane %v471, 5
        %v3891 = vsel %vm1145, %v3889, %v3890
        %v3892 = vrot.slane %v472, 5
        %v3893 = vrot.slane %v3892, 4
        %v3894 = vrot.slane %v473, 5
        %v3895 = vsel %vm1145, %v3893, %v3894
        %v3896 = vrot.slane %v3894, 4
        %v3897 = vrot.slane %v474, 5
        %v3898 = vsel %vm1145, %v3896, %v3897
        %v3899 = vrot.slane %v475, 5
        %v3900 = vrot.slane %v3899, 4
        %v3901 = vrot.slane %v476, 5
        %v3902 = vsel %vm1145, %v3900, %v3901
        %v3903 = vrot.slane %v3901, 4
        %v3904 = vrot.slane %v477, 5
        %v3905 = vsel %vm1145, %v3903, %v3904
        %v3906 = vrot.slane %v478, 5
        %v3907 = vrot.slane %v3906, 4
        %v3908 = vrot.slane %v479, 5
        %v3909 = vsel %vm1145, %v3907, %v3908
        %v3910 = vrot.slane %v3908, 4
        %v3911 = vrot.slane %v480, 5
        %v3912 = vsel %vm1145, %v3910, %v3911
        %v3913 = vrot.slane %v481, 5
        %v3914 = vrot.slane %v3913, 4
        %v3915 = vrot.slane %v482, 5
        %v3916 = vsel %vm1145, %v3914, %v3915
        %v3917 = vrot.slane %v3915, 4
        %v3918 = vrot.slane %v483, 5
        %v3919 = vsel %vm1145, %v3917, %v3918
        %v3920 = vrot.slane %v484, 5
        %v3921 = vrot.slane %v3920, 4
        %v3922 = vrot.slane %v485, 5
        %v3923 = vsel %vm1145, %v3921, %v3922
        %v3924 = vrot.slane %v3922, 4
        %v3925 = vrot.slane %v486, 5
        %v3926 = vsel %vm1145, %v3924, %v3925
        %v3927 = vrot.slane %v487, 5
        %v3928 = vrot.slane %v3927, 4
        %v3929 = vrot.slane %v488, 5
        %v3930 = vsel %vm1145, %v3928, %v3929
        %v3931 = vrot.slane %v3929, 4
        %v3932 = vrot.slane %v489, 5
        %v3933 = vsel %vm1145, %v3931, %v3932
        %v3934 = vrot.slane %v490, 5
        %v3935 = vrot.slane %v3934, 4
        %v3936 = vrot.slane %v491, 5
        %v3937 = vsel %vm1145, %v3935, %v3936
        %v3938 = vrot.slane %v3936, 4
        %v3939 = vrot.slane %v492, 5
        %v3940 = vsel %vm1145, %v3938, %v3939
        %v3941 = vrot.slane %v493, 5
        %v3942 = vrot.slane %v3941, 4
        %v3943 = vrot.slane %v494, 5
        %v3944 = vsel %vm1145, %v3942, %v3943
        %v3945 = vrot.slane %v3943, 4
        %v3946 = vrot.slane %v495, 5
        %v3947 = vsel %vm1145, %v3945, %v3946
        %v3948 = vrot.slane %v496, 5
        %v3949 = vrot.slane %v3948, 4
        %v3950 = vrot.slane %v497, 5
        %v3951 = vsel %vm1145, %v3949, %v3950
        %v3952 = vrot.slane %v3950, 4
        %v3953 = vrot.slane %v498, 5
        %v3954 = vsel %vm1145, %v3952, %v3953
        %v3955 = vrot.slane %v499, 5
        %v3956 = vrot.slane %v3955, 4
        %v3957 = vrot.slane %v500, 5
        %v3958 = vsel %vm1145, %v3956, %v3957
        %v3959 = vrot.slane %v3957, 4
        %v3960 = vrot.slane %v501, 5
        %v3961 = vsel %vm1145, %v3959, %v3960
        %v3962 = vrot.slane %v502, 5
        %v3963 = vrot.slane %v3962, 4
        %v3964 = vrot.slane %v503, 5
        %v3965 = vsel %vm1145, %v3963, %v3964
        %v3966 = vrot.slane %v3964, 4
        %v3967 = vrot.slane %v504, 5
        %v3968 = vsel %vm1145, %v3966, %v3967
        %v3969 = vrot.slane %v505, 5
        %v3970 = vrot.slane %v3969, 4
        %v3971 = vrot.slane %v506, 5
        %v3972 = vsel %vm1145, %v3970, %v3971
        %v3973 = vrot.slane %v3971, 4
        %v3974 = vrot.slane %v507, 5
        %v3975 = vsel %vm1145, %v3973, %v3974
        %v3976 = vunpack.c.l.b16 %v3867
        %v3977 = vunpack.c.l.b16 %v3870
        %v3978 = vunpack.c.l.b16 %v3874
        %v3979 = vunpack.c.l.b16 %v3877
        %v3980 = vunpack.c.l.b16 %v3881
        %v3981 = vunpack.c.l.b16 %v3884
        %v3982 = vunpack.c.l.b16 %v3888
        %v3983 = vunpack.c.l.b16 %v3891
        %v3984 = vunpack.c.l.b16 %v3895
        %v3985 = vunpack.c.l.b16 %v3898
        %v3986 = vunpack.c.l.b16 %v3902
        %v3987 = vunpack.c.l.b16 %v3905
        %v3988 = vunpack.c.l.b16 %v3909
        %v3989 = vunpack.c.l.b16 %v3912
        %v3990 = vunpack.c.l.b16 %v3916
        %v3991 = vunpack.c.l.b16 %v3919
        %v3992 = vunpack.c.l.b16 %v3923
        %v3993 = vunpack.c.l.b16 %v3926
        %v3994 = vunpack.c.l.b16 %v3930
        %v3995 = vunpack.c.l.b16 %v3933
        %v3996 = vunpack.c.l.b16 %v3937
        %v3997 = vunpack.c.l.b16 %v3940
        %v3998 = vunpack.c.l.b16 %v3944
        %v3999 = vunpack.c.l.b16 %v3947
        %v4000 = vunpack.c.l.b16 %v3951
        %v4001 = vunpack.c.l.b16 %v3954
        %v4002 = vunpack.c.l.b16 %v3958
        %v4003 = vunpack.c.l.b16 %v3961
        %v4004 = vunpack.c.l.b16 %v3965
        %v4005 = vunpack.c.l.b16 %v3968
        %v4006 = vunpack.c.l.b16 %v3972
        %v4007 = vunpack.c.l.b16 %v3975
        %v4008 = vpack.c.b16 %v3977, %v3976
        %v4009 = vpack.c.b16 %v3979, %v3978
        %v4010 = vpack.c.b16 %v3981, %v3980
        %v4011 = vpack.c.b16 %v3983, %v3982
        %v4012 = vpack.c.b16 %v3985, %v3984
        %v4013 = vpack.c.b16 %v3987, %v3986
        %v4014 = vpack.c.b16 %v3989, %v3988
        %v4015 = vpack.c.b16 %v3991, %v3990
        %v4016 = vpack.c.b16 %v3993, %v3992
        %v4017 = vpack.c.b16 %v3995, %v3994
        %v4018 = vpack.c.b16 %v3997, %v3996
        %v4019 = vpack.c.b16 %v3999, %v3998
        %v4020 = vpack.c.b16 %v4001, %v4000
        %v4021 = vpack.c.b16 %v4003, %v4002
        %v4022 = vpack.c.b16 %v4005, %v4004
        %v4023 = vpack.c.b16 %v4007, %v4006
        %4024 = vrot.lane.b32.xlu0 %v4008, 80
        %v4025 = vpop.permute.xlu0 %4024
        %4026 = vrot.lane.b32.xlu0 %v4009, 80
        %v4027 = vpop.permute.xlu0 %4026
        %4028 = vrot.lane.b32.xlu0 %v4010, 80
        %v4029 = vpop.permute.xlu0 %4028
        %4030 = vrot.lane.b32.xlu0 %v4011, 80
        %v4031 = vpop.permute.xlu0 %4030
        %4032 = vrot.lane.b32.xlu0 %v4012, 80
        %v4033 = vpop.permute.xlu0 %4032
        %4034 = vrot.lane.b32.xlu0 %v4013, 80
        %v4035 = vpop.permute.xlu0 %4034
        %4036 = vrot.lane.b32.xlu0 %v4014, 80
        %v4037 = vpop.permute.xlu0 %4036
        %4038 = vrot.lane.b32.xlu0 %v4015, 80
        %v4039 = vpop.permute.xlu0 %4038
        %4040 = vrot.lane.b32.xlu0 %v4016, 80
        %v4041 = vpop.permute.xlu0 %4040
        %4042 = vrot.lane.b32.xlu0 %v4017, 80
        %v4043 = vpop.permute.xlu0 %4042
        %4044 = vrot.lane.b32.xlu0 %v4018, 80
        %v4045 = vpop.permute.xlu0 %4044
        %4046 = vrot.lane.b32.xlu0 %v4019, 80
        %v4047 = vpop.permute.xlu0 %4046
        %4048 = vrot.lane.b32.xlu0 %v4020, 80
        %v4049 = vpop.permute.xlu0 %4048
        %4050 = vrot.lane.b32.xlu0 %v4021, 80
        %v4051 = vpop.permute.xlu0 %4050
        %4052 = vrot.lane.b32.xlu0 %v4022, 80
        %v4053 = vpop.permute.xlu0 %4052
        %4054 = vrot.lane.b32.xlu0 %v4023, 80
        %v4055 = vpop.permute.xlu0 %4054
        %vm4072 = vcmask 687744
        %4073 = vst.msk [vmem:[#allocation2] sm:$0xff] %vm4072, %v4025
        %4074 = vst.msk [vmem:[#allocation2 + $0x8] sm:$0xff] %vm4072, %v4027
        %4075 = vst.msk [vmem:[#allocation2 + $0x10] sm:$0xff] %vm4072, %v4029
        %4076 = vst.msk [vmem:[#allocation2 + $0x18] sm:$0xff] %vm4072, %v4031
        %4077 = vst.msk [vmem:[#allocation2 + $0x20] sm:$0xff] %vm4072, %v4033
        %4078 = vst.msk [vmem:[#allocation2 + $0x28] sm:$0xff] %vm4072, %v4035
        %4079 = vst.msk [vmem:[#allocation2 + $0x30] sm:$0xff] %vm4072, %v4037
        %4080 = vst.msk [vmem:[#allocation2 + $0x38] sm:$0xff] %vm4072, %v4039
        %4081 = vst.msk [vmem:[#allocation2 + $0x40] sm:$0xff] %vm4072, %v4041
        %4082 = vst.msk [vmem:[#allocation2 + $0x48] sm:$0xff] %vm4072, %v4043
        %4083 = vst.msk [vmem:[#allocation2 + $0x50] sm:$0xff] %vm4072, %v4045
        %4084 = vst.msk [vmem:[#allocation2 + $0x58] sm:$0xff] %vm4072, %v4047
        %4085 = vst.msk [vmem:[#allocation2 + $0x60] sm:$0xff] %vm4072, %v4049
        %4086 = vst.msk [vmem:[#allocation2 + $0x68] sm:$0xff] %vm4072, %v4051
        %4087 = vst.msk [vmem:[#allocation2 + $0x70] sm:$0xff] %vm4072, %v4053
        %4088 = vst.msk [vmem:[#allocation2 + $0x78] sm:$0xff] %vm4072, %v4055
        %v4091 = vunpack.c.l.b16 %v508
        %v4092 = vunpack.c.l.b16 %v509
        %v4093 = vpack.c.b16 %v4092, %v4091
        %4094 = vrot.lane.b32.xlu0 %v3271, 84
        %v4095 = vpop.permute.xlu0 %4094
        %4096 = vrot.lane.b32.xlu0 %v3272, 84
        %v4097 = vpop.permute.xlu0 %4096
        %4098 = vrot.lane.b32.xlu0 %v3273, 84
        %v4099 = vpop.permute.xlu0 %4098
        %4100 = vrot.lane.b32.xlu0 %v3274, 84
        %v4101 = vpop.permute.xlu0 %4100
        %4102 = vrot.lane.b32.xlu0 %v3275, 84
        %v4103 = vpop.permute.xlu0 %4102
        %4104 = vrot.lane.b32.xlu0 %v3276, 84
        %v4105 = vpop.permute.xlu0 %4104
        %4106 = vrot.lane.b32.xlu0 %v3277, 84
        %v4107 = vpop.permute.xlu0 %4106
        %4108 = vrot.lane.b32.xlu0 %v3278, 84
        %v4109 = vpop.permute.xlu0 %4108
        %4110 = vrot.lane.b32.xlu0 %v3279, 84
        %v4111 = vpop.permute.xlu0 %4110
        %4112 = vrot.lane.b32.xlu0 %v3280, 84
        %v4113 = vpop.permute.xlu0 %4112
        %4114 = vrot.lane.b32.xlu0 %v3281, 84
        %v4115 = vpop.permute.xlu0 %4114
        %4116 = vrot.lane.b32.xlu0 %v3282, 84
        %v4117 = vpop.permute.xlu0 %4116
        %4118 = vrot.lane.b32.xlu0 %v3283, 84
        %v4119 = vpop.permute.xlu0 %4118
        %4120 = vrot.lane.b32.xlu0 %v3284, 84
        %v4121 = vpop.permute.xlu0 %4120
        %4122 = vrot.lane.b32.xlu0 %v3285, 84
        %v4123 = vpop.permute.xlu0 %4122
        %4124 = vrot.lane.b32.xlu0 %v4093, 84
        %v4125 = vpop.permute.xlu0 %4124
        %vm4142 = vcmask 720544
        %4143 = vst.msk [vmem:[#allocation2] sm:$0xff] %vm4142, %v4095
        %4144 = vst.msk [vmem:[#allocation2 + $0x8] sm:$0xff] %vm4142, %v4097
        %4145 = vst.msk [vmem:[#allocation2 + $0x10] sm:$0xff] %vm4142, %v4099
        %4146 = vst.msk [vmem:[#allocation2 + $0x18] sm:$0xff] %vm4142, %v4101
        %4147 = vst.msk [vmem:[#allocation2 + $0x20] sm:$0xff] %vm4142, %v4103
        %4148 = vst.msk [vmem:[#allocation2 + $0x28] sm:$0xff] %vm4142, %v4105
        %4149 = vst.msk [vmem:[#allocation2 + $0x30] sm:$0xff] %vm4142, %v4107
        %4150 = vst.msk [vmem:[#allocation2 + $0x38] sm:$0xff] %vm4142, %v4109
        %4151 = vst.msk [vmem:[#allocation2 + $0x40] sm:$0xff] %vm4142, %v4111
        %4152 = vst.msk [vmem:[#allocation2 + $0x48] sm:$0xff] %vm4142, %v4113
        %4153 = vst.msk [vmem:[#allocation2 + $0x50] sm:$0xff] %vm4142, %v4115
        %4154 = vst.msk [vmem:[#allocation2 + $0x58] sm:$0xff] %vm4142, %v4117
        %4155 = vst.msk [vmem:[#allocation2 + $0x60] sm:$0xff] %vm4142, %v4119
        %4156 = vst.msk [vmem:[#allocation2 + $0x68] sm:$0xff] %vm4142, %v4121
        %4157 = vst.msk [vmem:[#allocation2 + $0x70] sm:$0xff] %vm4142, %v4123
        %4158 = vst.msk [vmem:[#allocation2 + $0x78] sm:$0xff] %vm4142, %v4125
        %v4160 = vshrl.u32 %v508, 16
        %v4162 = vrot.slane %v4160, 4
        %v4163 = vshll.u32 %v508, 16
        %v4165 = vrot.slane %v4163, 5
        %v4166 = vor.u32 %v4162, %v4165
        %v4167 = vrot.slane %v4166, 4
        %v4169 = vshll.u32 %v509, 16
        %v4171 = vrot.slane %v4169, 5
        %v4172 = vsel %vm629, %v4167, %v4171
        %v4173 = vshrl.u32 %v509, 16
        %v4175 = vrot.slane %v4173, 4
        %v4176 = vor.u32 %v4175, %v4171
        %v4177 = vrot.slane %v4176, 4
        %v4179 = vshll.u32 %v510, 16
        %v4181 = vrot.slane %v4179, 5
        %v4182 = vsel %vm629, %v4177, %v4181
        %v4183 = vunpack.c.l.b16 %v4172
        %v4184 = vunpack.c.l.b16 %v4182
        %v4185 = vpack.c.b16 %v4184, %v4183
        %4186 = vrot.lane.b32.xlu0 %v3768, 88
        %v4187 = vpop.permute.xlu0 %4186
        %4188 = vrot.lane.b32.xlu0 %v3769, 88
        %v4189 = vpop.permute.xlu0 %4188
        %4190 = vrot.lane.b32.xlu0 %v3770, 88
        %v4191 = vpop.permute.xlu0 %4190
        %4192 = vrot.lane.b32.xlu0 %v3771, 88
        %v4193 = vpop.permute.xlu0 %4192
        %4194 = vrot.lane.b32.xlu0 %v3772, 88
        %v4195 = vpop.permute.xlu0 %4194
        %4196 = vrot.lane.b32.xlu0 %v3773, 88
        %v4197 = vpop.permute.xlu0 %4196
        %4198 = vrot.lane.b32.xlu0 %v3774, 88
        %v4199 = vpop.permute.xlu0 %4198
        %4200 = vrot.lane.b32.xlu0 %v3775, 88
        %v4201 = vpop.permute.xlu0 %4200
        %4202 = vrot.lane.b32.xlu0 %v3776, 88
        %v4203 = vpop.permute.xlu0 %4202
        %4204 = vrot.lane.b32.xlu0 %v3777, 88
        %v4205 = vpop.permute.xlu0 %4204
        %4206 = vrot.lane.b32.xlu0 %v3778, 88
        %v4207 = vpop.permute.xlu0 %4206
        %4208 = vrot.lane.b32.xlu0 %v3779, 88
        %v4209 = vpop.permute.xlu0 %4208
        %4210 = vrot.lane.b32.xlu0 %v3780, 88
        %v4211 = vpop.permute.xlu0 %4210
        %4212 = vrot.lane.b32.xlu0 %v3781, 88
        %v4213 = vpop.permute.xlu0 %4212
        %4214 = vrot.lane.b32.xlu0 %v3782, 88
        %v4215 = vpop.permute.xlu0 %4214
        %4216 = vrot.lane.b32.xlu0 %v4185, 88
        %v4217 = vpop.permute.xlu0 %4216
        %vm4234 = vcmask 753344
        %4235 = vst.msk [vmem:[#allocation2] sm:$0xff] %vm4234, %v4187
        %4236 = vst.msk [vmem:[#allocation2 + $0x8] sm:$0xff] %vm4234, %v4189
        %4237 = vst.msk [vmem:[#allocation2 + $0x10] sm:$0xff] %vm4234, %v4191
        %4238 = vst.msk [vmem:[#allocation2 + $0x18] sm:$0xff] %vm4234, %v4193
        %4239 = vst.msk [vmem:[#allocation2 + $0x20] sm:$0xff] %vm4234, %v4195
        %4240 = vst.msk [vmem:[#allocation2 + $0x28] sm:$0xff] %vm4234, %v4197
        %4241 = vst.msk [vmem:[#allocation2 + $0x30] sm:$0xff] %vm4234, %v4199
        %4242 = vst.msk [vmem:[#allocation2 + $0x38] sm:$0xff] %vm4234, %v4201
        %4243 = vst.msk [vmem:[#allocation2 + $0x40] sm:$0xff] %vm4234, %v4203
        %4244 = vst.msk [vmem:[#allocation2 + $0x48] sm:$0xff] %vm4234, %v4205
        %4245 = vst.msk [vmem:[#allocation2 + $0x50] sm:$0xff] %vm4234, %v4207
        %4246 = vst.msk [vmem:[#allocation2 + $0x58] sm:$0xff] %vm4234, %v4209
        %4247 = vst.msk [vmem:[#allocation2 + $0x60] sm:$0xff] %vm4234, %v4211
        %4248 = vst.msk [vmem:[#allocation2 + $0x68] sm:$0xff] %vm4234, %v4213
        %4249 = vst.msk [vmem:[#allocation2 + $0x70] sm:$0xff] %vm4234, %v4215
        %4250 = vst.msk [vmem:[#allocation2 + $0x78] sm:$0xff] %vm4234, %v4217
        %v4252 = vrot.slane %v508, 5
        %v4253 = vrot.slane %v4252, 4
        %v4254 = vrot.slane %v509, 5
        %v4255 = vsel %vm1145, %v4253, %v4254
        %v4256 = vrot.slane %v4254, 4
        %v4257 = vrot.slane %v510, 5
        %v4258 = vsel %vm1145, %v4256, %v4257
        %v4259 = vunpack.c.l.b16 %v4255
        %v4260 = vunpack.c.l.b16 %v4258
        %v4261 = vpack.c.b16 %v4260, %v4259
        %4262 = vrot.lane.b32.xlu0 %v4009, 92
        %v4263 = vpop.permute.xlu0 %4262
        %4264 = vrot.lane.b32.xlu0 %v4010, 92
        %v4265 = vpop.permute.xlu0 %4264
        %4266 = vrot.lane.b32.xlu0 %v4011, 92
        %v4267 = vpop.permute.xlu0 %4266
        %4268 = vrot.lane.b32.xlu0 %v4012, 92
        %v4269 = vpop.permute.xlu0 %4268
        %4270 = vrot.lane.b32.xlu0 %v4013, 92
        %v4271 = vpop.permute.xlu0 %4270
        %4272 = vrot.lane.b32.xlu0 %v4014, 92
        %v4273 = vpop.permute.xlu0 %4272
        %4274 = vrot.lane.b32.xlu0 %v4015, 92
        %v4275 = vpop.permute.xlu0 %4274
        %4276 = vrot.lane.b32.xlu0 %v4016, 92
        %v4277 = vpop.permute.xlu0 %4276
        %4278 = vrot.lane.b32.xlu0 %v4017, 92
        %v4279 = vpop.permute.xlu0 %4278
        %4280 = vrot.lane.b32.xlu0 %v4018, 92
        %v4281 = vpop.permute.xlu0 %4280
        %4282 = vrot.lane.b32.xlu0 %v4019, 92
        %v4283 = vpop.permute.xlu0 %4282
        %4284 = vrot.lane.b32.xlu0 %v4020, 92
        %v4285 = vpop.permute.xlu0 %4284
        %4286 = vrot.lane.b32.xlu0 %v4021, 92
        %v4287 = vpop.permute.xlu0 %4286
        %4288 = vrot.lane.b32.xlu0 %v4022, 92
        %v4289 = vpop.permute.xlu0 %4288
        %4290 = vrot.lane.b32.xlu0 %v4023, 92
        %v4291 = vpop.permute.xlu0 %4290
        %4292 = vrot.lane.b32.xlu0 %v4261, 92
        %v4293 = vpop.permute.xlu0 %4292
        %vm4310 = vcmask 786144
        %4311 = vst.msk [vmem:[#allocation2] sm:$0xff] %vm4310, %v4263
        %4312 = vst.msk [vmem:[#allocation2 + $0x8] sm:$0xff] %vm4310, %v4265
        %4313 = vst.msk [vmem:[#allocation2 + $0x10] sm:$0xff] %vm4310, %v4267
        %4314 = vst.msk [vmem:[#allocation2 + $0x18] sm:$0xff] %vm4310, %v4269
        %4315 = vst.msk [vmem:[#allocation2 + $0x20] sm:$0xff] %vm4310, %v4271
        %4316 = vst.msk [vmem:[#allocation2 + $0x28] sm:$0xff] %vm4310, %v4273
        %4317 = vst.msk [vmem:[#allocation2 + $0x30] sm:$0xff] %vm4310, %v4275
        %4318 = vst.msk [vmem:[#allocation2 + $0x38] sm:$0xff] %vm4310, %v4277
        %4319 = vst.msk [vmem:[#allocation2 + $0x40] sm:$0xff] %vm4310, %v4279
        %4320 = vst.msk [vmem:[#allocation2 + $0x48] sm:$0xff] %vm4310, %v4281
        %4321 = vst.msk [vmem:[#allocation2 + $0x50] sm:$0xff] %vm4310, %v4283
        %4322 = vst.msk [vmem:[#allocation2 + $0x58] sm:$0xff] %vm4310, %v4285
        %4323 = vst.msk [vmem:[#allocation2 + $0x60] sm:$0xff] %vm4310, %v4287
        %4324 = vst.msk [vmem:[#allocation2 + $0x68] sm:$0xff] %vm4310, %v4289
        %4325 = vst.msk [vmem:[#allocation2 + $0x70] sm:$0xff] %vm4310, %v4291
        %4326 = vst.msk [vmem:[#allocation2 + $0x78] sm:$0xff] %vm4310, %v4293
        %v4329 = vunpack.c.l.b16 %v511
        %v4330 = vunpack.c.l.b16 %v512
        %v4331 = vpack.c.b16 %v4330, %v4329
        %4332 = vrot.lane.b32.xlu0 %v3272, 96
        %v4333 = vpop.permute.xlu0 %4332
        %4334 = vrot.lane.b32.xlu0 %v3273, 96
        %v4335 = vpop.permute.xlu0 %4334
        %4336 = vrot.lane.b32.xlu0 %v3274, 96
        %v4337 = vpop.permute.xlu0 %4336
        %4338 = vrot.lane.b32.xlu0 %v3275, 96
        %v4339 = vpop.permute.xlu0 %4338
        %4340 = vrot.lane.b32.xlu0 %v3276, 96
        %v4341 = vpop.permute.xlu0 %4340
        %4342 = vrot.lane.b32.xlu0 %v3277, 96
        %v4343 = vpop.permute.xlu0 %4342
        %4344 = vrot.lane.b32.xlu0 %v3278, 96
        %v4345 = vpop.permute.xlu0 %4344
        %4346 = vrot.lane.b32.xlu0 %v3279, 96
        %v4347 = vpop.permute.xlu0 %4346
        %4348 = vrot.lane.b32.xlu0 %v3280, 96
        %v4349 = vpop.permute.xlu0 %4348
        %4350 = vrot.lane.b32.xlu0 %v3281, 96
        %v4351 = vpop.permute.xlu0 %4350
        %4352 = vrot.lane.b32.xlu0 %v3282, 96
        %v4353 = vpop.permute.xlu0 %4352
        %4354 = vrot.lane.b32.xlu0 %v3283, 96
        %v4355 = vpop.permute.xlu0 %4354
        %4356 = vrot.lane.b32.xlu0 %v3284, 96
        %v4357 = vpop.permute.xlu0 %4356
        %4358 = vrot.lane.b32.xlu0 %v3285, 96
        %v4359 = vpop.permute.xlu0 %4358
        %4360 = vrot.lane.b32.xlu0 %v4093, 96
        %v4361 = vpop.permute.xlu0 %4360
        %4362 = vrot.lane.b32.xlu0 %v4331, 96
        %v4363 = vpop.permute.xlu0 %4362
        %vm4380 = vcmask 818944
        %4381 = vst.msk [vmem:[#allocation2] sm:$0xff] %vm4380, %v4333
        %4382 = vst.msk [vmem:[#allocation2 + $0x8] sm:$0xff] %vm4380, %v4335
        %4383 = vst.msk [vmem:[#allocation2 + $0x10] sm:$0xff] %vm4380, %v4337
        %4384 = vst.msk [vmem:[#allocation2 + $0x18] sm:$0xff] %vm4380, %v4339
        %4385 = vst.msk [vmem:[#allocation2 + $0x20] sm:$0xff] %vm4380, %v4341
        %4386 = vst.msk [vmem:[#allocation2 + $0x28] sm:$0xff] %vm4380, %v4343
        %4387 = vst.msk [vmem:[#allocation2 + $0x30] sm:$0xff] %vm4380, %v4345
        %4388 = vst.msk [vmem:[#allocation2 + $0x38] sm:$0xff] %vm4380, %v4347
        %4389 = vst.msk [vmem:[#allocation2 + $0x40] sm:$0xff] %vm4380, %v4349
        %4390 = vst.msk [vmem:[#allocation2 + $0x48] sm:$0xff] %vm4380, %v4351
        %4391 = vst.msk [vmem:[#allocation2 + $0x50] sm:$0xff] %vm4380, %v4353
        %4392 = vst.msk [vmem:[#allocation2 + $0x58] sm:$0xff] %vm4380, %v4355
        %4393 = vst.msk [vmem:[#allocation2 + $0x60] sm:$0xff] %vm4380, %v4357
        %4394 = vst.msk [vmem:[#allocation2 + $0x68] sm:$0xff] %vm4380, %v4359
        %4395 = vst.msk [vmem:[#allocation2 + $0x70] sm:$0xff] %vm4380, %v4361
        %4396 = vst.msk [vmem:[#allocation2 + $0x78] sm:$0xff] %vm4380, %v4363
        %v4398 = vshrl.u32 %v511, 16
        %v4400 = vrot.slane %v4398, 4
        %v4401 = vshll.u32 %v511, 16
        %v4403 = vrot.slane %v4401, 5
        %v4404 = vor.u32 %v4400, %v4403
        %v4405 = vrot.slane %v4404, 4
        %v4407 = vshll.u32 %v512, 16
        %v4409 = vrot.slane %v4407, 5
        %v4410 = vsel %vm629, %v4405, %v4409
        %v4411 = vshrl.u32 %v512, 16
        %v4413 = vrot.slane %v4411, 4
        %v4414 = vor.u32 %v4413, %v4409
        %v4415 = vrot.slane %v4414, 4
        %v4417 = vshll.u32 %v513, 16
        %v4419 = vrot.slane %v4417, 5
        %v4420 = vsel %vm629, %v4415, %v4419
        %v4421 = vunpack.c.l.b16 %v4410
        %v4422 = vunpack.c.l.b16 %v4420
        %v4423 = vpack.c.b16 %v4422, %v4421
        %4424 = vrot.lane.b32.xlu0 %v3769, 100
        %v4425 = vpop.permute.xlu0 %4424
        %4426 = vrot.lane.b32.xlu0 %v3770, 100
        %v4427 = vpop.permute.xlu0 %4426
        %4428 = vrot.lane.b32.xlu0 %v3771, 100
        %v4429 = vpop.permute.xlu0 %4428
        %4430 = vrot.lane.b32.xlu0 %v3772, 100
        %v4431 = vpop.permute.xlu0 %4430
        %4432 = vrot.lane.b32.xlu0 %v3773, 100
        %v4433 = vpop.permute.xlu0 %4432
        %4434 = vrot.lane.b32.xlu0 %v3774, 100
        %v4435 = vpop.permute.xlu0 %4434
        %4436 = vrot.lane.b32.xlu0 %v3775, 100
        %v4437 = vpop.permute.xlu0 %4436
        %4438 = vrot.lane.b32.xlu0 %v3776, 100
        %v4439 = vpop.permute.xlu0 %4438
        %4440 = vrot.lane.b32.xlu0 %v3777, 100
        %v4441 = vpop.permute.xlu0 %4440
        %4442 = vrot.lane.b32.xlu0 %v3778, 100
        %v4443 = vpop.permute.xlu0 %4442
        %4444 = vrot.lane.b32.xlu0 %v3779, 100
        %v4445 = vpop.permute.xlu0 %4444
        %4446 = vrot.lane.b32.xlu0 %v3780, 100
        %v4447 = vpop.permute.xlu0 %4446
        %4448 = vrot.lane.b32.xlu0 %v3781, 100
        %v4449 = vpop.permute.xlu0 %4448
        %4450 = vrot.lane.b32.xlu0 %v3782, 100
        %v4451 = vpop.permute.xlu0 %4450
        %4452 = vrot.lane.b32.xlu0 %v4185, 100
        %v4453 = vpop.permute.xlu0 %4452
        %4454 = vrot.lane.b32.xlu0 %v4423, 100
        %v4455 = vpop.permute.xlu0 %4454
        %vm4472 = vcmask 851744
        %4473 = vst.msk [vmem:[#allocation2] sm:$0xff] %vm4472, %v4425
        %4474 = vst.msk [vmem:[#allocation2 + $0x8] sm:$0xff] %vm4472, %v4427
        %4475 = vst.msk [vmem:[#allocation2 + $0x10] sm:$0xff] %vm4472, %v4429
        %4476 = vst.msk [vmem:[#allocation2 + $0x18] sm:$0xff] %vm4472, %v4431
        %4477 = vst.msk [vmem:[#allocation2 + $0x20] sm:$0xff] %vm4472, %v4433
        %4478 = vst.msk [vmem:[#allocation2 + $0x28] sm:$0xff] %vm4472, %v4435
        %4479 = vst.msk [vmem:[#allocation2 + $0x30] sm:$0xff] %vm4472, %v4437
        %4480 = vst.msk [vmem:[#allocation2 + $0x38] sm:$0xff] %vm4472, %v4439
        %4481 = vst.msk [vmem:[#allocation2 + $0x40] sm:$0xff] %vm4472, %v4441
        %4482 = vst.msk [vmem:[#allocation2 + $0x48] sm:$0xff] %vm4472, %v4443
        %4483 = vst.msk [vmem:[#allocation2 + $0x50] sm:$0xff] %vm4472, %v4445
        %4484 = vst.msk [vmem:[#allocation2 + $0x58] sm:$0xff] %vm4472, %v4447
        %4485 = vst.msk [vmem:[#allocation2 + $0x60] sm:$0xff] %vm4472, %v4449
        %4486 = vst.msk [vmem:[#allocation2 + $0x68] sm:$0xff] %vm4472, %v4451
        %4487 = vst.msk [vmem:[#allocation2 + $0x70] sm:$0xff] %vm4472, %v4453
        %4488 = vst.msk [vmem:[#allocation2 + $0x78] sm:$0xff] %vm4472, %v4455
        %v4490 = vrot.slane %v511, 5
        %v4491 = vrot.slane %v4490, 4
        %v4492 = vrot.slane %v512, 5
        %v4493 = vsel %vm1145, %v4491, %v4492
        %v4494 = vrot.slane %v4492, 4
        %v4495 = vrot.slane %v513, 5
        %v4496 = vsel %vm1145, %v4494, %v4495
        %v4497 = vunpack.c.l.b16 %v4493
        %v4498 = vunpack.c.l.b16 %v4496
        %v4499 = vpack.c.b16 %v4498, %v4497
        %4500 = vrot.lane.b32.xlu0 %v4010, 104
        %v4501 = vpop.permute.xlu0 %4500
        %4502 = vrot.lane.b32.xlu0 %v4011, 104
        %v4503 = vpop.permute.xlu0 %4502
        %4504 = vrot.lane.b32.xlu0 %v4012, 104
        %v4505 = vpop.permute.xlu0 %4504
        %4506 = vrot.lane.b32.xlu0 %v4013, 104
        %v4507 = vpop.permute.xlu0 %4506
        %4508 = vrot.lane.b32.xlu0 %v4014, 104
        %v4509 = vpop.permute.xlu0 %4508
        %4510 = vrot.lane.b32.xlu0 %v4015, 104
        %v4511 = vpop.permute.xlu0 %4510
        %4512 = vrot.lane.b32.xlu0 %v4016, 104
        %v4513 = vpop.permute.xlu0 %4512
        %4514 = vrot.lane.b32.xlu0 %v4017, 104
        %v4515 = vpop.permute.xlu0 %4514
        %4516 = vrot.lane.b32.xlu0 %v4018, 104
        %v4517 = vpop.permute.xlu0 %4516
        %4518 = vrot.lane.b32.xlu0 %v4019, 104
        %v4519 = vpop.permute.xlu0 %4518
        %4520 = vrot.lane.b32.xlu0 %v4020, 104
        %v4521 = vpop.permute.xlu0 %4520
        %4522 = vrot.lane.b32.xlu0 %v4021, 104
        %v4523 = vpop.permute.xlu0 %4522
        %4524 = vrot.lane.b32.xlu0 %v4022, 104
        %v4525 = vpop.permute.xlu0 %4524
        %4526 = vrot.lane.b32.xlu0 %v4023, 104
        %v4527 = vpop.permute.xlu0 %4526
        %4528 = vrot.lane.b32.xlu0 %v4261, 104
        %v4529 = vpop.permute.xlu0 %4528
        %4530 = vrot.lane.b32.xlu0 %v4499, 104
        %v4531 = vpop.permute.xlu0 %4530
        %vm4548 = vcmask 884544
        %4549 = vst.msk [vmem:[#allocation2] sm:$0xff] %vm4548, %v4501
        %4550 = vst.msk [vmem:[#allocation2 + $0x8] sm:$0xff] %vm4548, %v4503
        %4551 = vst.msk [vmem:[#allocation2 + $0x10] sm:$0xff] %vm4548, %v4505
        %4552 = vst.msk [vmem:[#allocation2 + $0x18] sm:$0xff] %vm4548, %v4507
        %4553 = vst.msk [vmem:[#allocation2 + $0x20] sm:$0xff] %vm4548, %v4509
        %4554 = vst.msk [vmem:[#allocation2 + $0x28] sm:$0xff] %vm4548, %v4511
        %4555 = vst.msk [vmem:[#allocation2 + $0x30] sm:$0xff] %vm4548, %v4513
        %4556 = vst.msk [vmem:[#allocation2 + $0x38] sm:$0xff] %vm4548, %v4515
        %4557 = vst.msk [vmem:[#allocation2 + $0x40] sm:$0xff] %vm4548, %v4517
        %4558 = vst.msk [vmem:[#allocation2 + $0x48] sm:$0xff] %vm4548, %v4519
        %4559 = vst.msk [vmem:[#allocation2 + $0x50] sm:$0xff] %vm4548, %v4521
        %4560 = vst.msk [vmem:[#allocation2 + $0x58] sm:$0xff] %vm4548, %v4523
        %4561 = vst.msk [vmem:[#allocation2 + $0x60] sm:$0xff] %vm4548, %v4525
        %4562 = vst.msk [vmem:[#allocation2 + $0x68] sm:$0xff] %vm4548, %v4527
        %4563 = vst.msk [vmem:[#allocation2 + $0x70] sm:$0xff] %vm4548, %v4529
        %4564 = vst.msk [vmem:[#allocation2 + $0x78] sm:$0xff] %vm4548, %v4531
        %v4565 = vld [vmem:[#allocation2] sm:$0xff]
        %v4566 = vld [vmem:[#allocation2 + $0x8] sm:$0xff]
        %v4567 = vld [vmem:[#allocation2 + $0x10] sm:$0xff]
        %v4568 = vld [vmem:[#allocation2 + $0x18] sm:$0xff]
        %v4569 = vld [vmem:[#allocation2 + $0x20] sm:$0xff]
        %v4570 = vld [vmem:[#allocation2 + $0x28] sm:$0xff]
        %v4571 = vld [vmem:[#allocation2 + $0x30] sm:$0xff]
        %v4572 = vld [vmem:[#allocation2 + $0x38] sm:$0xff]
        %v4573 = vld [vmem:[#allocation2 + $0x40] sm:$0xff]
        %v4574 = vld [vmem:[#allocation2 + $0x48] sm:$0xff]
        %v4575 = vld [vmem:[#allocation2 + $0x50] sm:$0xff]
        %v4576 = vld [vmem:[#allocation2 + $0x58] sm:$0xff]
        %v4577 = vld [vmem:[#allocation2 + $0x60] sm:$0xff]
        %v4578 = vld [vmem:[#allocation2 + $0x68] sm:$0xff]
        %v4579 = vld [vmem:[#allocation2 + $0x70] sm:$0xff]
        %v4580 = vld [vmem:[#allocation2 + $0x78] sm:$0xff]
        %v4581 = vld [vmem:[%s3] sm:$0xf]
        %v4582 = vld [vmem:[%s3 + $0x4] sm:$0xf]
        %v4583 = vld [vmem:[%s3 + $0x8] sm:$0xf]
        %v4584 = vld [vmem:[%s3 + $0xc] sm:$0xf]
        %v4585 = vld [vmem:[%s3 + $0x10] sm:$0xf]
        %v4586 = vld [vmem:[%s3 + $0x14] sm:$0xf]
        %v4587 = vld [vmem:[%s3 + $0x18] sm:$0xf]
        %v4588 = vld [vmem:[%s3 + $0x1c] sm:$0xf]
        %v4589 = vld [vmem:[%s3 + $0x20] sm:$0xf]
        %v4590 = vld [vmem:[%s3 + $0x24] sm:$0xf]
        %v4591 = vld [vmem:[%s3 + $0x28] sm:$0xf]
        %v4592 = vld [vmem:[%s3 + $0x2c] sm:$0xf]
        %v4593 = vld [vmem:[%s3 + $0x30] sm:$0xf]
        %v4594 = vld [vmem:[%s3 + $0x34] sm:$0xf]
        %v4595 = vld [vmem:[%s3 + $0x38] sm:$0xf]
        %v4596 = vld [vmem:[%s3 + $0x3c] sm:$0xf]
        %v4597 = vld [vmem:[%s4] sm:$0x1]
        %v4599 = vlaneseq
        %v4600 = vshrl.u32 %v4599, 7
        %v4601 = vsub.s32 0, %v4600
        %v4602 = vrot.slane %v4597, %v4601
        %v4620 = vunpack.c.l.b16 %v4581
        %v4621 = vunpack.c.l.b16 %v4582
        %v4622 = vunpack.c.l.b16 %v4583
        %v4623 = vunpack.c.l.b16 %v4584
        %v4624 = vunpack.c.l.b16 %v4585
        %v4625 = vunpack.c.l.b16 %v4586
        %v4626 = vunpack.c.l.b16 %v4587
        %v4627 = vunpack.c.l.b16 %v4588
        %v4628 = vunpack.c.l.b16 %v4589
        %v4629 = vunpack.c.l.b16 %v4590
        %v4630 = vunpack.c.l.b16 %v4591
        %v4631 = vunpack.c.l.b16 %v4592
        %v4632 = vunpack.c.l.b16 %v4593
        %v4633 = vunpack.c.l.b16 %v4594
        %v4634 = vunpack.c.l.b16 %v4595
        %v4635 = vunpack.c.l.b16 %v4596
        %v4636 = vpack.c.b16 %v4621, %v4620
        %v4637 = vpack.c.b16 %v4623, %v4622
        %v4638 = vpack.c.b16 %v4625, %v4624
        %v4639 = vpack.c.b16 %v4627, %v4626
        %v4640 = vpack.c.b16 %v4629, %v4628
        %v4641 = vpack.c.b16 %v4631, %v4630
        %v4642 = vpack.c.b16 %v4633, %v4632
        %v4643 = vpack.c.b16 %v4635, %v4634
        %4652 = vmatprep.subr.bf16.mxu0 0
        %4653 = vmatpush1.bf16.msra.mxu0 %v4636
        %4654 = vmatprep.subr.bf16.mxu0 0
        %4655 = vmatpush1.bf16.msra.mxu0 %v4637
        %4656 = vmatprep.subr.bf16.mxu0 0
        %4657 = vmatpush1.bf16.msra.mxu0 %v4638
        %4658 = vmatprep.subr.bf16.mxu0 0
        %4659 = vmatpush1.bf16.msra.mxu0 %v4639
        %4660 = vmatprep.subr.bf16.mxu0 0
        %4661 = vmatpush1.bf16.msra.mxu0 %v4640
        %4662 = vmatprep.subr.bf16.mxu0 0
        %4663 = vmatpush1.bf16.msra.mxu0 %v4641
        %4664 = vmatprep.subr.bf16.mxu0 0
        %4665 = vmatpush1.bf16.msra.mxu0 %v4642
        %4666 = vmatprep.subr.bf16.mxu0 0
        %4667 = vmatpush1.bf16.msra.mxu0 %v4643
        %4668 = vmatprep.subr.bf16.mxu0 0
        %4669 = vmatpush1.bf16.msra.mxu0 0
        %4670 = vmatprep.subr.bf16.mxu0 0
        %4671 = vmatpush1.bf16.msra.mxu0 0
        %4672 = vmatprep.subr.bf16.mxu0 0
        %4673 = vmatpush1.bf16.msra.mxu0 0
        %4674 = vmatprep.subr.bf16.mxu0 0
        %4675 = vmatpush1.bf16.msra.mxu0 0
        %4676 = vmatprep.subr.bf16.mxu0 0
        %4677 = vmatpush1.bf16.msra.mxu0 0
        %4678 = vmatprep.subr.bf16.mxu0 0
        %4679 = vmatpush1.bf16.msra.mxu0 0
        %4680 = vmatprep.subr.bf16.mxu0 0
        %4681 = vmatpush1.bf16.msra.mxu0 0
        %4682 = vmatprep.subr.bf16.mxu0 0
        %4683 = vmatpush1.bf16.msra.mxu0 0
        %4684 = vmatprep.mubr.bf16.mxu0 0
        %4685 = vmatmul.mubr.bf16.gmra.mrb[0].mxu0 %v4565
        %v4686 = vpop.f32.mrb[0].mxu0
        %v4687 = vadd.f32 %v4602, %v4686
        %v4688 = vpop.f32.mrb[0].mxu0
        %v4689 = vpop.f32.mrb[0].mxu0
        %v4690 = vadd.f32 %v4602, %v4689
        %v4691 = vpop.f32.mrb[0].mxu0
        %4692 = vmatprep.mubr.bf16.mxu0 0
        %4693 = vmatmul.mubr.bf16.gmra.mrb[0].mxu0 %v4566
        %v4694 = vpop.f32.mrb[0].mxu0
        %v4695 = vadd.f32 %v4602, %v4694
        %v4696 = vpop.f32.mrb[0].mxu0
        %v4697 = vpop.f32.mrb[0].mxu0
        %v4698 = vadd.f32 %v4602, %v4697
        %v4699 = vpop.f32.mrb[0].mxu0
        %4700 = vmatprep.mubr.bf16.mxu0 0
        %4701 = vmatmul.mubr.bf16.gmra.mrb[0].mxu0 %v4567
        %v4702 = vpop.f32.mrb[0].mxu0
        %v4703 = vadd.f32 %v4602, %v4702
        %v4704 = vpop.f32.mrb[0].mxu0
        %v4705 = vpop.f32.mrb[0].mxu0
        %v4706 = vadd.f32 %v4602, %v4705
        %v4707 = vpop.f32.mrb[0].mxu0
        %4708 = vmatprep.mubr.bf16.mxu0 0
        %4709 = vmatmul.mubr.bf16.gmra.mrb[0].mxu0 %v4568
        %v4710 = vpop.f32.mrb[0].mxu0
        %v4711 = vadd.f32 %v4602, %v4710
        %v4712 = vpop.f32.mrb[0].mxu0
        %v4713 = vpop.f32.mrb[0].mxu0
        %v4714 = vadd.f32 %v4602, %v4713
        %v4715 = vpop.f32.mrb[0].mxu0
        %4716 = vmatprep.mubr.bf16.mxu0 0
        %4717 = vmatmul.mubr.bf16.gmra.mrb[0].mxu0 %v4569
        %v4718 = vpop.f32.mrb[0].mxu0
        %v4719 = vadd.f32 %v4602, %v4718
        %v4720 = vpop.f32.mrb[0].mxu0
        %v4721 = vpop.f32.mrb[0].mxu0
        %v4722 = vadd.f32 %v4602, %v4721
        %v4723 = vpop.f32.mrb[0].mxu0
        %4724 = vmatprep.mubr.bf16.mxu0 0
        %4725 = vmatmul.mubr.bf16.gmra.mrb[0].mxu0 %v4570
        %v4726 = vpop.f32.mrb[0].mxu0
        %v4727 = vadd.f32 %v4602, %v4726
        %v4728 = vpop.f32.mrb[0].mxu0
        %v4729 = vpop.f32.mrb[0].mxu0
        %v4730 = vadd.f32 %v4602, %v4729
        %v4731 = vpop.f32.mrb[0].mxu0
        %4732 = vmatprep.mubr.bf16.mxu0 0
        %4733 = vmatmul.mubr.bf16.gmra.mrb[0].mxu0 %v4571
        %v4734 = vpop.f32.mrb[0].mxu0
        %v4735 = vadd.f32 %v4602, %v4734
        %v4736 = vpop.f32.mrb[0].mxu0
        %v4737 = vpop.f32.mrb[0].mxu0
        %v4738 = vadd.f32 %v4602, %v4737
        %v4739 = vpop.f32.mrb[0].mxu0
        %4740 = vmatprep.mubr.bf16.mxu0 0
        %4741 = vmatmul.mubr.bf16.gmra.mrb[0].mxu0 %v4572
        %v4742 = vpop.f32.mrb[0].mxu0
        %v4743 = vadd.f32 %v4602, %v4742
        %v4744 = vpop.f32.mrb[0].mxu0
        %v4745 = vpop.f32.mrb[0].mxu0
        %v4746 = vadd.f32 %v4602, %v4745
        %v4747 = vpop.f32.mrb[0].mxu0
        %4748 = vmatprep.mubr.bf16.mxu0 0
        %4749 = vmatmul.mubr.bf16.gmra.mrb[0].mxu0 %v4573
        %v4750 = vpop.f32.mrb[0].mxu0
        %v4751 = vadd.f32 %v4602, %v4750
        %v4752 = vpop.f32.mrb[0].mxu0
        %v4753 = vpop.f32.mrb[0].mxu0
        %v4754 = vadd.f32 %v4602, %v4753
        %v4755 = vpop.f32.mrb[0].mxu0
        %4756 = vmatprep.mubr.bf16.mxu0 0
        %4757 = vmatmul.mubr.bf16.gmra.mrb[0].mxu0 %v4574
        %v4758 = vpop.f32.mrb[0].mxu0
        %v4759 = vadd.f32 %v4602, %v4758
        %v4760 = vpop.f32.mrb[0].mxu0
        %v4761 = vpop.f32.mrb[0].mxu0
        %v4762 = vadd.f32 %v4602, %v4761
        %v4763 = vpop.f32.mrb[0].mxu0
        %4764 = vmatprep.mubr.bf16.mxu0 0
        %4765 = vmatmul.mubr.bf16.gmra.mrb[0].mxu0 %v4575
        %v4766 = vpop.f32.mrb[0].mxu0
        %v4767 = vadd.f32 %v4602, %v4766
        %v4768 = vpop.f32.mrb[0].mxu0
        %v4769 = vpop.f32.mrb[0].mxu0
        %v4770 = vadd.f32 %v4602, %v4769
        %v4771 = vpop.f32.mrb[0].mxu0
        %4772 = vmatprep.mubr.bf16.mxu0 0
        %4773 = vmatmul.mubr.bf16.gmra.mrb[0].mxu0 %v4576
        %v4774 = vpop.f32.mrb[0].mxu0
        %v4775 = vadd.f32 %v4602, %v4774
        %v4776 = vpop.f32.mrb[0].mxu0
        %v4777 = vpop.f32.mrb[0].mxu0
        %v4778 = vadd.f32 %v4602, %v4777
        %v4779 = vpop.f32.mrb[0].mxu0
        %4780 = vmatprep.mubr.bf16.mxu0 0
        %4781 = vmatmul.mubr.bf16.gmra.mrb[0].mxu0 %v4577
        %v4782 = vpop.f32.mrb[0].mxu0
        %v4783 = vadd.f32 %v4602, %v4782
        %v4784 = vpop.f32.mrb[0].mxu0
        %v4785 = vpop.f32.mrb[0].mxu0
        %v4786 = vadd.f32 %v4602, %v4785
        %v4787 = vpop.f32.mrb[0].mxu0
        %4788 = vmatprep.mubr.bf16.mxu0 0
        %4789 = vmatmul.mubr.bf16.gmra.mrb[0].mxu0 %v4578
        %v4790 = vpop.f32.mrb[0].mxu0
        %v4791 = vadd.f32 %v4602, %v4790
        %v4792 = vpop.f32.mrb[0].mxu0
        %v4793 = vpop.f32.mrb[0].mxu0
        %v4794 = vadd.f32 %v4602, %v4793
        %v4795 = vpop.f32.mrb[0].mxu0
        %4796 = vmatprep.mubr.bf16.mxu0 0
        %4797 = vmatmul.mubr.bf16.gmra.mrb[0].mxu0 %v4579
        %v4798 = vpop.f32.mrb[0].mxu0
        %v4799 = vadd.f32 %v4602, %v4798
        %v4800 = vpop.f32.mrb[0].mxu0
        %v4801 = vpop.f32.mrb[0].mxu0
        %v4802 = vadd.f32 %v4602, %v4801
        %v4803 = vpop.f32.mrb[0].mxu0
        %4804 = vmatprep.mubr.bf16.mxu0 0
        %4805 = vmatmul.mubr.bf16.gmra.mrb[0].mxu0 %v4580
        %v4806 = vpop.f32.mrb[0].mxu0
        %v4807 = vadd.f32 %v4602, %v4806
        %v4808 = vpop.f32.mrb[0].mxu0
        %v4809 = vpop.f32.mrb[0].mxu0
        %v4810 = vadd.f32 %v4602, %v4809
        %v4811 = vpop.f32.mrb[0].mxu0
        %4812 = vdwg.mxu0
        %v4813 = vmax.f32 %v4687, 0.0
        %v4814 = vmax.f32 %v4690, 0.0
        %v4815 = vmax.f32 %v4695, 0.0
        %v4816 = vmax.f32 %v4698, 0.0
        %v4817 = vmax.f32 %v4703, 0.0
        %v4818 = vmax.f32 %v4706, 0.0
        %v4819 = vmax.f32 %v4711, 0.0
        %v4820 = vmax.f32 %v4714, 0.0
        %v4821 = vmax.f32 %v4719, 0.0
        %v4822 = vmax.f32 %v4722, 0.0
        %v4823 = vmax.f32 %v4727, 0.0
        %v4824 = vmax.f32 %v4730, 0.0
        %v4825 = vmax.f32 %v4735, 0.0
        %v4826 = vmax.f32 %v4738, 0.0
        %v4827 = vmax.f32 %v4743, 0.0
        %v4828 = vmax.f32 %v4746, 0.0
        %v4829 = vmax.f32 %v4751, 0.0
        %v4830 = vmax.f32 %v4754, 0.0
        %v4831 = vmax.f32 %v4759, 0.0
        %v4832 = vmax.f32 %v4762, 0.0
        %v4833 = vmax.f32 %v4767, 0.0
        %v4834 = vmax.f32 %v4770, 0.0
        %v4835 = vmax.f32 %v4775, 0.0
        %v4836 = vmax.f32 %v4778, 0.0
        %v4837 = vmax.f32 %v4783, 0.0
        %v4838 = vmax.f32 %v4786, 0.0
        %v4839 = vmax.f32 %v4791, 0.0
        %v4840 = vmax.f32 %v4794, 0.0
        %v4841 = vmax.f32 %v4799, 0.0
        %v4842 = vmax.f32 %v4802, 0.0
        %v4843 = vmax.f32 %v4807, 0.0
        %v4844 = vmax.f32 %v4810, 0.0
        %v4845 = vadd.f32 %v4813, %v4814
        %v4846 = vadd.f32 %v4845, %v4815
        %v4847 = vadd.f32 %v4846, %v4816
        %v4848 = vadd.f32 %v4847, %v4817
        %v4849 = vadd.f32 %v4848, %v4818
        %v4850 = vadd.f32 %v4849, %v4819
        %v4851 = vadd.f32 %v4850, %v4820
        %v4852 = vadd.f32 %v4851, %v4821
        %v4853 = vadd.f32 %v4852, %v4822
        %v4854 = vadd.f32 %v4853, %v4823
        %v4855 = vadd.f32 %v4854, %v4824
        %v4856 = vadd.f32 %v4855, %v4825
        %v4857 = vadd.f32 %v4856, %v4826
        %v4858 = vadd.f32 %v4857, %v4827
        %v4859 = vadd.f32 %v4858, %v4828
        %v4860 = vadd.f32 %v4859, %v4829
        %v4861 = vadd.f32 %v4860, %v4830
        %v4862 = vadd.f32 %v4861, %v4831
        %v4863 = vadd.f32 %v4862, %v4832
        %v4864 = vadd.f32 %v4863, %v4833
        %v4865 = vadd.f32 %v4864, %v4834
        %v4866 = vadd.f32 %v4865, %v4835
        %v4867 = vadd.f32 %v4866, %v4836
        %v4868 = vadd.f32 %v4867, %v4837
        %v4869 = vadd.f32 %v4868, %v4838
        %v4870 = vadd.f32 %v4869, %v4839
        %v4871 = vadd.f32 %v4870, %v4840
        %v4872 = vadd.f32 %v4871, %v4841
        %v4873 = vadd.f32 %v4872, %v4842
        %v4874 = vadd.f32 %v4873, %v4843
        %v4875 = vadd.f32 %v4874, %v4844
        %v4876 = vrot.slane %v4875, 4
        %v4877 = vadd.f32 %v4875, %v4876
        %v4878 = vrot.slane %v4877, 2
        %v4879 = vadd.f32 %v4877, %v4878
        %v4880 = vrot.slane %v4879, 1
        %v4881 = vadd.f32 %v4879, %v4880
        %v4882 = vld [vmem:[%s298] sm:$0x1]
        %v4883 = vadd.f32 %v4882, %v4881
        %4884 = vst [vmem:[%s298] sm:$0x1] %v4883
        %p4885 = scmp.eq.s32.totalorder %s24, 7
        // Predicated region
        $region45: #{tpu_custom_call.1} parent=39 // pred_check
          %p4886 = pneg %p4885
        $region46: #{tpu_custom_call.1} parent=39 // pred_check_branch
          %4888 = sbr.rel (%p4886) target = $region48
        $region47: #{tpu_custom_call.1} parent=39 // pred_region
          %v4889 = vld [vmem:[%s298] sm:$0x1]
          %v4890 = vmul.f32 %v4889, 0.00048828125
          %4891 = vst [vmem:[%s298] sm:$0x1] %v4890
        $region48: #{tpu_custom_call.1} parent=39 // pred_fallthru
          _
        %s4892 = sand.u32 %s169, 1
        %s4893 = scalar_lea.sflag [#allocation4], %s4892
        %s4894 = sand.u32 %s169, 1
        %s4895 = scalar_lea.vmem [#allocation3], %s4894
        // Predicated region
        $region49: #{tpu_custom_call.1} parent=39 // pred_check
          %p4896 = pneg %p179
        $region50: #{tpu_custom_call.1} parent=39 // pred_check_branch
          %4898 = sbr.rel (%p4896) target = $region52
        $region51: #{tpu_custom_call.1} parent=39 // pred_region
          %s4900 = ssub.s32 16, 16
          %4901 = vsyncadd %s4893, %s4900
          %s4902 = smul.addr %s23, 16
          %s4903 = scalar_lea.hbm %s5, %s4902
          %s4905 = sshll.u32 %s4895, 4
          %s4906 = int_to_ptr.vmem [resolvable:$true] %s4905
          %4908 = dma.vmem_to_hbm [thread:$0]  %s4906, 16, %s4903, %s4893
        $region52: #{tpu_custom_call.1} parent=39 // pred_fallthru
          _
      $region40: #{tpu_custom_call.1} parent=5 // pred_fallthru
        _
      %p4909 = scmp.le.s32.totalorder 2, %s14
      // Predicated region
      $region53: #{tpu_custom_call.1} parent=5 // pred_check
        %p4910 = pneg %p4909
      $region54: #{tpu_custom_call.1} parent=5 // pred_check_branch
        %4912 = sbr.rel (%p4910) target = $region56
      $region55: #{tpu_custom_call.1} parent=5 // pred_region
        %s4913 = ssub.s32 %s14, 2
        // Predicated region
        $region57: #{tpu_custom_call.1} parent=55 // pred_check
          %p4914 = pneg %p185
        $region58: #{tpu_custom_call.1} parent=55 // pred_check_branch
          %4916 = sbr.rel (%p4914) target = $region60
        $region59: #{tpu_custom_call.1} parent=55 // pred_region
          %s4917 = sand.u32 %s170, 1
          %s4918 = scalar_lea.sflag [#allocation4], %s4917
          %s4919 = sand.u32 %s170, 1
          %s4920 = scalar_lea.vmem [#allocation3], %s4919
          %4921 = dma.done %s4918, 16
        $region60: #{tpu_custom_call.1} parent=55 // pred_fallthru
          _
      $region56: #{tpu_custom_call.1} parent=5 // pred_fallthru
        _
    $region6: #{tpu_custom_call.1} parent=1 // loop_footer
      %s18 = sadd.s32 1, %s14
    $region7: #{tpu_custom_call.1} parent=1 // loop_footer_branch
      %13 = sbr.rel target = $region3
    $region8: #{tpu_custom_call.1} parent=1 // loop_exit
      _
    %4922 = vsyncpa [#allocation4], 1
    %s4923 = scalar_lea.sflag [#allocation4], 1
    %4924 = vsyncpa %s4923, 1

</llo_original>
